<compile_context>
chip_gen: v7x
topology: tpu7x:2x2x1
jax: 0.10.0
libtpu: 0.0.40
codegen_flags: <defaults>
</compile_context>

<pallas_src>
import math

import jax
import jax.numpy as jnp
from jax import lax
from jax.experimental import pallas as pl
from jax.experimental.pallas import tpu as pltpu

# ---------------- model hyper-parameters (small, synthetic) ----------------
VOCAB_SIZE  = 10
OUTPUT_SIZE = 10
OUT_PAD     = 128    # lane-dense padded output width
MAX_LEN     = 8      # S
HIDDEN      = 32     # D
HEADS       = 4      # H
HEAD_DIM    = HIDDEN // HEADS
INTERMED    = 128    # F (4 * hidden)
NUM_BLOCKS  = 2      # L
LN_EPS      = 1e-5

# Row indices inside the packed per-block parameter slab (each row is 128 lanes,
# parameter starts at lane 0).
_R_LN1_G, _R_LN1_B, _R_LN2_G, _R_LN2_B = 0, 1, 2, 3
_R_B_QKV, _R_B_O, _R_B_FF1, _R_B_FF2 = 4, 5, 6, 7
_BLK_ROWS = 8
# Row indices inside the packed final-parameter slab.
_R_LNF_G, _R_LNF_B, _R_B_OUT = 0, 1, 2
_FIN_ROWS = 8


def _layernorm(x, g, b):
    # one-pass statistics: var = E[x^2] - mean^2 (short XLU dependency chain)
    mu = jnp.mean(x, axis=-1, keepdims=True)
    ms = jnp.mean(x * x, axis=-1, keepdims=True)
    var = ms - mu * mu
    return (x - mu) * lax.rsqrt(var + LN_EPS) * g + b


def _softmax_last(x):
    m = jnp.max(x, axis=-1, keepdims=True)
    e = jnp.exp(x - m)
    return e * pl.reciprocal(jnp.sum(e, axis=-1, keepdims=True), approx=True)


def make_transformer_kernel(btile):
    S, D, H, HD, F = MAX_LEN, HIDDEN, HEADS, HEAD_DIM, INTERMED
    N = btile * S
    scale = 1.0 / math.sqrt(HD)
    sqrt_d = math.sqrt(D)

    def kernel(tok_ref,                     # (N, 1) int32 VMEM token ids
               tok_emb_ref,                 # (V, D)  bf16
               pos_emb_ref,                 # (S, D)  f32
               blk_vec_ref,                 # (L, 8, 128) f32 packed per-block params
               fin_vec_ref,                 # (8, 128)    f32 packed final params
               wqkv_ref, wo_ref, w1_ref, w2_ref, wout_ref,   # bf16 weights
               out_ref):                    # (btile, S, OUT_PAD) f32
        # ---- fused embedding: vectorized one-hot, single MXU matmul ----
        toks = tok_ref[...]                                              # (N, 1) int32
        voc_iota = lax.broadcasted_iota(jnp.int32, (N, VOCAB_SIZE), 1)
        onehot = (voc_iota == toks).astype(jnp.bfloat16)                 # (N, V)
        x = jnp.dot(onehot, tok_emb_ref[...],
                    preferred_element_type=jnp.float32) * sqrt_d         # (N, D) f32
        # positional embedding via broadcast add (no materialized tile)
        x = (x.reshape(btile, S, D) + pos_emb_ref[...][None, :, :]).reshape(N, D)

        # ---- closed-form per-sequence causal mask (no cross-sequence scores) ----
        q_idx = lax.broadcasted_iota(jnp.int32, (btile, S, S), 1)
        k_idx = lax.broadcasted_iota(jnp.int32, (btile, S, S), 2)
        causal = q_idx >= k_idx                                          # (btile, S, S)

        for l in range(NUM_BLOCKS):                                      # static unroll
            bv = blk_vec_ref[l]                                          # (8, 128) f32
            ln1_g = bv[_R_LN1_G, 0:D]
            ln1_b = bv[_R_LN1_B, 0:D]
            ln2_g = bv[_R_LN2_G, 0:D]
            ln2_b = bv[_R_LN2_B, 0:D]
            b_qkv = bv[_R_B_QKV, 0:3 * D]
            b_o   = bv[_R_B_O,   0:D]
            b_ff1 = bv[_R_B_FF1, 0:F]
            b_ff2 = bv[_R_B_FF2, 0:D]

            # ---- attention sub-block (pre-LN) ----
            xn = _layernorm(x, ln1_g, ln1_b)
            qkv = jnp.dot(xn.astype(jnp.bfloat16), wqkv_ref[l],
                          preferred_element_type=jnp.float32) + b_qkv    # (N, 3D) f32
            wo_l = wo_ref[l]                                             # (D, D) bf16

            attn = jnp.zeros((N, D), jnp.float32)
            for hh in range(H):                 # no concat: accumulate via W_o slice
                lo = hh * HD
                qh = qkv[:, 0 * D + lo:0 * D + lo + HD].reshape(btile, S, HD).astype(jnp.bfloat16)
                kh = qkv[:, 1 * D + lo:1 * D + lo + HD].reshape(btile, S, HD).astype(jnp.bfloat16)
                vh = qkv[:, 2 * D + lo:2 * D + lo + HD].reshape(btile, S, HD).astype(jnp.bfloat16)
                s = jnp.einsum('bqd,bkd->bqk', qh, kh,
                               preferred_element_type=jnp.float32) * scale   # (btile, S, S)
                s = jnp.where(causal, s, -1e9)
                p = _softmax_last(s)                                          # f32
                oh = jnp.einsum('bqk,bkd->bqd', p.astype(jnp.bfloat16), vh,
                                preferred_element_type=jnp.float32)           # (btile, S, HD)
                attn = attn + jnp.dot(oh.reshape(N, HD).astype(jnp.bfloat16),
                                      wo_l[lo:lo + HD, :],
                                      preferred_element_type=jnp.float32)     # (N, D)
            x = x + attn + b_o

            # ---- MLP sub-block (pre-LN) ----
            xn2 = _layernorm(x, ln2_g, ln2_b)
            ff = jnp.dot(xn2.astype(jnp.bfloat16), w1_ref[l],
                         preferred_element_type=jnp.float32) + b_ff1          # (N, F)
            # TODO(synk): PyTorch nn.GELU default is exact erf; tanh approximation used here.
            ff = jax.nn.gelu(ff, approximate=True)
            x = x + jnp.dot(ff.astype(jnp.bfloat16), w2_ref[l],
                            preferred_element_type=jnp.float32) + b_ff2

        # ---- final norm + lane-dense padded output projection ----
        fv = fin_vec_ref[...]
        xf = _layernorm(x, fv[_R_LNF_G, 0:D], fv[_R_LNF_B, 0:D])
        logits = jnp.dot(xf.astype(jnp.bfloat16), wout_ref[...],
                         preferred_element_type=jnp.float32) + fv[_R_B_OUT, :]  # (N, 128)
        out_ref[...] = logits.reshape(btile, S, OUT_PAD)

    return kernel


def init_params(key):
    """Deterministic synthetic parameter init (shapes match the module config)."""
    ks = jax.random.split(key, 10)
    std = 0.02
    p = {
        "tok_emb": jax.random.normal(ks[0], (VOCAB_SIZE, HIDDEN), jnp.float32) * std,
        "pos_emb": jax.random.normal(ks[1], (MAX_LEN, HIDDEN), jnp.float32) * std,
        "ln1_g": jnp.ones((NUM_BLOCKS, HIDDEN), jnp.float32),
        "ln1_b": jnp.zeros((NUM_BLOCKS, HIDDEN), jnp.float32),
        "w_qkv": jax.random.normal(ks[2], (NUM_BLOCKS, HIDDEN, 3 * HIDDEN), jnp.float32) * std,
        "b_qkv": jnp.zeros((NUM_BLOCKS, 3 * HIDDEN), jnp.float32),
        "w_o":   jax.random.normal(ks[3], (NUM_BLOCKS, HIDDEN, HIDDEN), jnp.float32) * std,
        "b_o":   jnp.zeros((NUM_BLOCKS, HIDDEN), jnp.float32),
        "ln2_g": jnp.ones((NUM_BLOCKS, HIDDEN), jnp.float32),
        "ln2_b": jnp.zeros((NUM_BLOCKS, HIDDEN), jnp.float32),
        "w_ff1": jax.random.normal(ks[4], (NUM_BLOCKS, HIDDEN, INTERMED), jnp.float32) * std,
        "b_ff1": jnp.zeros((NUM_BLOCKS, INTERMED), jnp.float32),
        "w_ff2": jax.random.normal(ks[5], (NUM_BLOCKS, INTERMED, HIDDEN), jnp.float32) * std,
        "b_ff2": jnp.zeros((NUM_BLOCKS, HIDDEN), jnp.float32),
        "lnf_g": jnp.ones((1, HIDDEN), jnp.float32),
        "lnf_b": jnp.zeros((1, HIDDEN), jnp.float32),
        "w_out": jax.random.normal(ks[6], (HIDDEN, OUTPUT_SIZE), jnp.float32) * std,
        "b_out": jnp.zeros((1, OUTPUT_SIZE), jnp.float32),
    }
    return p


def _full_spec(arr):
    nd = arr.ndim
    return pl.BlockSpec(arr.shape, lambda b, _nd=nd: (0,) * _nd)


@jax.jit
def grokk_forward(x_tokens, params):
    """x_tokens: (B, S) int token ids -> logits (B, S, OUTPUT_SIZE) float32."""
    B, S = x_tokens.shape
    assert S == MAX_LEN

    # Single grid step for small batches (kernel is overhead-bound: a second
    # step is pure per-step cost on v5e/v6e's single TensorCore). Only split
    # into 2 "parallel" steps (v7x megacore) once each step has >=128 rows.
    if B % 2 == 0 and (B // 2) * S >= 128:
        grid_steps = 2
    else:
        grid_steps = 1
    btile = B // grid_steps
    n_tile = btile * S

    # ---- pack the many tiny f32 params into two lane-dense slabs ----
    def pad_rows(v, w=128):
        return jnp.pad(v, ((0, 0), (0, w - v.shape[-1])))

    blk_vec = jnp.stack([
        pad_rows(params["ln1_g"]), pad_rows(params["ln1_b"]),
        pad_rows(params["ln2_g"]), pad_rows(params["ln2_b"]),
        pad_rows(params["b_qkv"]), pad_rows(params["b_o"]),
        pad_rows(params["b_ff1"]), pad_rows(params["b_ff2"]),
    ], axis=1)                                                   # (L, 8, 128) f32

    fin_rows = [
        jnp.pad(params["lnf_g"][0], (0, 128 - HIDDEN)),
        jnp.pad(params["lnf_b"][0], (0, 128 - HIDDEN)),
        jnp.pad(params["b_out"][0], (0, OUT_PAD - OUTPUT_SIZE)),
    ] + [jnp.zeros((128,), jnp.float32)] * (_FIN_ROWS - 3)
    fin_vec = jnp.stack(fin_rows, axis=0)                        # (8, 128) f32

    # pad output projection to a lane-dense (D, 128); slice back after the call
    w_out_p = jnp.pad(params["w_out"], ((0, 0), (0, OUT_PAD - OUTPUT_SIZE)))

    # token ids as a lane-1 VMEM column (1-D folded batch*seq); avoids 2-D SMEM
    tok2d = x_tokens.astype(jnp.int32).reshape(B * S, 1)

    weights = [
        params["tok_emb"].astype(jnp.bfloat16),
        params["pos_emb"],
        blk_vec, fin_vec,
        params["w_qkv"].astype(jnp.bfloat16),
        params["w_o"].astype(jnp.bfloat16),
        params["w_ff1"].astype(jnp.bfloat16),
        params["w_ff2"].astype(jnp.bfloat16),
        w_out_p.astype(jnp.bfloat16),
    ]

    in_specs = ([pl.BlockSpec((n_tile, 1), lambda b: (b, 0))]
                + [_full_spec(w) for w in weights])

    out = pl.pallas_call(
        make_transformer_kernel(btile),
        out_shape=jax.ShapeDtypeStruct((B, S, OUT_PAD), jnp.float32),
        grid_spec=pltpu.PrefetchScalarGridSpec(
            num_scalar_prefetch=0,
            grid=(grid_steps,),
            in_specs=in_specs,
            out_specs=pl.BlockSpec((btile, S, OUT_PAD), lambda b: (b, 0, 0)),
        ),
        compiler_params=pltpu.CompilerParams(
            dimension_semantics=("parallel",),
            vmem_limit_bytes=32 * 1024 * 1024),
    )(tok2d, *weights)

    # TODO(synk): if the consumer can take padded logits, skip this slice.
    return out[:, :, :OUTPUT_SIZE]


if __name__ == "__main__":
    key = jax.random.PRNGKey(0)
    pkey, xkey = jax.random.split(key)

    params = init_params(pkey)
    # deterministic small input: batch=2, seq=8 token ids in [0, VOCAB_SIZE)
    x = jax.random.randint(xkey, (2, MAX_LEN), 0, VOCAB_SIZE, dtype=jnp.int32)

    logits = grokk_forward(x, params)
    jax.block_until_ready(logits)

    assert logits.shape == (2, MAX_LEN, OUTPUT_SIZE)
    assert logits.dtype == jnp.float32
    assert bool(jnp.all(jnp.isfinite(logits)))
    print("KERNEL_OK")
</pallas_src>

<mosaic_0001>
module attributes {stable_mosaic.version = 11 : i64} {
  func.func @kernel(%arg0: i32, %arg1: memref<16x1xi32, #tpu.memory_space<vmem>>, %arg2: memref<10x32xbf16, #tpu.memory_space<vmem>>, %arg3: memref<8x32xf32, #tpu.memory_space<vmem>>, %arg4: memref<2x8x128xf32, #tpu.memory_space<vmem>>, %arg5: memref<8x128xf32, #tpu.memory_space<vmem>>, %arg6: memref<2x32x96xbf16, #tpu.memory_space<vmem>>, %arg7: memref<2x32x32xbf16, #tpu.memory_space<vmem>>, %arg8: memref<2x32x128xbf16, #tpu.memory_space<vmem>>, %arg9: memref<2x128x32xbf16, #tpu.memory_space<vmem>>, %arg10: memref<32x128xbf16, #tpu.memory_space<vmem>>, %arg11: memref<2x8x128xf32, #tpu.memory_space<vmem>>) attributes {dimension_semantics = [#tpu.dimension_semantics<parallel>], iteration_bounds = array<i64: 1>, scalar_prefetch = 0 : i64, scratch_operands = 0 : i64, tpu.core_type = #tpu.core_type<tc>, window_params = [{transform_indices = @transform_0, window_bounds = array<i64: 16, 1>}, {pipeline_mode = #tpu.pipeline_mode<synchronous>, transform_indices = @transform_1, window_bounds = array<i64: 10, 32>}, {pipeline_mode = #tpu.pipeline_mode<synchronous>, transform_indices = @transform_2, window_bounds = array<i64: 8, 32>}, {pipeline_mode = #tpu.pipeline_mode<synchronous>, transform_indices = @transform_3, window_bounds = array<i64: 2, 8, 128>}, {pipeline_mode = #tpu.pipeline_mode<synchronous>, transform_indices = @transform_4, window_bounds = array<i64: 8, 128>}, {pipeline_mode = #tpu.pipeline_mode<synchronous>, transform_indices = @transform_5, window_bounds = array<i64: 2, 32, 96>}, {pipeline_mode = #tpu.pipeline_mode<synchronous>, transform_indices = @transform_6, window_bounds = array<i64: 2, 32, 32>}, {pipeline_mode = #tpu.pipeline_mode<synchronous>, transform_indices = @transform_7, window_bounds = array<i64: 2, 32, 128>}, {pipeline_mode = #tpu.pipeline_mode<synchronous>, transform_indices = @transform_8, window_bounds = array<i64: 2, 128, 32>}, {pipeline_mode = #tpu.pipeline_mode<synchronous>, transform_indices = @transform_9, window_bounds = array<i64: 32, 128>}, {transform_indices = @transform_10, window_bounds = array<i64: 2, 8, 128>}]} {
    %c0 = arith.constant 0 : index
    %c0_0 = arith.constant 0 : index
    %0 = vector.load %arg1[%c0, %c0_0] : memref<16x1xi32, #tpu.memory_space<vmem>>, vector<16x1xi32>
    %1 = tpu.iota {dimensions = array<i32: 1>} : vector<16x10xi32>
    %2 = vector.broadcast %0 : vector<16x1xi32> to vector<16x10xi32>
    %3 = arith.cmpi eq, %1, %2 : vector<16x10xi32>
    %4 = arith.extui %3 : vector<16x10xi1> to vector<16x10xi32>
    %5 = arith.sitofp %4 : vector<16x10xi32> to vector<16x10xf32>
    %6 = arith.truncf %5 : vector<16x10xf32> to vector<16x10xbf16>
    %c0_1 = arith.constant 0 : index
    %c0_2 = arith.constant 0 : index
    %7 = vector.load %arg2[%c0_1, %c0_2] : memref<10x32xbf16, #tpu.memory_space<vmem>>, vector<10x32xbf16>
    %cst = arith.constant dense<0.000000e+00> : vector<16x32xf32>
    %8 = tpu.matmul %6, %7, %cst {dimension_numbers = #tpu.dot_dimension_numbers<[1], [0], [0], [1], [0, 0, 1, 1], [], []>} : vector<16x10xbf16>, vector<10x32xbf16>, vector<16x32xf32> -> vector<16x32xf32>
    %cst_3 = arith.constant 5.65685415 : f32
    %9 = vector.broadcast %cst_3 : f32 to vector<16x32xf32>
    %10 = arith.mulf %8, %9 : vector<16x32xf32>
    %11 = vector.shape_cast %10 : vector<16x32xf32> to vector<2x8x32xf32>
    %c0_4 = arith.constant 0 : index
    %c0_5 = arith.constant 0 : index
    %12 = vector.load %arg3[%c0_4, %c0_5] : memref<8x32xf32, #tpu.memory_space<vmem>>, vector<8x32xf32>
    %13 = vector.shape_cast %12 : vector<8x32xf32> to vector<1x8x32xf32>
    %14 = vector.broadcast %13 : vector<1x8x32xf32> to vector<2x8x32xf32>
    %15 = arith.addf %11, %14 : vector<2x8x32xf32>
    %16 = vector.shape_cast %15 : vector<2x8x32xf32> to vector<16x32xf32>
    %17 = tpu.iota {dimensions = array<i32: 1>} : vector<2x8x8xi32>
    %18 = tpu.iota {dimensions = array<i32: 2>} : vector<2x8x8xi32>
    %19 = arith.cmpi sge, %17, %18 : vector<2x8x8xi32>
    %c0_6 = arith.constant 0 : index
    %c0_7 = arith.constant 0 : index
    %c0_8 = arith.constant 0 : index
    %20 = vector.load %arg4[%c0_6, %c0_7, %c0_8] : memref<2x8x128xf32, #tpu.memory_space<vmem>>, vector<1x8x128xf32>
    %21 = vector.shape_cast %20 : vector<1x8x128xf32> to vector<8x128xf32>
    %22 = vector.extract_strided_slice %21 {offsets = [0, 0], sizes = [1, 32], strides = [1, 1]} : vector<8x128xf32> to vector<1x32xf32>
    %23 = vector.shape_cast %22 : vector<1x32xf32> to vector<32xf32>
    %24 = vector.extract_strided_slice %21 {offsets = [1, 0], sizes = [1, 32], strides = [1, 1]} : vector<8x128xf32> to vector<1x32xf32>
    %25 = vector.shape_cast %24 : vector<1x32xf32> to vector<32xf32>
    %26 = vector.extract_strided_slice %21 {offsets = [2, 0], sizes = [1, 32], strides = [1, 1]} : vector<8x128xf32> to vector<1x32xf32>
    %27 = vector.shape_cast %26 : vector<1x32xf32> to vector<32xf32>
    %28 = vector.extract_strided_slice %21 {offsets = [3, 0], sizes = [1, 32], strides = [1, 1]} : vector<8x128xf32> to vector<1x32xf32>
    %29 = vector.shape_cast %28 : vector<1x32xf32> to vector<32xf32>
    %30 = vector.extract_strided_slice %21 {offsets = [4, 0], sizes = [1, 96], strides = [1, 1]} : vector<8x128xf32> to vector<1x96xf32>
    %31 = vector.shape_cast %30 : vector<1x96xf32> to vector<96xf32>
    %32 = vector.extract_strided_slice %21 {offsets = [5, 0], sizes = [1, 32], strides = [1, 1]} : vector<8x128xf32> to vector<1x32xf32>
    %33 = vector.shape_cast %32 : vector<1x32xf32> to vector<32xf32>
    %34 = vector.extract_strided_slice %21 {offsets = [6, 0], sizes = [1, 128], strides = [1, 1]} : vector<8x128xf32> to vector<1x128xf32>
    %35 = vector.shape_cast %34 : vector<1x128xf32> to vector<128xf32>
    %36 = vector.extract_strided_slice %21 {offsets = [7, 0], sizes = [1, 32], strides = [1, 1]} : vector<8x128xf32> to vector<1x32xf32>
    %37 = vector.shape_cast %36 : vector<1x32xf32> to vector<32xf32>
    %cst_9 = arith.constant dense<0.000000e+00> : vector<16xf32>
    %38 = vector.multi_reduction <add>, %16, %cst_9 [1] : vector<16x32xf32> to vector<16xf32>
    %39 = vector.shape_cast %38 : vector<16xf32> to vector<16x1xf32>
    %cst_10 = arith.constant 3.200000e+01 : f32
    %40 = vector.broadcast %cst_10 : f32 to vector<16x1xf32>
    %41 = arith.divf %39, %40 : vector<16x1xf32>
    %42 = arith.mulf %16, %16 : vector<16x32xf32>
    %cst_11 = arith.constant dense<0.000000e+00> : vector<16xf32>
    %43 = vector.multi_reduction <add>, %42, %cst_11 [1] : vector<16x32xf32> to vector<16xf32>
    %44 = vector.shape_cast %43 : vector<16xf32> to vector<16x1xf32>
    %cst_12 = arith.constant 3.200000e+01 : f32
    %45 = vector.broadcast %cst_12 : f32 to vector<16x1xf32>
    %46 = arith.divf %44, %45 : vector<16x1xf32>
    %47 = arith.mulf %41, %41 : vector<16x1xf32>
    %48 = arith.subf %46, %47 : vector<16x1xf32>
    %49 = vector.broadcast %41 : vector<16x1xf32> to vector<16x32xf32>
    %50 = arith.subf %16, %49 : vector<16x32xf32>
    %cst_13 = arith.constant 9.99999974E-6 : f32
    %51 = vector.broadcast %cst_13 : f32 to vector<16x1xf32>
    %52 = arith.addf %48, %51 : vector<16x1xf32>
    %53 = math.rsqrt %52 : vector<16x1xf32>
    %54 = vector.broadcast %53 : vector<16x1xf32> to vector<16x32xf32>
    %55 = arith.mulf %50, %54 : vector<16x32xf32>
    %56 = vector.shape_cast %23 : vector<32xf32> to vector<1x32xf32>
    %57 = vector.broadcast %56 : vector<1x32xf32> to vector<16x32xf32>
    %58 = arith.mulf %55, %57 : vector<16x32xf32>
    %59 = vector.shape_cast %25 : vector<32xf32> to vector<1x32xf32>
    %60 = vector.broadcast %59 : vector<1x32xf32> to vector<16x32xf32>
    %61 = arith.addf %58, %60 : vector<16x32xf32>
    %62 = arith.truncf %61 : vector<16x32xf32> to vector<16x32xbf16>
    %c0_14 = arith.constant 0 : index
    %c0_15 = arith.constant 0 : index
    %c0_16 = arith.constant 0 : index
    %63 = vector.load %arg6[%c0_14, %c0_15, %c0_16] : memref<2x32x96xbf16, #tpu.memory_space<vmem>>, vector<1x32x96xbf16>
    %64 = vector.shape_cast %63 : vector<1x32x96xbf16> to vector<32x96xbf16>
    %cst_17 = arith.constant dense<0.000000e+00> : vector<16x96xf32>
    %65 = tpu.matmul %62, %64, %cst_17 {dimension_numbers = #tpu.dot_dimension_numbers<[1], [0], [0], [1], [0, 0, 1, 1], [], []>} : vector<16x32xbf16>, vector<32x96xbf16>, vector<16x96xf32> -> vector<16x96xf32>
    %66 = vector.shape_cast %31 : vector<96xf32> to vector<1x96xf32>
    %67 = vector.broadcast %66 : vector<1x96xf32> to vector<16x96xf32>
    %68 = arith.addf %65, %67 : vector<16x96xf32>
    %c0_18 = arith.constant 0 : index
    %c0_19 = arith.constant 0 : index
    %c0_20 = arith.constant 0 : index
    %69 = vector.load %arg7[%c0_18, %c0_19, %c0_20] : memref<2x32x32xbf16, #tpu.memory_space<vmem>>, vector<1x32x32xbf16>
    %70 = vector.shape_cast %69 : vector<1x32x32xbf16> to vector<32x32xbf16>
    %cst_21 = arith.constant 0.000000e+00 : f32
    %71 = vector.broadcast %cst_21 : f32 to vector<16x32xf32>
    %72 = vector.extract_strided_slice %68 {offsets = [0, 0], sizes = [16, 8], strides = [1, 1]} : vector<16x96xf32> to vector<16x8xf32>
    %73 = vector.shape_cast %72 : vector<16x8xf32> to vector<2x8x8xf32>
    %74 = arith.truncf %73 : vector<2x8x8xf32> to vector<2x8x8xbf16>
    %75 = vector.extract_strided_slice %68 {offsets = [0, 32], sizes = [16, 8], strides = [1, 1]} : vector<16x96xf32> to vector<16x8xf32>
    %76 = vector.shape_cast %75 : vector<16x8xf32> to vector<2x8x8xf32>
    %77 = arith.truncf %76 : vector<2x8x8xf32> to vector<2x8x8xbf16>
    %78 = vector.extract_strided_slice %68 {offsets = [0, 64], sizes = [16, 8], strides = [1, 1]} : vector<16x96xf32> to vector<16x8xf32>
    %79 = vector.shape_cast %78 : vector<16x8xf32> to vector<2x8x8xf32>
    %80 = arith.truncf %79 : vector<2x8x8xf32> to vector<2x8x8xbf16>
    "tpu.trace_start"() <{level = 10 : i32, message = "bqd,bkd->bqk"}> : () -> ()
    %cst_22 = arith.constant dense<0.000000e+00> : vector<2x8x8xf32>
    %81 = tpu.matmul %74, %77, %cst_22 {dimension_numbers = #tpu.dot_dimension_numbers<[2], [2], [1], [1], [0, 0, 0, 1, 1, 1], [0], [0]>} : vector<2x8x8xbf16>, vector<2x8x8xbf16>, vector<2x8x8xf32> -> vector<2x8x8xf32>
    "tpu.trace_stop"() : () -> ()
    %cst_23 = arith.constant 0.353553385 : f32
    %82 = vector.broadcast %cst_23 : f32 to vector<2x8x8xf32>
    %83 = arith.mulf %81, %82 : vector<2x8x8xf32>
    %cst_24 = arith.constant -1.000000e+09 : f32
    %84 = vector.broadcast %cst_24 : f32 to vector<2x8x8xf32>
    %85 = arith.select %19, %83, %84 : vector<2x8x8xi1>, vector<2x8x8xf32>
    %cst_25 = arith.constant dense<0xFF800000> : vector<2x8xf32>
    %86 = vector.multi_reduction <maximumf>, %85, %cst_25 [2] : vector<2x8x8xf32> to vector<2x8xf32>
    %87 = vector.shape_cast %86 : vector<2x8xf32> to vector<2x8x1xf32>
    %88 = vector.broadcast %87 : vector<2x8x1xf32> to vector<2x8x8xf32>
    %89 = arith.subf %85, %88 : vector<2x8x8xf32>
    %90 = math.exp %89 : vector<2x8x8xf32>
    %cst_26 = arith.constant dense<0.000000e+00> : vector<2x8xf32>
    %91 = vector.multi_reduction <add>, %90, %cst_26 [2] : vector<2x8x8xf32> to vector<2x8xf32>
    %92 = vector.shape_cast %91 : vector<2x8xf32> to vector<2x8x1xf32>
    %93 = tpu.reciprocal %92 {approx = true} : vector<2x8x1xf32> -> vector<2x8x1xf32>
    %94 = vector.broadcast %93 : vector<2x8x1xf32> to vector<2x8x8xf32>
    %95 = arith.mulf %90, %94 : vector<2x8x8xf32>
    %96 = arith.truncf %95 : vector<2x8x8xf32> to vector<2x8x8xbf16>
    "tpu.trace_start"() <{level = 10 : i32, message = "bqk,bkd->bqd"}> : () -> ()
    %cst_27 = arith.constant dense<0.000000e+00> : vector<2x8x8xf32>
    %97 = tpu.matmul %96, %80, %cst_27 {dimension_numbers = #tpu.dot_dimension_numbers<[2], [1], [1], [2], [0, 0, 0, 1, 1, 2], [0], [0]>} : vector<2x8x8xbf16>, vector<2x8x8xbf16>, vector<2x8x8xf32> -> vector<2x8x8xf32>
    "tpu.trace_stop"() : () -> ()
    %98 = vector.shape_cast %97 : vector<2x8x8xf32> to vector<16x8xf32>
    %99 = arith.truncf %98 : vector<16x8xf32> to vector<16x8xbf16>
    %100 = vector.extract_strided_slice %70 {offsets = [0, 0], sizes = [8, 32], strides = [1, 1]} : vector<32x32xbf16> to vector<8x32xbf16>
    %cst_28 = arith.constant dense<0.000000e+00> : vector<16x32xf32>
    %101 = tpu.matmul %99, %100, %cst_28 {dimension_numbers = #tpu.dot_dimension_numbers<[1], [0], [0], [1], [0, 0, 1, 1], [], []>} : vector<16x8xbf16>, vector<8x32xbf16>, vector<16x32xf32> -> vector<16x32xf32>
    %102 = arith.addf %71, %101 : vector<16x32xf32>
    %103 = vector.extract_strided_slice %68 {offsets = [0, 8], sizes = [16, 8], strides = [1, 1]} : vector<16x96xf32> to vector<16x8xf32>
    %104 = vector.shape_cast %103 : vector<16x8xf32> to vector<2x8x8xf32>
    %105 = arith.truncf %104 : vector<2x8x8xf32> to vector<2x8x8xbf16>
    %106 = vector.extract_strided_slice %68 {offsets = [0, 40], sizes = [16, 8], strides = [1, 1]} : vector<16x96xf32> to vector<16x8xf32>
    %107 = vector.shape_cast %106 : vector<16x8xf32> to vector<2x8x8xf32>
    %108 = arith.truncf %107 : vector<2x8x8xf32> to vector<2x8x8xbf16>
    %109 = vector.extract_strided_slice %68 {offsets = [0, 72], sizes = [16, 8], strides = [1, 1]} : vector<16x96xf32> to vector<16x8xf32>
    %110 = vector.shape_cast %109 : vector<16x8xf32> to vector<2x8x8xf32>
    %111 = arith.truncf %110 : vector<2x8x8xf32> to vector<2x8x8xbf16>
    "tpu.trace_start"() <{level = 10 : i32, message = "bqd,bkd->bqk"}> : () -> ()
    %cst_29 = arith.constant dense<0.000000e+00> : vector<2x8x8xf32>
    %112 = tpu.matmul %105, %108, %cst_29 {dimension_numbers = #tpu.dot_dimension_numbers<[2], [2], [1], [1], [0, 0, 0, 1, 1, 1], [0], [0]>} : vector<2x8x8xbf16>, vector<2x8x8xbf16>, vector<2x8x8xf32> -> vector<2x8x8xf32>
    "tpu.trace_stop"() : () -> ()
    %cst_30 = arith.constant 0.353553385 : f32
    %113 = vector.broadcast %cst_30 : f32 to vector<2x8x8xf32>
    %114 = arith.mulf %112, %113 : vector<2x8x8xf32>
    %cst_31 = arith.constant -1.000000e+09 : f32
    %115 = vector.broadcast %cst_31 : f32 to vector<2x8x8xf32>
    %116 = arith.select %19, %114, %115 : vector<2x8x8xi1>, vector<2x8x8xf32>
    %cst_32 = arith.constant dense<0xFF800000> : vector<2x8xf32>
    %117 = vector.multi_reduction <maximumf>, %116, %cst_32 [2] : vector<2x8x8xf32> to vector<2x8xf32>
    %118 = vector.shape_cast %117 : vector<2x8xf32> to vector<2x8x1xf32>
    %119 = vector.broadcast %118 : vector<2x8x1xf32> to vector<2x8x8xf32>
    %120 = arith.subf %116, %119 : vector<2x8x8xf32>
    %121 = math.exp %120 : vector<2x8x8xf32>
    %cst_33 = arith.constant dense<0.000000e+00> : vector<2x8xf32>
    %122 = vector.multi_reduction <add>, %121, %cst_33 [2] : vector<2x8x8xf32> to vector<2x8xf32>
    %123 = vector.shape_cast %122 : vector<2x8xf32> to vector<2x8x1xf32>
    %124 = tpu.reciprocal %123 {approx = true} : vector<2x8x1xf32> -> vector<2x8x1xf32>
    %125 = vector.broadcast %124 : vector<2x8x1xf32> to vector<2x8x8xf32>
    %126 = arith.mulf %121, %125 : vector<2x8x8xf32>
    %127 = arith.truncf %126 : vector<2x8x8xf32> to vector<2x8x8xbf16>
    "tpu.trace_start"() <{level = 10 : i32, message = "bqk,bkd->bqd"}> : () -> ()
    %cst_34 = arith.constant dense<0.000000e+00> : vector<2x8x8xf32>
    %128 = tpu.matmul %127, %111, %cst_34 {dimension_numbers = #tpu.dot_dimension_numbers<[2], [1], [1], [2], [0, 0, 0, 1, 1, 2], [0], [0]>} : vector<2x8x8xbf16>, vector<2x8x8xbf16>, vector<2x8x8xf32> -> vector<2x8x8xf32>
    "tpu.trace_stop"() : () -> ()
    %129 = vector.shape_cast %128 : vector<2x8x8xf32> to vector<16x8xf32>
    %130 = arith.truncf %129 : vector<16x8xf32> to vector<16x8xbf16>
    %131 = vector.extract_strided_slice %70 {offsets = [8, 0], sizes = [8, 32], strides = [1, 1]} : vector<32x32xbf16> to vector<8x32xbf16>
    %cst_35 = arith.constant dense<0.000000e+00> : vector<16x32xf32>
    %132 = tpu.matmul %130, %131, %cst_35 {dimension_numbers = #tpu.dot_dimension_numbers<[1], [0], [0], [1], [0, 0, 1, 1], [], []>} : vector<16x8xbf16>, vector<8x32xbf16>, vector<16x32xf32> -> vector<16x32xf32>
    %133 = arith.addf %102, %132 : vector<16x32xf32>
    %134 = vector.extract_strided_slice %68 {offsets = [0, 16], sizes = [16, 8], strides = [1, 1]} : vector<16x96xf32> to vector<16x8xf32>
    %135 = vector.shape_cast %134 : vector<16x8xf32> to vector<2x8x8xf32>
    %136 = arith.truncf %135 : vector<2x8x8xf32> to vector<2x8x8xbf16>
    %137 = vector.extract_strided_slice %68 {offsets = [0, 48], sizes = [16, 8], strides = [1, 1]} : vector<16x96xf32> to vector<16x8xf32>
    %138 = vector.shape_cast %137 : vector<16x8xf32> to vector<2x8x8xf32>
    %139 = arith.truncf %138 : vector<2x8x8xf32> to vector<2x8x8xbf16>
    %140 = vector.extract_strided_slice %68 {offsets = [0, 80], sizes = [16, 8], strides = [1, 1]} : vector<16x96xf32> to vector<16x8xf32>
    %141 = vector.shape_cast %140 : vector<16x8xf32> to vector<2x8x8xf32>
    %142 = arith.truncf %141 : vector<2x8x8xf32> to vector<2x8x8xbf16>
    "tpu.trace_start"() <{level = 10 : i32, message = "bqd,bkd->bqk"}> : () -> ()
    %cst_36 = arith.constant dense<0.000000e+00> : vector<2x8x8xf32>
    %143 = tpu.matmul %136, %139, %cst_36 {dimension_numbers = #tpu.dot_dimension_numbers<[2], [2], [1], [1], [0, 0, 0, 1, 1, 1], [0], [0]>} : vector<2x8x8xbf16>, vector<2x8x8xbf16>, vector<2x8x8xf32> -> vector<2x8x8xf32>
    "tpu.trace_stop"() : () -> ()
    %cst_37 = arith.constant 0.353553385 : f32
    %144 = vector.broadcast %cst_37 : f32 to vector<2x8x8xf32>
    %145 = arith.mulf %143, %144 : vector<2x8x8xf32>
    %cst_38 = arith.constant -1.000000e+09 : f32
    %146 = vector.broadcast %cst_38 : f32 to vector<2x8x8xf32>
    %147 = arith.select %19, %145, %146 : vector<2x8x8xi1>, vector<2x8x8xf32>
    %cst_39 = arith.constant dense<0xFF800000> : vector<2x8xf32>
    %148 = vector.multi_reduction <maximumf>, %147, %cst_39 [2] : vector<2x8x8xf32> to vector<2x8xf32>
    %149 = vector.shape_cast %148 : vector<2x8xf32> to vector<2x8x1xf32>
    %150 = vector.broadcast %149 : vector<2x8x1xf32> to vector<2x8x8xf32>
    %151 = arith.subf %147, %150 : vector<2x8x8xf32>
    %152 = math.exp %151 : vector<2x8x8xf32>
    %cst_40 = arith.constant dense<0.000000e+00> : vector<2x8xf32>
    %153 = vector.multi_reduction <add>, %152, %cst_40 [2] : vector<2x8x8xf32> to vector<2x8xf32>
    %154 = vector.shape_cast %153 : vector<2x8xf32> to vector<2x8x1xf32>
    %155 = tpu.reciprocal %154 {approx = true} : vector<2x8x1xf32> -> vector<2x8x1xf32>
    %156 = vector.broadcast %155 : vector<2x8x1xf32> to vector<2x8x8xf32>
    %157 = arith.mulf %152, %156 : vector<2x8x8xf32>
    %158 = arith.truncf %157 : vector<2x8x8xf32> to vector<2x8x8xbf16>
    "tpu.trace_start"() <{level = 10 : i32, message = "bqk,bkd->bqd"}> : () -> ()
    %cst_41 = arith.constant dense<0.000000e+00> : vector<2x8x8xf32>
    %159 = tpu.matmul %158, %142, %cst_41 {dimension_numbers = #tpu.dot_dimension_numbers<[2], [1], [1], [2], [0, 0, 0, 1, 1, 2], [0], [0]>} : vector<2x8x8xbf16>, vector<2x8x8xbf16>, vector<2x8x8xf32> -> vector<2x8x8xf32>
    "tpu.trace_stop"() : () -> ()
    %160 = vector.shape_cast %159 : vector<2x8x8xf32> to vector<16x8xf32>
    %161 = arith.truncf %160 : vector<16x8xf32> to vector<16x8xbf16>
    %162 = vector.extract_strided_slice %70 {offsets = [16, 0], sizes = [8, 32], strides = [1, 1]} : vector<32x32xbf16> to vector<8x32xbf16>
    %cst_42 = arith.constant dense<0.000000e+00> : vector<16x32xf32>
    %163 = tpu.matmul %161, %162, %cst_42 {dimension_numbers = #tpu.dot_dimension_numbers<[1], [0], [0], [1], [0, 0, 1, 1], [], []>} : vector<16x8xbf16>, vector<8x32xbf16>, vector<16x32xf32> -> vector<16x32xf32>
    %164 = arith.addf %133, %163 : vector<16x32xf32>
    %165 = vector.extract_strided_slice %68 {offsets = [0, 24], sizes = [16, 8], strides = [1, 1]} : vector<16x96xf32> to vector<16x8xf32>
    %166 = vector.shape_cast %165 : vector<16x8xf32> to vector<2x8x8xf32>
    %167 = arith.truncf %166 : vector<2x8x8xf32> to vector<2x8x8xbf16>
    %168 = vector.extract_strided_slice %68 {offsets = [0, 56], sizes = [16, 8], strides = [1, 1]} : vector<16x96xf32> to vector<16x8xf32>
    %169 = vector.shape_cast %168 : vector<16x8xf32> to vector<2x8x8xf32>
    %170 = arith.truncf %169 : vector<2x8x8xf32> to vector<2x8x8xbf16>
    %171 = vector.extract_strided_slice %68 {offsets = [0, 88], sizes = [16, 8], strides = [1, 1]} : vector<16x96xf32> to vector<16x8xf32>
    %172 = vector.shape_cast %171 : vector<16x8xf32> to vector<2x8x8xf32>
    %173 = arith.truncf %172 : vector<2x8x8xf32> to vector<2x8x8xbf16>
    "tpu.trace_start"() <{level = 10 : i32, message = "bqd,bkd->bqk"}> : () -> ()
    %cst_43 = arith.constant dense<0.000000e+00> : vector<2x8x8xf32>
    %174 = tpu.matmul %167, %170, %cst_43 {dimension_numbers = #tpu.dot_dimension_numbers<[2], [2], [1], [1], [0, 0, 0, 1, 1, 1], [0], [0]>} : vector<2x8x8xbf16>, vector<2x8x8xbf16>, vector<2x8x8xf32> -> vector<2x8x8xf32>
    "tpu.trace_stop"() : () -> ()
    %cst_44 = arith.constant 0.353553385 : f32
    %175 = vector.broadcast %cst_44 : f32 to vector<2x8x8xf32>
    %176 = arith.mulf %174, %175 : vector<2x8x8xf32>
    %cst_45 = arith.constant -1.000000e+09 : f32
    %177 = vector.broadcast %cst_45 : f32 to vector<2x8x8xf32>
    %178 = arith.select %19, %176, %177 : vector<2x8x8xi1>, vector<2x8x8xf32>
    %cst_46 = arith.constant dense<0xFF800000> : vector<2x8xf32>
    %179 = vector.multi_reduction <maximumf>, %178, %cst_46 [2] : vector<2x8x8xf32> to vector<2x8xf32>
    %180 = vector.shape_cast %179 : vector<2x8xf32> to vector<2x8x1xf32>
    %181 = vector.broadcast %180 : vector<2x8x1xf32> to vector<2x8x8xf32>
    %182 = arith.subf %178, %181 : vector<2x8x8xf32>
    %183 = math.exp %182 : vector<2x8x8xf32>
    %cst_47 = arith.constant dense<0.000000e+00> : vector<2x8xf32>
    %184 = vector.multi_reduction <add>, %183, %cst_47 [2] : vector<2x8x8xf32> to vector<2x8xf32>
    %185 = vector.shape_cast %184 : vector<2x8xf32> to vector<2x8x1xf32>
    %186 = tpu.reciprocal %185 {approx = true} : vector<2x8x1xf32> -> vector<2x8x1xf32>
    %187 = vector.broadcast %186 : vector<2x8x1xf32> to vector<2x8x8xf32>
    %188 = arith.mulf %183, %187 : vector<2x8x8xf32>
    %189 = arith.truncf %188 : vector<2x8x8xf32> to vector<2x8x8xbf16>
    "tpu.trace_start"() <{level = 10 : i32, message = "bqk,bkd->bqd"}> : () -> ()
    %cst_48 = arith.constant dense<0.000000e+00> : vector<2x8x8xf32>
    %190 = tpu.matmul %189, %173, %cst_48 {dimension_numbers = #tpu.dot_dimension_numbers<[2], [1], [1], [2], [0, 0, 0, 1, 1, 2], [0], [0]>} : vector<2x8x8xbf16>, vector<2x8x8xbf16>, vector<2x8x8xf32> -> vector<2x8x8xf32>
    "tpu.trace_stop"() : () -> ()
    %191 = vector.shape_cast %190 : vector<2x8x8xf32> to vector<16x8xf32>
    %192 = arith.truncf %191 : vector<16x8xf32> to vector<16x8xbf16>
    %193 = vector.extract_strided_slice %70 {offsets = [24, 0], sizes = [8, 32], strides = [1, 1]} : vector<32x32xbf16> to vector<8x32xbf16>
    %cst_49 = arith.constant dense<0.000000e+00> : vector<16x32xf32>
    %194 = tpu.matmul %192, %193, %cst_49 {dimension_numbers = #tpu.dot_dimension_numbers<[1], [0], [0], [1], [0, 0, 1, 1], [], []>} : vector<16x8xbf16>, vector<8x32xbf16>, vector<16x32xf32> -> vector<16x32xf32>
    %195 = arith.addf %164, %194 : vector<16x32xf32>
    %196 = arith.addf %16, %195 : vector<16x32xf32>
    %197 = vector.shape_cast %33 : vector<32xf32> to vector<1x32xf32>
    %198 = vector.broadcast %197 : vector<1x32xf32> to vector<16x32xf32>
    %199 = arith.addf %196, %198 : vector<16x32xf32>
    %cst_50 = arith.constant dense<0.000000e+00> : vector<16xf32>
    %200 = vector.multi_reduction <add>, %199, %cst_50 [1] : vector<16x32xf32> to vector<16xf32>
    %201 = vector.shape_cast %200 : vector<16xf32> to vector<16x1xf32>
    %cst_51 = arith.constant 3.200000e+01 : f32
    %202 = vector.broadcast %cst_51 : f32 to vector<16x1xf32>
    %203 = arith.divf %201, %202 : vector<16x1xf32>
    %204 = arith.mulf %199, %199 : vector<16x32xf32>
    %cst_52 = arith.constant dense<0.000000e+00> : vector<16xf32>
    %205 = vector.multi_reduction <add>, %204, %cst_52 [1] : vector<16x32xf32> to vector<16xf32>
    %206 = vector.shape_cast %205 : vector<16xf32> to vector<16x1xf32>
    %cst_53 = arith.constant 3.200000e+01 : f32
    %207 = vector.broadcast %cst_53 : f32 to vector<16x1xf32>
    %208 = arith.divf %206, %207 : vector<16x1xf32>
    %209 = arith.mulf %203, %203 : vector<16x1xf32>
    %210 = arith.subf %208, %209 : vector<16x1xf32>
    %211 = vector.broadcast %203 : vector<16x1xf32> to vector<16x32xf32>
    %212 = arith.subf %199, %211 : vector<16x32xf32>
    %cst_54 = arith.constant 9.99999974E-6 : f32
    %213 = vector.broadcast %cst_54 : f32 to vector<16x1xf32>
    %214 = arith.addf %210, %213 : vector<16x1xf32>
    %215 = math.rsqrt %214 : vector<16x1xf32>
    %216 = vector.broadcast %215 : vector<16x1xf32> to vector<16x32xf32>
    %217 = arith.mulf %212, %216 : vector<16x32xf32>
    %218 = vector.shape_cast %27 : vector<32xf32> to vector<1x32xf32>
    %219 = vector.broadcast %218 : vector<1x32xf32> to vector<16x32xf32>
    %220 = arith.mulf %217, %219 : vector<16x32xf32>
    %221 = vector.shape_cast %29 : vector<32xf32> to vector<1x32xf32>
    %222 = vector.broadcast %221 : vector<1x32xf32> to vector<16x32xf32>
    %223 = arith.addf %220, %222 : vector<16x32xf32>
    %224 = arith.truncf %223 : vector<16x32xf32> to vector<16x32xbf16>
    %c0_55 = arith.constant 0 : index
    %c0_56 = arith.constant 0 : index
    %c0_57 = arith.constant 0 : index
    %225 = vector.load %arg8[%c0_55, %c0_56, %c0_57] : memref<2x32x128xbf16, #tpu.memory_space<vmem>>, vector<1x32x128xbf16>
    %226 = vector.shape_cast %225 : vector<1x32x128xbf16> to vector<32x128xbf16>
    %cst_58 = arith.constant dense<0.000000e+00> : vector<16x128xf32>
    %227 = tpu.matmul %224, %226, %cst_58 {dimension_numbers = #tpu.dot_dimension_numbers<[1], [0], [0], [1], [0, 0, 1, 1], [], []>} : vector<16x32xbf16>, vector<32x128xbf16>, vector<16x128xf32> -> vector<16x128xf32>
    %228 = vector.shape_cast %35 : vector<128xf32> to vector<1x128xf32>
    %229 = vector.broadcast %228 : vector<1x128xf32> to vector<16x128xf32>
    %230 = arith.addf %227, %229 : vector<16x128xf32>
    %231 = arith.mulf %230, %230 : vector<16x128xf32>
    %232 = arith.mulf %230, %231 : vector<16x128xf32>
    %cst_59 = arith.constant 4.471500e-02 : f32
    %233 = vector.broadcast %cst_59 : f32 to vector<16x128xf32>
    %234 = arith.mulf %233, %232 : vector<16x128xf32>
    %235 = arith.addf %230, %234 : vector<16x128xf32>
    %cst_60 = arith.constant 0.797884583 : f32
    %236 = vector.broadcast %cst_60 : f32 to vector<16x128xf32>
    %237 = arith.mulf %236, %235 : vector<16x128xf32>
    %238 = math.tanh %237 : vector<16x128xf32>
    %cst_61 = arith.constant 1.000000e+00 : f32
    %239 = vector.broadcast %cst_61 : f32 to vector<16x128xf32>
    %240 = arith.addf %239, %238 : vector<16x128xf32>
    %cst_62 = arith.constant 5.000000e-01 : f32
    %241 = vector.broadcast %cst_62 : f32 to vector<16x128xf32>
    %242 = arith.mulf %241, %240 : vector<16x128xf32>
    %243 = arith.mulf %230, %242 : vector<16x128xf32>
    %244 = arith.truncf %243 : vector<16x128xf32> to vector<16x128xbf16>
    %c0_63 = arith.constant 0 : index
    %c0_64 = arith.constant 0 : index
    %c0_65 = arith.constant 0 : index
    %245 = vector.load %arg9[%c0_63, %c0_64, %c0_65] : memref<2x128x32xbf16, #tpu.memory_space<vmem>>, vector<1x128x32xbf16>
    %246 = vector.shape_cast %245 : vector<1x128x32xbf16> to vector<128x32xbf16>
    %cst_66 = arith.constant dense<0.000000e+00> : vector<16x32xf32>
    %247 = tpu.matmul %244, %246, %cst_66 {dimension_numbers = #tpu.dot_dimension_numbers<[1], [0], [0], [1], [0, 0, 1, 1], [], []>} : vector<16x128xbf16>, vector<128x32xbf16>, vector<16x32xf32> -> vector<16x32xf32>
    %248 = arith.addf %199, %247 : vector<16x32xf32>
    %249 = vector.shape_cast %37 : vector<32xf32> to vector<1x32xf32>
    %250 = vector.broadcast %249 : vector<1x32xf32> to vector<16x32xf32>
    %251 = arith.addf %248, %250 : vector<16x32xf32>
    %c1 = arith.constant 1 : index
    %c0_67 = arith.constant 0 : index
    %c0_68 = arith.constant 0 : index
    %252 = vector.load %arg4[%c1, %c0_67, %c0_68] : memref<2x8x128xf32, #tpu.memory_space<vmem>>, vector<1x8x128xf32>
    %253 = vector.shape_cast %252 : vector<1x8x128xf32> to vector<8x128xf32>
    %254 = vector.extract_strided_slice %253 {offsets = [0, 0], sizes = [1, 32], strides = [1, 1]} : vector<8x128xf32> to vector<1x32xf32>
    %255 = vector.shape_cast %254 : vector<1x32xf32> to vector<32xf32>
    %256 = vector.extract_strided_slice %253 {offsets = [1, 0], sizes = [1, 32], strides = [1, 1]} : vector<8x128xf32> to vector<1x32xf32>
    %257 = vector.shape_cast %256 : vector<1x32xf32> to vector<32xf32>
    %258 = vector.extract_strided_slice %253 {offsets = [2, 0], sizes = [1, 32], strides = [1, 1]} : vector<8x128xf32> to vector<1x32xf32>
    %259 = vector.shape_cast %258 : vector<1x32xf32> to vector<32xf32>
    %260 = vector.extract_strided_slice %253 {offsets = [3, 0], sizes = [1, 32], strides = [1, 1]} : vector<8x128xf32> to vector<1x32xf32>
    %261 = vector.shape_cast %260 : vector<1x32xf32> to vector<32xf32>
    %262 = vector.extract_strided_slice %253 {offsets = [4, 0], sizes = [1, 96], strides = [1, 1]} : vector<8x128xf32> to vector<1x96xf32>
    %263 = vector.shape_cast %262 : vector<1x96xf32> to vector<96xf32>
    %264 = vector.extract_strided_slice %253 {offsets = [5, 0], sizes = [1, 32], strides = [1, 1]} : vector<8x128xf32> to vector<1x32xf32>
    %265 = vector.shape_cast %264 : vector<1x32xf32> to vector<32xf32>
    %266 = vector.extract_strided_slice %253 {offsets = [6, 0], sizes = [1, 128], strides = [1, 1]} : vector<8x128xf32> to vector<1x128xf32>
    %267 = vector.shape_cast %266 : vector<1x128xf32> to vector<128xf32>
    %268 = vector.extract_strided_slice %253 {offsets = [7, 0], sizes = [1, 32], strides = [1, 1]} : vector<8x128xf32> to vector<1x32xf32>
    %269 = vector.shape_cast %268 : vector<1x32xf32> to vector<32xf32>
    %cst_69 = arith.constant dense<0.000000e+00> : vector<16xf32>
    %270 = vector.multi_reduction <add>, %251, %cst_69 [1] : vector<16x32xf32> to vector<16xf32>
    %271 = vector.shape_cast %270 : vector<16xf32> to vector<16x1xf32>
    %cst_70 = arith.constant 3.200000e+01 : f32
    %272 = vector.broadcast %cst_70 : f32 to vector<16x1xf32>
    %273 = arith.divf %271, %272 : vector<16x1xf32>
    %274 = arith.mulf %251, %251 : vector<16x32xf32>
    %cst_71 = arith.constant dense<0.000000e+00> : vector<16xf32>
    %275 = vector.multi_reduction <add>, %274, %cst_71 [1] : vector<16x32xf32> to vector<16xf32>
    %276 = vector.shape_cast %275 : vector<16xf32> to vector<16x1xf32>
    %cst_72 = arith.constant 3.200000e+01 : f32
    %277 = vector.broadcast %cst_72 : f32 to vector<16x1xf32>
    %278 = arith.divf %276, %277 : vector<16x1xf32>
    %279 = arith.mulf %273, %273 : vector<16x1xf32>
    %280 = arith.subf %278, %279 : vector<16x1xf32>
    %281 = vector.broadcast %273 : vector<16x1xf32> to vector<16x32xf32>
    %282 = arith.subf %251, %281 : vector<16x32xf32>
    %cst_73 = arith.constant 9.99999974E-6 : f32
    %283 = vector.broadcast %cst_73 : f32 to vector<16x1xf32>
    %284 = arith.addf %280, %283 : vector<16x1xf32>
    %285 = math.rsqrt %284 : vector<16x1xf32>
    %286 = vector.broadcast %285 : vector<16x1xf32> to vector<16x32xf32>
    %287 = arith.mulf %282, %286 : vector<16x32xf32>
    %288 = vector.shape_cast %255 : vector<32xf32> to vector<1x32xf32>
    %289 = vector.broadcast %288 : vector<1x32xf32> to vector<16x32xf32>
    %290 = arith.mulf %287, %289 : vector<16x32xf32>
    %291 = vector.shape_cast %257 : vector<32xf32> to vector<1x32xf32>
    %292 = vector.broadcast %291 : vector<1x32xf32> to vector<16x32xf32>
    %293 = arith.addf %290, %292 : vector<16x32xf32>
    %294 = arith.truncf %293 : vector<16x32xf32> to vector<16x32xbf16>
    %c1_74 = arith.constant 1 : index
    %c0_75 = arith.constant 0 : index
    %c0_76 = arith.constant 0 : index
    %295 = vector.load %arg6[%c1_74, %c0_75, %c0_76] : memref<2x32x96xbf16, #tpu.memory_space<vmem>>, vector<1x32x96xbf16>
    %296 = vector.shape_cast %295 : vector<1x32x96xbf16> to vector<32x96xbf16>
    %cst_77 = arith.constant dense<0.000000e+00> : vector<16x96xf32>
    %297 = tpu.matmul %294, %296, %cst_77 {dimension_numbers = #tpu.dot_dimension_numbers<[1], [0], [0], [1], [0, 0, 1, 1], [], []>} : vector<16x32xbf16>, vector<32x96xbf16>, vector<16x96xf32> -> vector<16x96xf32>
    %298 = vector.shape_cast %263 : vector<96xf32> to vector<1x96xf32>
    %299 = vector.broadcast %298 : vector<1x96xf32> to vector<16x96xf32>
    %300 = arith.addf %297, %299 : vector<16x96xf32>
    %c1_78 = arith.constant 1 : index
    %c0_79 = arith.constant 0 : index
    %c0_80 = arith.constant 0 : index
    %301 = vector.load %arg7[%c1_78, %c0_79, %c0_80] : memref<2x32x32xbf16, #tpu.memory_space<vmem>>, vector<1x32x32xbf16>
    %302 = vector.shape_cast %301 : vector<1x32x32xbf16> to vector<32x32xbf16>
    %cst_81 = arith.constant 0.000000e+00 : f32
    %303 = vector.broadcast %cst_81 : f32 to vector<16x32xf32>
    %304 = vector.extract_strided_slice %300 {offsets = [0, 0], sizes = [16, 8], strides = [1, 1]} : vector<16x96xf32> to vector<16x8xf32>
    %305 = vector.shape_cast %304 : vector<16x8xf32> to vector<2x8x8xf32>
    %306 = arith.truncf %305 : vector<2x8x8xf32> to vector<2x8x8xbf16>
    %307 = vector.extract_strided_slice %300 {offsets = [0, 32], sizes = [16, 8], strides = [1, 1]} : vector<16x96xf32> to vector<16x8xf32>
    %308 = vector.shape_cast %307 : vector<16x8xf32> to vector<2x8x8xf32>
    %309 = arith.truncf %308 : vector<2x8x8xf32> to vector<2x8x8xbf16>
    %310 = vector.extract_strided_slice %300 {offsets = [0, 64], sizes = [16, 8], strides = [1, 1]} : vector<16x96xf32> to vector<16x8xf32>
    %311 = vector.shape_cast %310 : vector<16x8xf32> to vector<2x8x8xf32>
    %312 = arith.truncf %311 : vector<2x8x8xf32> to vector<2x8x8xbf16>
    "tpu.trace_start"() <{level = 10 : i32, message = "bqd,bkd->bqk"}> : () -> ()
    %cst_82 = arith.constant dense<0.000000e+00> : vector<2x8x8xf32>
    %313 = tpu.matmul %306, %309, %cst_82 {dimension_numbers = #tpu.dot_dimension_numbers<[2], [2], [1], [1], [0, 0, 0, 1, 1, 1], [0], [0]>} : vector<2x8x8xbf16>, vector<2x8x8xbf16>, vector<2x8x8xf32> -> vector<2x8x8xf32>
    "tpu.trace_stop"() : () -> ()
    %cst_83 = arith.constant 0.353553385 : f32
    %314 = vector.broadcast %cst_83 : f32 to vector<2x8x8xf32>
    %315 = arith.mulf %313, %314 : vector<2x8x8xf32>
    %cst_84 = arith.constant -1.000000e+09 : f32
    %316 = vector.broadcast %cst_84 : f32 to vector<2x8x8xf32>
    %317 = arith.select %19, %315, %316 : vector<2x8x8xi1>, vector<2x8x8xf32>
    %cst_85 = arith.constant dense<0xFF800000> : vector<2x8xf32>
    %318 = vector.multi_reduction <maximumf>, %317, %cst_85 [2] : vector<2x8x8xf32> to vector<2x8xf32>
    %319 = vector.shape_cast %318 : vector<2x8xf32> to vector<2x8x1xf32>
    %320 = vector.broadcast %319 : vector<2x8x1xf32> to vector<2x8x8xf32>
    %321 = arith.subf %317, %320 : vector<2x8x8xf32>
    %322 = math.exp %321 : vector<2x8x8xf32>
    %cst_86 = arith.constant dense<0.000000e+00> : vector<2x8xf32>
    %323 = vector.multi_reduction <add>, %322, %cst_86 [2] : vector<2x8x8xf32> to vector<2x8xf32>
    %324 = vector.shape_cast %323 : vector<2x8xf32> to vector<2x8x1xf32>
    %325 = tpu.reciprocal %324 {approx = true} : vector<2x8x1xf32> -> vector<2x8x1xf32>
    %326 = vector.broadcast %325 : vector<2x8x1xf32> to vector<2x8x8xf32>
    %327 = arith.mulf %322, %326 : vector<2x8x8xf32>
    %328 = arith.truncf %327 : vector<2x8x8xf32> to vector<2x8x8xbf16>
    "tpu.trace_start"() <{level = 10 : i32, message = "bqk,bkd->bqd"}> : () -> ()
    %cst_87 = arith.constant dense<0.000000e+00> : vector<2x8x8xf32>
    %329 = tpu.matmul %328, %312, %cst_87 {dimension_numbers = #tpu.dot_dimension_numbers<[2], [1], [1], [2], [0, 0, 0, 1, 1, 2], [0], [0]>} : vector<2x8x8xbf16>, vector<2x8x8xbf16>, vector<2x8x8xf32> -> vector<2x8x8xf32>
    "tpu.trace_stop"() : () -> ()
    %330 = vector.shape_cast %329 : vector<2x8x8xf32> to vector<16x8xf32>
    %331 = arith.truncf %330 : vector<16x8xf32> to vector<16x8xbf16>
    %332 = vector.extract_strided_slice %302 {offsets = [0, 0], sizes = [8, 32], strides = [1, 1]} : vector<32x32xbf16> to vector<8x32xbf16>
    %cst_88 = arith.constant dense<0.000000e+00> : vector<16x32xf32>
    %333 = tpu.matmul %331, %332, %cst_88 {dimension_numbers = #tpu.dot_dimension_numbers<[1], [0], [0], [1], [0, 0, 1, 1], [], []>} : vector<16x8xbf16>, vector<8x32xbf16>, vector<16x32xf32> -> vector<16x32xf32>
    %334 = arith.addf %303, %333 : vector<16x32xf32>
    %335 = vector.extract_strided_slice %300 {offsets = [0, 8], sizes = [16, 8], strides = [1, 1]} : vector<16x96xf32> to vector<16x8xf32>
    %336 = vector.shape_cast %335 : vector<16x8xf32> to vector<2x8x8xf32>
    %337 = arith.truncf %336 : vector<2x8x8xf32> to vector<2x8x8xbf16>
    %338 = vector.extract_strided_slice %300 {offsets = [0, 40], sizes = [16, 8], strides = [1, 1]} : vector<16x96xf32> to vector<16x8xf32>
    %339 = vector.shape_cast %338 : vector<16x8xf32> to vector<2x8x8xf32>
    %340 = arith.truncf %339 : vector<2x8x8xf32> to vector<2x8x8xbf16>
    %341 = vector.extract_strided_slice %300 {offsets = [0, 72], sizes = [16, 8], strides = [1, 1]} : vector<16x96xf32> to vector<16x8xf32>
    %342 = vector.shape_cast %341 : vector<16x8xf32> to vector<2x8x8xf32>
    %343 = arith.truncf %342 : vector<2x8x8xf32> to vector<2x8x8xbf16>
    "tpu.trace_start"() <{level = 10 : i32, message = "bqd,bkd->bqk"}> : () -> ()
    %cst_89 = arith.constant dense<0.000000e+00> : vector<2x8x8xf32>
    %344 = tpu.matmul %337, %340, %cst_89 {dimension_numbers = #tpu.dot_dimension_numbers<[2], [2], [1], [1], [0, 0, 0, 1, 1, 1], [0], [0]>} : vector<2x8x8xbf16>, vector<2x8x8xbf16>, vector<2x8x8xf32> -> vector<2x8x8xf32>
    "tpu.trace_stop"() : () -> ()
    %cst_90 = arith.constant 0.353553385 : f32
    %345 = vector.broadcast %cst_90 : f32 to vector<2x8x8xf32>
    %346 = arith.mulf %344, %345 : vector<2x8x8xf32>
    %cst_91 = arith.constant -1.000000e+09 : f32
    %347 = vector.broadcast %cst_91 : f32 to vector<2x8x8xf32>
    %348 = arith.select %19, %346, %347 : vector<2x8x8xi1>, vector<2x8x8xf32>
    %cst_92 = arith.constant dense<0xFF800000> : vector<2x8xf32>
    %349 = vector.multi_reduction <maximumf>, %348, %cst_92 [2] : vector<2x8x8xf32> to vector<2x8xf32>
    %350 = vector.shape_cast %349 : vector<2x8xf32> to vector<2x8x1xf32>
    %351 = vector.broadcast %350 : vector<2x8x1xf32> to vector<2x8x8xf32>
    %352 = arith.subf %348, %351 : vector<2x8x8xf32>
    %353 = math.exp %352 : vector<2x8x8xf32>
    %cst_93 = arith.constant dense<0.000000e+00> : vector<2x8xf32>
    %354 = vector.multi_reduction <add>, %353, %cst_93 [2] : vector<2x8x8xf32> to vector<2x8xf32>
    %355 = vector.shape_cast %354 : vector<2x8xf32> to vector<2x8x1xf32>
    %356 = tpu.reciprocal %355 {approx = true} : vector<2x8x1xf32> -> vector<2x8x1xf32>
    %357 = vector.broadcast %356 : vector<2x8x1xf32> to vector<2x8x8xf32>
    %358 = arith.mulf %353, %357 : vector<2x8x8xf32>
    %359 = arith.truncf %358 : vector<2x8x8xf32> to vector<2x8x8xbf16>
    "tpu.trace_start"() <{level = 10 : i32, message = "bqk,bkd->bqd"}> : () -> ()
    %cst_94 = arith.constant dense<0.000000e+00> : vector<2x8x8xf32>
    %360 = tpu.matmul %359, %343, %cst_94 {dimension_numbers = #tpu.dot_dimension_numbers<[2], [1], [1], [2], [0, 0, 0, 1, 1, 2], [0], [0]>} : vector<2x8x8xbf16>, vector<2x8x8xbf16>, vector<2x8x8xf32> -> vector<2x8x8xf32>
    "tpu.trace_stop"() : () -> ()
    %361 = vector.shape_cast %360 : vector<2x8x8xf32> to vector<16x8xf32>
    %362 = arith.truncf %361 : vector<16x8xf32> to vector<16x8xbf16>
    %363 = vector.extract_strided_slice %302 {offsets = [8, 0], sizes = [8, 32], strides = [1, 1]} : vector<32x32xbf16> to vector<8x32xbf16>
    %cst_95 = arith.constant dense<0.000000e+00> : vector<16x32xf32>
    %364 = tpu.matmul %362, %363, %cst_95 {dimension_numbers = #tpu.dot_dimension_numbers<[1], [0], [0], [1], [0, 0, 1, 1], [], []>} : vector<16x8xbf16>, vector<8x32xbf16>, vector<16x32xf32> -> vector<16x32xf32>
    %365 = arith.addf %334, %364 : vector<16x32xf32>
    %366 = vector.extract_strided_slice %300 {offsets = [0, 16], sizes = [16, 8], strides = [1, 1]} : vector<16x96xf32> to vector<16x8xf32>
    %367 = vector.shape_cast %366 : vector<16x8xf32> to vector<2x8x8xf32>
    %368 = arith.truncf %367 : vector<2x8x8xf32> to vector<2x8x8xbf16>
    %369 = vector.extract_strided_slice %300 {offsets = [0, 48], sizes = [16, 8], strides = [1, 1]} : vector<16x96xf32> to vector<16x8xf32>
    %370 = vector.shape_cast %369 : vector<16x8xf32> to vector<2x8x8xf32>
    %371 = arith.truncf %370 : vector<2x8x8xf32> to vector<2x8x8xbf16>
    %372 = vector.extract_strided_slice %300 {offsets = [0, 80], sizes = [16, 8], strides = [1, 1]} : vector<16x96xf32> to vector<16x8xf32>
    %373 = vector.shape_cast %372 : vector<16x8xf32> to vector<2x8x8xf32>
    %374 = arith.truncf %373 : vector<2x8x8xf32> to vector<2x8x8xbf16>
    "tpu.trace_start"() <{level = 10 : i32, message = "bqd,bkd->bqk"}> : () -> ()
    %cst_96 = arith.constant dense<0.000000e+00> : vector<2x8x8xf32>
    %375 = tpu.matmul %368, %371, %cst_96 {dimension_numbers = #tpu.dot_dimension_numbers<[2], [2], [1], [1], [0, 0, 0, 1, 1, 1], [0], [0]>} : vector<2x8x8xbf16>, vector<2x8x8xbf16>, vector<2x8x8xf32> -> vector<2x8x8xf32>
    "tpu.trace_stop"() : () -> ()
    %cst_97 = arith.constant 0.353553385 : f32
    %376 = vector.broadcast %cst_97 : f32 to vector<2x8x8xf32>
    %377 = arith.mulf %375, %376 : vector<2x8x8xf32>
    %cst_98 = arith.constant -1.000000e+09 : f32
    %378 = vector.broadcast %cst_98 : f32 to vector<2x8x8xf32>
    %379 = arith.select %19, %377, %378 : vector<2x8x8xi1>, vector<2x8x8xf32>
    %cst_99 = arith.constant dense<0xFF800000> : vector<2x8xf32>
    %380 = vector.multi_reduction <maximumf>, %379, %cst_99 [2] : vector<2x8x8xf32> to vector<2x8xf32>
    %381 = vector.shape_cast %380 : vector<2x8xf32> to vector<2x8x1xf32>
    %382 = vector.broadcast %381 : vector<2x8x1xf32> to vector<2x8x8xf32>
    %383 = arith.subf %379, %382 : vector<2x8x8xf32>
    %384 = math.exp %383 : vector<2x8x8xf32>
    %cst_100 = arith.constant dense<0.000000e+00> : vector<2x8xf32>
    %385 = vector.multi_reduction <add>, %384, %cst_100 [2] : vector<2x8x8xf32> to vector<2x8xf32>
    %386 = vector.shape_cast %385 : vector<2x8xf32> to vector<2x8x1xf32>
    %387 = tpu.reciprocal %386 {approx = true} : vector<2x8x1xf32> -> vector<2x8x1xf32>
    %388 = vector.broadcast %387 : vector<2x8x1xf32> to vector<2x8x8xf32>
    %389 = arith.mulf %384, %388 : vector<2x8x8xf32>
    %390 = arith.truncf %389 : vector<2x8x8xf32> to vector<2x8x8xbf16>
    "tpu.trace_start"() <{level = 10 : i32, message = "bqk,bkd->bqd"}> : () -> ()
    %cst_101 = arith.constant dense<0.000000e+00> : vector<2x8x8xf32>
    %391 = tpu.matmul %390, %374, %cst_101 {dimension_numbers = #tpu.dot_dimension_numbers<[2], [1], [1], [2], [0, 0, 0, 1, 1, 2], [0], [0]>} : vector<2x8x8xbf16>, vector<2x8x8xbf16>, vector<2x8x8xf32> -> vector<2x8x8xf32>
    "tpu.trace_stop"() : () -> ()
    %392 = vector.shape_cast %391 : vector<2x8x8xf32> to vector<16x8xf32>
    %393 = arith.truncf %392 : vector<16x8xf32> to vector<16x8xbf16>
    %394 = vector.extract_strided_slice %302 {offsets = [16, 0], sizes = [8, 32], strides = [1, 1]} : vector<32x32xbf16> to vector<8x32xbf16>
    %cst_102 = arith.constant dense<0.000000e+00> : vector<16x32xf32>
    %395 = tpu.matmul %393, %394, %cst_102 {dimension_numbers = #tpu.dot_dimension_numbers<[1], [0], [0], [1], [0, 0, 1, 1], [], []>} : vector<16x8xbf16>, vector<8x32xbf16>, vector<16x32xf32> -> vector<16x32xf32>
    %396 = arith.addf %365, %395 : vector<16x32xf32>
    %397 = vector.extract_strided_slice %300 {offsets = [0, 24], sizes = [16, 8], strides = [1, 1]} : vector<16x96xf32> to vector<16x8xf32>
    %398 = vector.shape_cast %397 : vector<16x8xf32> to vector<2x8x8xf32>
    %399 = arith.truncf %398 : vector<2x8x8xf32> to vector<2x8x8xbf16>
    %400 = vector.extract_strided_slice %300 {offsets = [0, 56], sizes = [16, 8], strides = [1, 1]} : vector<16x96xf32> to vector<16x8xf32>
    %401 = vector.shape_cast %400 : vector<16x8xf32> to vector<2x8x8xf32>
    %402 = arith.truncf %401 : vector<2x8x8xf32> to vector<2x8x8xbf16>
    %403 = vector.extract_strided_slice %300 {offsets = [0, 88], sizes = [16, 8], strides = [1, 1]} : vector<16x96xf32> to vector<16x8xf32>
    %404 = vector.shape_cast %403 : vector<16x8xf32> to vector<2x8x8xf32>
    %405 = arith.truncf %404 : vector<2x8x8xf32> to vector<2x8x8xbf16>
    "tpu.trace_start"() <{level = 10 : i32, message = "bqd,bkd->bqk"}> : () -> ()
    %cst_103 = arith.constant dense<0.000000e+00> : vector<2x8x8xf32>
    %406 = tpu.matmul %399, %402, %cst_103 {dimension_numbers = #tpu.dot_dimension_numbers<[2], [2], [1], [1], [0, 0, 0, 1, 1, 1], [0], [0]>} : vector<2x8x8xbf16>, vector<2x8x8xbf16>, vector<2x8x8xf32> -> vector<2x8x8xf32>
    "tpu.trace_stop"() : () -> ()
    %cst_104 = arith.constant 0.353553385 : f32
    %407 = vector.broadcast %cst_104 : f32 to vector<2x8x8xf32>
    %408 = arith.mulf %406, %407 : vector<2x8x8xf32>
    %cst_105 = arith.constant -1.000000e+09 : f32
    %409 = vector.broadcast %cst_105 : f32 to vector<2x8x8xf32>
    %410 = arith.select %19, %408, %409 : vector<2x8x8xi1>, vector<2x8x8xf32>
    %cst_106 = arith.constant dense<0xFF800000> : vector<2x8xf32>
    %411 = vector.multi_reduction <maximumf>, %410, %cst_106 [2] : vector<2x8x8xf32> to vector<2x8xf32>
    %412 = vector.shape_cast %411 : vector<2x8xf32> to vector<2x8x1xf32>
    %413 = vector.broadcast %412 : vector<2x8x1xf32> to vector<2x8x8xf32>
    %414 = arith.subf %410, %413 : vector<2x8x8xf32>
    %415 = math.exp %414 : vector<2x8x8xf32>
    %cst_107 = arith.constant dense<0.000000e+00> : vector<2x8xf32>
    %416 = vector.multi_reduction <add>, %415, %cst_107 [2] : vector<2x8x8xf32> to vector<2x8xf32>
    %417 = vector.shape_cast %416 : vector<2x8xf32> to vector<2x8x1xf32>
    %418 = tpu.reciprocal %417 {approx = true} : vector<2x8x1xf32> -> vector<2x8x1xf32>
    %419 = vector.broadcast %418 : vector<2x8x1xf32> to vector<2x8x8xf32>
    %420 = arith.mulf %415, %419 : vector<2x8x8xf32>
    %421 = arith.truncf %420 : vector<2x8x8xf32> to vector<2x8x8xbf16>
    "tpu.trace_start"() <{level = 10 : i32, message = "bqk,bkd->bqd"}> : () -> ()
    %cst_108 = arith.constant dense<0.000000e+00> : vector<2x8x8xf32>
    %422 = tpu.matmul %421, %405, %cst_108 {dimension_numbers = #tpu.dot_dimension_numbers<[2], [1], [1], [2], [0, 0, 0, 1, 1, 2], [0], [0]>} : vector<2x8x8xbf16>, vector<2x8x8xbf16>, vector<2x8x8xf32> -> vector<2x8x8xf32>
    "tpu.trace_stop"() : () -> ()
    %423 = vector.shape_cast %422 : vector<2x8x8xf32> to vector<16x8xf32>
    %424 = arith.truncf %423 : vector<16x8xf32> to vector<16x8xbf16>
    %425 = vector.extract_strided_slice %302 {offsets = [24, 0], sizes = [8, 32], strides = [1, 1]} : vector<32x32xbf16> to vector<8x32xbf16>
    %cst_109 = arith.constant dense<0.000000e+00> : vector<16x32xf32>
    %426 = tpu.matmul %424, %425, %cst_109 {dimension_numbers = #tpu.dot_dimension_numbers<[1], [0], [0], [1], [0, 0, 1, 1], [], []>} : vector<16x8xbf16>, vector<8x32xbf16>, vector<16x32xf32> -> vector<16x32xf32>
    %427 = arith.addf %396, %426 : vector<16x32xf32>
    %428 = arith.addf %251, %427 : vector<16x32xf32>
    %429 = vector.shape_cast %265 : vector<32xf32> to vector<1x32xf32>
    %430 = vector.broadcast %429 : vector<1x32xf32> to vector<16x32xf32>
    %431 = arith.addf %428, %430 : vector<16x32xf32>
    %cst_110 = arith.constant dense<0.000000e+00> : vector<16xf32>
    %432 = vector.multi_reduction <add>, %431, %cst_110 [1] : vector<16x32xf32> to vector<16xf32>
    %433 = vector.shape_cast %432 : vector<16xf32> to vector<16x1xf32>
    %cst_111 = arith.constant 3.200000e+01 : f32
    %434 = vector.broadcast %cst_111 : f32 to vector<16x1xf32>
    %435 = arith.divf %433, %434 : vector<16x1xf32>
    %436 = arith.mulf %431, %431 : vector<16x32xf32>
    %cst_112 = arith.constant dense<0.000000e+00> : vector<16xf32>
    %437 = vector.multi_reduction <add>, %436, %cst_112 [1] : vector<16x32xf32> to vector<16xf32>
    %438 = vector.shape_cast %437 : vector<16xf32> to vector<16x1xf32>
    %cst_113 = arith.constant 3.200000e+01 : f32
    %439 = vector.broadcast %cst_113 : f32 to vector<16x1xf32>
    %440 = arith.divf %438, %439 : vector<16x1xf32>
    %441 = arith.mulf %435, %435 : vector<16x1xf32>
    %442 = arith.subf %440, %441 : vector<16x1xf32>
    %443 = vector.broadcast %435 : vector<16x1xf32> to vector<16x32xf32>
    %444 = arith.subf %431, %443 : vector<16x32xf32>
    %cst_114 = arith.constant 9.99999974E-6 : f32
    %445 = vector.broadcast %cst_114 : f32 to vector<16x1xf32>
    %446 = arith.addf %442, %445 : vector<16x1xf32>
    %447 = math.rsqrt %446 : vector<16x1xf32>
    %448 = vector.broadcast %447 : vector<16x1xf32> to vector<16x32xf32>
    %449 = arith.mulf %444, %448 : vector<16x32xf32>
    %450 = vector.shape_cast %259 : vector<32xf32> to vector<1x32xf32>
    %451 = vector.broadcast %450 : vector<1x32xf32> to vector<16x32xf32>
    %452 = arith.mulf %449, %451 : vector<16x32xf32>
    %453 = vector.shape_cast %261 : vector<32xf32> to vector<1x32xf32>
    %454 = vector.broadcast %453 : vector<1x32xf32> to vector<16x32xf32>
    %455 = arith.addf %452, %454 : vector<16x32xf32>
    %456 = arith.truncf %455 : vector<16x32xf32> to vector<16x32xbf16>
    %c1_115 = arith.constant 1 : index
    %c0_116 = arith.constant 0 : index
    %c0_117 = arith.constant 0 : index
    %457 = vector.load %arg8[%c1_115, %c0_116, %c0_117] : memref<2x32x128xbf16, #tpu.memory_space<vmem>>, vector<1x32x128xbf16>
    %458 = vector.shape_cast %457 : vector<1x32x128xbf16> to vector<32x128xbf16>
    %cst_118 = arith.constant dense<0.000000e+00> : vector<16x128xf32>
    %459 = tpu.matmul %456, %458, %cst_118 {dimension_numbers = #tpu.dot_dimension_numbers<[1], [0], [0], [1], [0, 0, 1, 1], [], []>} : vector<16x32xbf16>, vector<32x128xbf16>, vector<16x128xf32> -> vector<16x128xf32>
    %460 = vector.shape_cast %267 : vector<128xf32> to vector<1x128xf32>
    %461 = vector.broadcast %460 : vector<1x128xf32> to vector<16x128xf32>
    %462 = arith.addf %459, %461 : vector<16x128xf32>
    %463 = arith.mulf %462, %462 : vector<16x128xf32>
    %464 = arith.mulf %462, %463 : vector<16x128xf32>
    %cst_119 = arith.constant 4.471500e-02 : f32
    %465 = vector.broadcast %cst_119 : f32 to vector<16x128xf32>
    %466 = arith.mulf %465, %464 : vector<16x128xf32>
    %467 = arith.addf %462, %466 : vector<16x128xf32>
    %cst_120 = arith.constant 0.797884583 : f32
    %468 = vector.broadcast %cst_120 : f32 to vector<16x128xf32>
    %469 = arith.mulf %468, %467 : vector<16x128xf32>
    %470 = math.tanh %469 : vector<16x128xf32>
    %cst_121 = arith.constant 1.000000e+00 : f32
    %471 = vector.broadcast %cst_121 : f32 to vector<16x128xf32>
    %472 = arith.addf %471, %470 : vector<16x128xf32>
    %cst_122 = arith.constant 5.000000e-01 : f32
    %473 = vector.broadcast %cst_122 : f32 to vector<16x128xf32>
    %474 = arith.mulf %473, %472 : vector<16x128xf32>
    %475 = arith.mulf %462, %474 : vector<16x128xf32>
    %476 = arith.truncf %475 : vector<16x128xf32> to vector<16x128xbf16>
    %c1_123 = arith.constant 1 : index
    %c0_124 = arith.constant 0 : index
    %c0_125 = arith.constant 0 : index
    %477 = vector.load %arg9[%c1_123, %c0_124, %c0_125] : memref<2x128x32xbf16, #tpu.memory_space<vmem>>, vector<1x128x32xbf16>
    %478 = vector.shape_cast %477 : vector<1x128x32xbf16> to vector<128x32xbf16>
    %cst_126 = arith.constant dense<0.000000e+00> : vector<16x32xf32>
    %479 = tpu.matmul %476, %478, %cst_126 {dimension_numbers = #tpu.dot_dimension_numbers<[1], [0], [0], [1], [0, 0, 1, 1], [], []>} : vector<16x128xbf16>, vector<128x32xbf16>, vector<16x32xf32> -> vector<16x32xf32>
    %480 = arith.addf %431, %479 : vector<16x32xf32>
    %481 = vector.shape_cast %269 : vector<32xf32> to vector<1x32xf32>
    %482 = vector.broadcast %481 : vector<1x32xf32> to vector<16x32xf32>
    %483 = arith.addf %480, %482 : vector<16x32xf32>
    %c0_127 = arith.constant 0 : index
    %c0_128 = arith.constant 0 : index
    %484 = vector.load %arg5[%c0_127, %c0_128] : memref<8x128xf32, #tpu.memory_space<vmem>>, vector<8x128xf32>
    %485 = vector.extract_strided_slice %484 {offsets = [0, 0], sizes = [1, 32], strides = [1, 1]} : vector<8x128xf32> to vector<1x32xf32>
    %486 = vector.shape_cast %485 : vector<1x32xf32> to vector<32xf32>
    %487 = vector.extract_strided_slice %484 {offsets = [1, 0], sizes = [1, 32], strides = [1, 1]} : vector<8x128xf32> to vector<1x32xf32>
    %488 = vector.shape_cast %487 : vector<1x32xf32> to vector<32xf32>
    %cst_129 = arith.constant dense<0.000000e+00> : vector<16xf32>
    %489 = vector.multi_reduction <add>, %483, %cst_129 [1] : vector<16x32xf32> to vector<16xf32>
    %490 = vector.shape_cast %489 : vector<16xf32> to vector<16x1xf32>
    %cst_130 = arith.constant 3.200000e+01 : f32
    %491 = vector.broadcast %cst_130 : f32 to vector<16x1xf32>
    %492 = arith.divf %490, %491 : vector<16x1xf32>
    %493 = arith.mulf %483, %483 : vector<16x32xf32>
    %cst_131 = arith.constant dense<0.000000e+00> : vector<16xf32>
    %494 = vector.multi_reduction <add>, %493, %cst_131 [1] : vector<16x32xf32> to vector<16xf32>
    %495 = vector.shape_cast %494 : vector<16xf32> to vector<16x1xf32>
    %cst_132 = arith.constant 3.200000e+01 : f32
    %496 = vector.broadcast %cst_132 : f32 to vector<16x1xf32>
    %497 = arith.divf %495, %496 : vector<16x1xf32>
    %498 = arith.mulf %492, %492 : vector<16x1xf32>
    %499 = arith.subf %497, %498 : vector<16x1xf32>
    %500 = vector.broadcast %492 : vector<16x1xf32> to vector<16x32xf32>
    %501 = arith.subf %483, %500 : vector<16x32xf32>
    %cst_133 = arith.constant 9.99999974E-6 : f32
    %502 = vector.broadcast %cst_133 : f32 to vector<16x1xf32>
    %503 = arith.addf %499, %502 : vector<16x1xf32>
    %504 = math.rsqrt %503 : vector<16x1xf32>
    %505 = vector.broadcast %504 : vector<16x1xf32> to vector<16x32xf32>
    %506 = arith.mulf %501, %505 : vector<16x32xf32>
    %507 = vector.shape_cast %486 : vector<32xf32> to vector<1x32xf32>
    %508 = vector.broadcast %507 : vector<1x32xf32> to vector<16x32xf32>
    %509 = arith.mulf %506, %508 : vector<16x32xf32>
    %510 = vector.shape_cast %488 : vector<32xf32> to vector<1x32xf32>
    %511 = vector.broadcast %510 : vector<1x32xf32> to vector<16x32xf32>
    %512 = arith.addf %509, %511 : vector<16x32xf32>
    %513 = arith.truncf %512 : vector<16x32xf32> to vector<16x32xbf16>
    %c0_134 = arith.constant 0 : index
    %c0_135 = arith.constant 0 : index
    %514 = vector.load %arg10[%c0_134, %c0_135] : memref<32x128xbf16, #tpu.memory_space<vmem>>, vector<32x128xbf16>
    %cst_136 = arith.constant dense<0.000000e+00> : vector<16x128xf32>
    %515 = tpu.matmul %513, %514, %cst_136 {dimension_numbers = #tpu.dot_dimension_numbers<[1], [0], [0], [1], [0, 0, 1, 1], [], []>} : vector<16x32xbf16>, vector<32x128xbf16>, vector<16x128xf32> -> vector<16x128xf32>
    %516 = vector.extract_strided_slice %484 {offsets = [2, 0], sizes = [1, 128], strides = [1, 1]} : vector<8x128xf32> to vector<1x128xf32>
    %517 = vector.shape_cast %516 : vector<1x128xf32> to vector<128xf32>
    %518 = vector.shape_cast %517 : vector<128xf32> to vector<1x128xf32>
    %519 = vector.broadcast %518 : vector<1x128xf32> to vector<16x128xf32>
    %520 = arith.addf %515, %519 : vector<16x128xf32>
    %521 = vector.shape_cast %520 : vector<16x128xf32> to vector<2x8x128xf32>
    %c0_137 = arith.constant 0 : index
    %c0_138 = arith.constant 0 : index
    %c0_139 = arith.constant 0 : index
    %522 = vector.load %arg11[%c0_137, %c0_138, %c0_139] : memref<2x8x128xf32, #tpu.memory_space<vmem>>, vector<2x8x128xf32>
    tpu.vector_store %arg11[%c0_137, %c0_138, %c0_139], %521 {strides = array<i32>} : memref<2x8x128xf32, #tpu.memory_space<vmem>>, vector<2x8x128xf32>,
    return
  }
  func.func @transform_0(%arg0: i32) -> (i32, i32) {
    %c0_i32 = arith.constant 0 : i32
    %c0_i32_0 = arith.constant 0 : i32
    return %arg0, %c0_i32 : i32, i32
  }
  func.func @transform_1(%arg0: i32) -> (i32, i32) {
    %c0_i32 = arith.constant 0 : i32
    %c0_i32_0 = arith.constant 0 : i32
    %c0_i32_1 = arith.constant 0 : i32
    return %c0_i32, %c0_i32_0 : i32, i32
  }
  func.func @transform_2(%arg0: i32) -> (i32, i32) {
    %c0_i32 = arith.constant 0 : i32
    %c0_i32_0 = arith.constant 0 : i32
    %c0_i32_1 = arith.constant 0 : i32
    return %c0_i32, %c0_i32_0 : i32, i32
  }
  func.func @transform_3(%arg0: i32) -> (i32, i32, i32) {
    %c0_i32 = arith.constant 0 : i32
    %c0_i32_0 = arith.constant 0 : i32
    %c0_i32_1 = arith.constant 0 : i32
    %c0_i32_2 = arith.constant 0 : i32
    return %c0_i32, %c0_i32_0, %c0_i32_1 : i32, i32, i32
  }
  func.func @transform_4(%arg0: i32) -> (i32, i32) {
    %c0_i32 = arith.constant 0 : i32
    %c0_i32_0 = arith.constant 0 : i32
    %c0_i32_1 = arith.constant 0 : i32
    return %c0_i32, %c0_i32_0 : i32, i32
  }
  func.func @transform_5(%arg0: i32) -> (i32, i32, i32) {
    %c0_i32 = arith.constant 0 : i32
    %c0_i32_0 = arith.constant 0 : i32
    %c0_i32_1 = arith.constant 0 : i32
    %c0_i32_2 = arith.constant 0 : i32
    return %c0_i32, %c0_i32_0, %c0_i32_1 : i32, i32, i32
  }
  func.func @transform_6(%arg0: i32) -> (i32, i32, i32) {
    %c0_i32 = arith.constant 0 : i32
    %c0_i32_0 = arith.constant 0 : i32
    %c0_i32_1 = arith.constant 0 : i32
    %c0_i32_2 = arith.constant 0 : i32
    return %c0_i32, %c0_i32_0, %c0_i32_1 : i32, i32, i32
  }
  func.func @transform_7(%arg0: i32) -> (i32, i32, i32) {
    %c0_i32 = arith.constant 0 : i32
    %c0_i32_0 = arith.constant 0 : i32
    %c0_i32_1 = arith.constant 0 : i32
    %c0_i32_2 = arith.constant 0 : i32
    return %c0_i32, %c0_i32_0, %c0_i32_1 : i32, i32, i32
  }
  func.func @transform_8(%arg0: i32) -> (i32, i32, i32) {
    %c0_i32 = arith.constant 0 : i32
    %c0_i32_0 = arith.constant 0 : i32
    %c0_i32_1 = arith.constant 0 : i32
    %c0_i32_2 = arith.constant 0 : i32
    return %c0_i32, %c0_i32_0, %c0_i32_1 : i32, i32, i32
  }
  func.func @transform_9(%arg0: i32) -> (i32, i32) {
    %c0_i32 = arith.constant 0 : i32
    %c0_i32_0 = arith.constant 0 : i32
    %c0_i32_1 = arith.constant 0 : i32
    return %c0_i32, %c0_i32_0 : i32, i32
  }
  func.func @transform_10(%arg0: i32) -> (i32, i32, i32) {
    %c0_i32 = arith.constant 0 : i32
    %c0_i32_0 = arith.constant 0 : i32
    %c0_i32_1 = arith.constant 0 : i32
    return %arg0, %c0_i32, %c0_i32_0 : i32, i32, i32
  }
}

</mosaic_0001>

<llo_original>
// kernel: grokk_forward.1
$region0: #{grokk_forward.1}
  #allocation0 [shape = 'u32[]', space=smem, size = 0x4, offset = 0x4, fixed_abs, tag = 'smem constant byte address 0x4 - core index']
  #allocation1 [shape = 'u32[144,128]{1,0:T(1,128)}', space=vmem, size = 0x12000, scoped, tag = 'internal scratch']
  %s0 = inlined_call_operand.vmem [shape: s32[16,1], index: 0, kind: input, shape index: {}]
  %s1 = inlined_call_operand.vmem [shape: bf16[10,32], index: 1, kind: input, shape index: {}]
  %s2 = inlined_call_operand.vmem [shape: f32[8,32], index: 2, kind: input, shape index: {}]
  %s3 = inlined_call_operand.vmem [shape: f32[2,8,128], index: 3, kind: input, shape index: {}]
  %s4 = inlined_call_operand.vmem [shape: f32[8,128], index: 4, kind: input, shape index: {}]
  %s5 = inlined_call_operand.vmem [shape: bf16[2,32,96], index: 5, kind: input, shape index: {}]
  %s6 = inlined_call_operand.vmem [shape: bf16[2,32,32], index: 6, kind: input, shape index: {}]
  %s7 = inlined_call_operand.vmem [shape: bf16[2,32,128], index: 7, kind: input, shape index: {}]
  %s8 = inlined_call_operand.vmem [shape: bf16[2,128,32], index: 8, kind: input, shape index: {}]
  %s9 = inlined_call_operand.vmem [shape: bf16[32,128], index: 9, kind: input, shape index: {}]
  %s10 = inlined_call_operand.hbm [shape: f32[2,8,128], index: 10, kind: output, shape index: {}]
  %s11 = sld [smem:[#allocation0]]
  $region50: #{grokk_forward.1} parent=0
    _
  %s13 = ssub.s32 1, %s11
  %s14 = scalar_select 0, %s13, %s11
  $region1: #{grokk_forward.1} parent=0
    #allocation2 [shape = 'u8[8192]{0}', space=vmem, size = 0x2000, scoped, tag = 'output window, operand 0, single buffered']
    #allocation3 [shape = 's32[1]{0}', space=sflag, size = 0x4, scoped, tag = 'scoped memory for grokk_forward.1']
    %15 = vsyncpa [#allocation3], 0
    // Predicated region
    $region2: #{grokk_forward.1} parent=1 // pred_check
      _
    $region3: #{grokk_forward.1} parent=1 // pred_check_branch
      %17 = sbr.rel (0) target = $region5
    $region4: #{grokk_forward.1} parent=1 // pred_region
      _
    $region5: #{grokk_forward.1} parent=1 // pred_fallthru
      _
    // Predicated region
    $region6: #{grokk_forward.1} parent=1 // pred_check
      _
    $region7: #{grokk_forward.1} parent=1 // pred_check_branch
      %19 = sbr.rel (0) target = $region9
    $region8: #{grokk_forward.1} parent=1 // pred_region
      _
    $region9: #{grokk_forward.1} parent=1 // pred_fallthru
      _
    // Predicated region
    $region10: #{grokk_forward.1} parent=1 // pred_check
      _
    $region11: #{grokk_forward.1} parent=1 // pred_check_branch
      %21 = sbr.rel (0) target = $region13
    $region12: #{grokk_forward.1} parent=1 // pred_region
      _
    $region13: #{grokk_forward.1} parent=1 // pred_fallthru
      _
    // Predicated region
    $region14: #{grokk_forward.1} parent=1 // pred_check
      _
    $region15: #{grokk_forward.1} parent=1 // pred_check_branch
      %23 = sbr.rel (0) target = $region17
    $region16: #{grokk_forward.1} parent=1 // pred_region
      _
    $region17: #{grokk_forward.1} parent=1 // pred_fallthru
      _
    // Predicated region
    $region18: #{grokk_forward.1} parent=1 // pred_check
      _
    $region19: #{grokk_forward.1} parent=1 // pred_check_branch
      %25 = sbr.rel (0) target = $region21
    $region20: #{grokk_forward.1} parent=1 // pred_region
      _
    $region21: #{grokk_forward.1} parent=1 // pred_fallthru
      _
    // Predicated region
    $region22: #{grokk_forward.1} parent=1 // pred_check
      _
    $region23: #{grokk_forward.1} parent=1 // pred_check_branch
      %27 = sbr.rel (0) target = $region25
    $region24: #{grokk_forward.1} parent=1 // pred_region
      _
    $region25: #{grokk_forward.1} parent=1 // pred_fallthru
      _
    // Predicated region
    $region26: #{grokk_forward.1} parent=1 // pred_check
      _
    $region27: #{grokk_forward.1} parent=1 // pred_check_branch
      %29 = sbr.rel (0) target = $region29
    $region28: #{grokk_forward.1} parent=1 // pred_region
      _
    $region29: #{grokk_forward.1} parent=1 // pred_fallthru
      _
    // Predicated region
    $region30: #{grokk_forward.1} parent=1 // pred_check
      _
    $region31: #{grokk_forward.1} parent=1 // pred_check_branch
      %31 = sbr.rel (0) target = $region33
    $region32: #{grokk_forward.1} parent=1 // pred_region
      _
    $region33: #{grokk_forward.1} parent=1 // pred_fallthru
      _
    // Predicated region
    $region34: #{grokk_forward.1} parent=1 // pred_check
      _
    $region35: #{grokk_forward.1} parent=1 // pred_check_branch
      %33 = sbr.rel (0) target = $region37
    $region36: #{grokk_forward.1} parent=1 // pred_region
      _
    $region37: #{grokk_forward.1} parent=1 // pred_fallthru
      _
    // Predicated region
    $region38: #{grokk_forward.1} parent=1 // pred_check
      _
    $region39: #{grokk_forward.1} parent=1 // pred_check_branch
      %35 = sbr.rel (0) target = $region41
    $region40: #{grokk_forward.1} parent=1 // pred_region
      _
    $region41: #{grokk_forward.1} parent=1 // pred_fallthru
      _
    %v37 = vld [vmem:[%s0] sm:$0xff]
    %v38 = vld [vmem:[%s0 + $0x8] sm:$0xff]
    %v39 = vlaneseq
    %v40 = vand.u32 %v39, 127
    %41 = vset.pattern.permute.xlu0 0
    %42 = vperm.xlu0 %41, %v37
    %v43 = vpop.permute.xlu0 %42
    %44 = vset.pattern.permute.xlu0 0
    %45 = vperm.xlu0 %44, %v38
    %v46 = vpop.permute.xlu0 %45
    %vm47 = vcmp.eq.s32.totalorder %v40, %v43
    %vm48 = vcmp.eq.s32.totalorder %v40, %v46
    %v49 = vsel %vm47, 1, 0
    %v50 = vsel %vm48, 1, 0
    %v51 = vcvt.s32.f32 %v49
    %v52 = vcvt.s32.f32 %v50
    %v53 = vpack.c.bf16 %v52, %v51
    %v54 = vld [vmem:[%s1] sm:$0xf]
    %v55 = vld [vmem:[%s1 + $0x4] sm:$0x1]
    %v58 = vunpack.c.l.b16 %v54
    %v59 = vunpack.c.l.b16 %v55
    %v60 = vpack.c.b16 %v59, %v58
    %vm61 = vcmask 80896
    %v63 = vsel %vm61, %v53, 0
    %vm65 = vcmask 1044480
    %v67 = vsel %vm65, %v60, 0
    %69 = vmatprep.subr.bf16.mxu0 0
    %70 = vmatpush1.bf16.msra.mxu0 %v67
    %71 = vmatprep.subr.bf16.mxu0 0
    %72 = vmatpush1.bf16.msra.mxu0 0
    %73 = vmatprep.subr.bf16.mxu0 0
    %74 = vmatpush1.bf16.msra.mxu0 0
    %75 = vmatprep.subr.bf16.mxu0 0
    %76 = vmatpush1.bf16.msra.mxu0 0
    %77 = vmatprep.subr.bf16.mxu0 0
    %78 = vmatpush1.bf16.msra.mxu0 0
    %79 = vmatprep.subr.bf16.mxu0 0
    %80 = vmatpush1.bf16.msra.mxu0 0
    %81 = vmatprep.subr.bf16.mxu0 0
    %82 = vmatpush1.bf16.msra.mxu0 0
    %83 = vmatprep.subr.bf16.mxu0 0
    %84 = vmatpush1.bf16.msra.mxu0 0
    %85 = vmatprep.subr.bf16.mxu0 0
    %86 = vmatpush1.bf16.msra.mxu0 0
    %87 = vmatprep.subr.bf16.mxu0 0
    %88 = vmatpush1.bf16.msra.mxu0 0
    %89 = vmatprep.subr.bf16.mxu0 0
    %90 = vmatpush1.bf16.msra.mxu0 0
    %91 = vmatprep.subr.bf16.mxu0 0
    %92 = vmatpush1.bf16.msra.mxu0 0
    %93 = vmatprep.subr.bf16.mxu0 0
    %94 = vmatpush1.bf16.msra.mxu0 0
    %95 = vmatprep.subr.bf16.mxu0 0
    %96 = vmatpush1.bf16.msra.mxu0 0
    %97 = vmatprep.subr.bf16.mxu0 0
    %98 = vmatpush1.bf16.msra.mxu0 0
    %99 = vmatprep.subr.bf16.mxu0 0
    %100 = vmatpush1.bf16.msra.mxu0 0
    %101 = vmatprep.mubr.bf16.mxu0 0
    %102 = vmatmul.mubr.bf16.gmra.mrb[0].mxu0 %v63
    %v103 = vpop.f32.mrb[0].mxu0
    %v104 = vadd.f32 0.0, %v103
    %v105 = vpop.f32.mrb[0].mxu0
    %v106 = vpop.f32.mrb[0].mxu0
    %v107 = vadd.f32 0.0, %v106
    %v108 = vpop.f32.mrb[0].mxu0
    %109 = vdwg.mxu0
    %v110 = vmul.f32 %v104, 5.656854
    %v111 = vmul.f32 %v107, 5.656854
    %v112 = vld [vmem:[%s2] sm:$0xff]
    %v113 = vadd.f32 %v110, %v112
    %v114 = vadd.f32 %v111, %v112
    %v115 = vlaneseq
    %v116 = vshrl.u32 %v115, 7
    %vm117 = vcmp.ge.s32.totalorder %v116, %v40
    %v118 = vld [vmem:[%s3] sm:$0xff]
    %vm119 = vcmask 261120
    %v120 = vsel %vm119, %v113, 0.0
    %121 = vadd.xlane.f32.xlu0 %v120
    %v122 = vpop.xlane.xlu0 %121
    %v123 = vsel %vm119, %v114, 0.0
    %124 = vadd.xlane.f32.xlu0 %v123
    %v125 = vpop.xlane.xlu0 %124
    %v126 = vrcp.pop 32.0
    %v127 = vmul.f32 %v122, %v126
    %v128 = vmul.f32 %v125, %v126
    %v129 = vmul.f32 %v113, %v113
    %v130 = vmul.f32 %v114, %v114
    %v131 = vsel %vm119, %v129, 0.0
    %132 = vadd.xlane.f32.xlu0 %v131
    %v133 = vpop.xlane.xlu0 %132
    %v134 = vsel %vm119, %v130, 0.0
    %135 = vadd.xlane.f32.xlu0 %v134
    %v136 = vpop.xlane.xlu0 %135
    %v137 = vmul.f32 %v133, %v126
    %v138 = vmul.f32 %v136, %v126
    %v139 = vmul.f32 %v127, %v127
    %v140 = vmul.f32 %v128, %v128
    %v141 = vsub.f32 %v137, %v139
    %v142 = vsub.f32 %v138, %v140
    %v143 = vsub.f32 %v113, %v127
    %v144 = vsub.f32 %v114, %v128
    %v145 = vadd.f32 %v141, 1e-05
    %v146 = vadd.f32 %v142, 1e-05
    %v147 = vrsqrt.pop %v145
    %v148 = vrsqrt.pop %v146
    %v149 = vmul.f32 %v143, %v147
    %v150 = vmul.f32 %v144, %v148
    %v151 = vlaneseq
    %v152 = vshrl.u32 %v151, 7
    %v153 = vsub.s32 0, %v152
    %v154 = vrot.slane %v118, %v153
    %v155 = vmul.f32 %v149, %v154
    %v156 = vmul.f32 %v150, %v154
    %v157 = vlaneseq
    %v158 = vshrl.u32 %v157, 7
    %v159 = vsub.s32 1, %v158
    %v160 = vrot.slane %v118, %v159
    %v161 = vadd.f32 %v155, %v160
    %v162 = vadd.f32 %v156, %v160
    %v163 = vpack.c.bf16 %v162, %v161
    %v164 = vld [vmem:[%s5] sm:$0xf]
    %v165 = vld [vmem:[%s5 + $0x4] sm:$0xf]
    %v166 = vld [vmem:[%s5 + $0x8] sm:$0xf]
    %v167 = vld [vmem:[%s5 + $0xc] sm:$0xf]
    %v168 = vlaneseq
    %v169 = vshrl.u32 %v168, 7
    %v170 = vsub.s32 4, %v169
    %v171 = vrot.slane %v118, %v170
    %v176 = vunpack.c.l.b16 %v164
    %v177 = vunpack.c.l.b16 %v165
    %v178 = vunpack.c.l.b16 %v166
    %v179 = vunpack.c.l.b16 %v167
    %v180 = vpack.c.b16 %v177, %v176
    %v181 = vpack.c.b16 %v179, %v178
    %v185 = vsel %vm119, %v163, 0
    %187 = vmatprep.subr.bf16.mxu0 0
    %188 = vmatpush1.bf16.msra.mxu0 %v180
    %189 = vmatprep.subr.bf16.mxu0 0
    %190 = vmatpush1.bf16.msra.mxu0 %v181
    %191 = vmatprep.subr.bf16.mxu0 0
    %192 = vmatpush1.bf16.msra.mxu0 0
    %193 = vmatprep.subr.bf16.mxu0 0
    %194 = vmatpush1.bf16.msra.mxu0 0
    %195 = vmatprep.subr.bf16.mxu0 0
    %196 = vmatpush1.bf16.msra.mxu0 0
    %197 = vmatprep.subr.bf16.mxu0 0
    %198 = vmatpush1.bf16.msra.mxu0 0
    %199 = vmatprep.subr.bf16.mxu0 0
    %200 = vmatpush1.bf16.msra.mxu0 0
    %201 = vmatprep.subr.bf16.mxu0 0
    %202 = vmatpush1.bf16.msra.mxu0 0
    %203 = vmatprep.subr.bf16.mxu0 0
    %204 = vmatpush1.bf16.msra.mxu0 0
    %205 = vmatprep.subr.bf16.mxu0 0
    %206 = vmatpush1.bf16.msra.mxu0 0
    %207 = vmatprep.subr.bf16.mxu0 0
    %208 = vmatpush1.bf16.msra.mxu0 0
    %209 = vmatprep.subr.bf16.mxu0 0
    %210 = vmatpush1.bf16.msra.mxu0 0
    %211 = vmatprep.subr.bf16.mxu0 0
    %212 = vmatpush1.bf16.msra.mxu0 0
    %213 = vmatprep.subr.bf16.mxu0 0
    %214 = vmatpush1.bf16.msra.mxu0 0
    %215 = vmatprep.subr.bf16.mxu0 0
    %216 = vmatpush1.bf16.msra.mxu0 0
    %217 = vmatprep.subr.bf16.mxu0 0
    %218 = vmatpush1.bf16.msra.mxu0 0
    %219 = vmatprep.mubr.bf16.mxu0 0
    %220 = vmatmul.mubr.bf16.gmra.mrb[0].mxu0 %v185
    %v221 = vpop.f32.mrb[0].mxu0
    %v222 = vadd.f32 %v171, %v221
    %v223 = vpop.f32.mrb[0].mxu0
    %v224 = vpop.f32.mrb[0].mxu0
    %v225 = vadd.f32 %v171, %v224
    %v226 = vpop.f32.mrb[0].mxu0
    %227 = vdwg.mxu0
    %v228 = vld [vmem:[%s6] sm:$0xf]
    %v229 = vld [vmem:[%s6 + $0x4] sm:$0xf]
    %v230 = vld [vmem:[%s6 + $0x8] sm:$0xf]
    %v231 = vld [vmem:[%s6 + $0xc] sm:$0xf]
    %v232 = vpack.c.bf16 %v222, %v222
    %v233 = vpack.c.bf16 %v225, %v225
    %235 = vrot.lane.b32.xlu0 %v232, 96
    %v236 = vpop.permute.xlu0 %235
    %vm237 = vcmask 64512
    %v239 = vsel %vm237, %v232, 0
    %v242 = vsel %vm237, %v236, 0
    %244 = vmatprep.subr.bf16.mxu0 0
    %245 = vmatpush1.bf16.xpose.msra.mxu0 %v242
    %246 = vmatprep.subr.bf16.mxu0 0
    %247 = vmatpush1.bf16.xpose.msra.mxu0 0
    %248 = vmatprep.subr.bf16.mxu0 0
    %249 = vmatpush1.bf16.xpose.msra.mxu0 0
    %250 = vmatprep.subr.bf16.mxu0 0
    %251 = vmatpush1.bf16.xpose.msra.mxu0 0
    %252 = vmatprep.subr.bf16.mxu0 0
    %253 = vmatpush1.bf16.xpose.msra.mxu0 0
    %254 = vmatprep.subr.bf16.mxu0 0
    %255 = vmatpush1.bf16.xpose.msra.mxu0 0
    %256 = vmatprep.subr.bf16.mxu0 0
    %257 = vmatpush1.bf16.xpose.msra.mxu0 0
    %258 = vmatprep.subr.bf16.mxu0 0
    %259 = vmatpush1.bf16.xpose.msra.mxu0 0
    %260 = vmatprep.subr.bf16.mxu0 0
    %261 = vmatpush1.bf16.xpose.msra.mxu0 0
    %262 = vmatprep.subr.bf16.mxu0 0
    %263 = vmatpush1.bf16.xpose.msra.mxu0 0
    %264 = vmatprep.subr.bf16.mxu0 0
    %265 = vmatpush1.bf16.xpose.msra.mxu0 0
    %266 = vmatprep.subr.bf16.mxu0 0
    %267 = vmatpush1.bf16.xpose.msra.mxu0 0
    %268 = vmatprep.subr.bf16.mxu0 0
    %269 = vmatpush1.bf16.xpose.msra.mxu0 0
    %270 = vmatprep.subr.bf16.mxu0 0
    %271 = vmatpush1.bf16.xpose.msra.mxu0 0
    %272 = vmatprep.subr.bf16.mxu0 0
    %273 = vmatpush1.bf16.xpose.msra.mxu0 0
    %274 = vmatprep.subr.bf16.mxu0 0
    %275 = vmatpush1.bf16.xpose.msra.mxu0 0
    %276 = vmatprep.mubr.bf16.mxu0 0
    %277 = vmatmul.mubr.bf16.gmra.mrb[0].mxu0 %v239
    %v278 = vpop.f32.mrb[0].mxu0
    %v279 = vadd.f32 0.0, %v278
    %v280 = vpop.f32.mrb[0].mxu0
    %v281 = vpop.f32.mrb[0].mxu0
    %v282 = vpop.f32.mrb[0].mxu0
    %283 = vdwg.mxu0
    %285 = vrot.lane.b32.xlu0 %v233, 96
    %v286 = vpop.permute.xlu0 %285
    %v288 = vsel %vm237, %v233, 0
    %v291 = vsel %vm237, %v286, 0
    %293 = vmatprep.subr.bf16.mxu0 0
    %294 = vmatpush1.bf16.xpose.msra.mxu0 %v291
    %295 = vmatprep.subr.bf16.mxu0 0
    %296 = vmatpush1.bf16.xpose.msra.mxu0 0
    %297 = vmatprep.subr.bf16.mxu0 0
    %298 = vmatpush1.bf16.xpose.msra.mxu0 0
    %299 = vmatprep.subr.bf16.mxu0 0
    %300 = vmatpush1.bf16.xpose.msra.mxu0 0
    %301 = vmatprep.subr.bf16.mxu0 0
    %302 = vmatpush1.bf16.xpose.msra.mxu0 0
    %303 = vmatprep.subr.bf16.mxu0 0
    %304 = vmatpush1.bf16.xpose.msra.mxu0 0
    %305 = vmatprep.subr.bf16.mxu0 0
    %306 = vmatpush1.bf16.xpose.msra.mxu0 0
    %307 = vmatprep.subr.bf16.mxu0 0
    %308 = vmatpush1.bf16.xpose.msra.mxu0 0
    %309 = vmatprep.subr.bf16.mxu0 0
    %310 = vmatpush1.bf16.xpose.msra.mxu0 0
    %311 = vmatprep.subr.bf16.mxu0 0
    %312 = vmatpush1.bf16.xpose.msra.mxu0 0
    %313 = vmatprep.subr.bf16.mxu0 0
    %314 = vmatpush1.bf16.xpose.msra.mxu0 0
    %315 = vmatprep.subr.bf16.mxu0 0
    %316 = vmatpush1.bf16.xpose.msra.mxu0 0
    %317 = vmatprep.subr.bf16.mxu0 0
    %318 = vmatpush1.bf16.xpose.msra.mxu0 0
    %319 = vmatprep.subr.bf16.mxu0 0
    %320 = vmatpush1.bf16.xpose.msra.mxu0 0
    %321 = vmatprep.subr.bf16.mxu0 0
    %322 = vmatpush1.bf16.xpose.msra.mxu0 0
    %323 = vmatprep.subr.bf16.mxu0 0
    %324 = vmatpush1.bf16.xpose.msra.mxu0 0
    %325 = vmatprep.mubr.bf16.mxu0 0
    %326 = vmatmul.mubr.bf16.gmra.mrb[0].mxu0 %v288
    %v327 = vpop.f32.mrb[0].mxu0
    %v328 = vadd.f32 0.0, %v327
    %v329 = vpop.f32.mrb[0].mxu0
    %v330 = vpop.f32.mrb[0].mxu0
    %v331 = vpop.f32.mrb[0].mxu0
    %332 = vdwg.mxu0
    %v333 = vmul.f32 %v279, 0.35355338
    %v334 = vmul.f32 %v328, 0.35355338
    %v335 = vsel %vm117, %v333, -1e+09
    %v336 = vsel %vm117, %v334, -1e+09
    %v337 = vsel %vm237, %v335, -inf
    %338 = vmax.xlane.f32.xlu0 %v337
    %v339 = vpop.xlane.xlu0 %338
    %v340 = vsel %vm237, %v336, -inf
    %341 = vmax.xlane.f32.xlu0 %v340
    %v342 = vpop.xlane.xlu0 %341
    %v343 = vsub.f32 %v335, %v339
    %v344 = vsub.f32 %v336, %v342
    %v345 = vmul.f32 %v343, 1.442695
    %v346 = vpow.pop %v345
    %v347 = vmul.f32 %v344, 1.442695
    %v348 = vpow.pop %v347
    %v349 = vsel %vm237, %v346, 0.0
    %350 = vadd.xlane.f32.xlu0 %v349
    %v351 = vpop.xlane.xlu0 %350
    %v352 = vsel %vm237, %v348, 0.0
    %353 = vadd.xlane.f32.xlu0 %v352
    %v354 = vpop.xlane.xlu0 %353
    %v355 = vrcp.pop %v351
    %v356 = vrcp.pop %v354
    %v357 = vmul.f32 %v346, %v355
    %v358 = vmul.f32 %v348, %v356
    %v359 = vpack.c.bf16 %v357, %v357
    %v360 = vpack.c.bf16 %v358, %v358
    %361 = vrot.lane.b32.xlu0 %v232, 64
    %v362 = vpop.permute.xlu0 %361
    %v364 = vsel %vm237, %v359, 0
    %vm366 = vcmask 1043456
    %v368 = vsel %vm366, %v362, 0
    %370 = vmatprep.subr.bf16.mxu0 0
    %371 = vmatpush1.bf16.msra.mxu0 %v368
    %372 = vmatprep.subr.bf16.mxu0 0
    %373 = vmatpush1.bf16.msra.mxu0 0
    %374 = vmatprep.subr.bf16.mxu0 0
    %375 = vmatpush1.bf16.msra.mxu0 0
    %376 = vmatprep.subr.bf16.mxu0 0
    %377 = vmatpush1.bf16.msra.mxu0 0
    %378 = vmatprep.subr.bf16.mxu0 0
    %379 = vmatpush1.bf16.msra.mxu0 0
    %380 = vmatprep.subr.bf16.mxu0 0
    %381 = vmatpush1.bf16.msra.mxu0 0
    %382 = vmatprep.subr.bf16.mxu0 0
    %383 = vmatpush1.bf16.msra.mxu0 0
    %384 = vmatprep.subr.bf16.mxu0 0
    %385 = vmatpush1.bf16.msra.mxu0 0
    %386 = vmatprep.subr.bf16.mxu0 0
    %387 = vmatpush1.bf16.msra.mxu0 0
    %388 = vmatprep.subr.bf16.mxu0 0
    %389 = vmatpush1.bf16.msra.mxu0 0
    %390 = vmatprep.subr.bf16.mxu0 0
    %391 = vmatpush1.bf16.msra.mxu0 0
    %392 = vmatprep.subr.bf16.mxu0 0
    %393 = vmatpush1.bf16.msra.mxu0 0
    %394 = vmatprep.subr.bf16.mxu0 0
    %395 = vmatpush1.bf16.msra.mxu0 0
    %396 = vmatprep.subr.bf16.mxu0 0
    %397 = vmatpush1.bf16.msra.mxu0 0
    %398 = vmatprep.subr.bf16.mxu0 0
    %399 = vmatpush1.bf16.msra.mxu0 0
    %400 = vmatprep.subr.bf16.mxu0 0
    %401 = vmatpush1.bf16.msra.mxu0 0
    %402 = vmatprep.mubr.bf16.mxu0 0
    %403 = vmatmul.mubr.bf16.gmra.mrb[0].mxu0 %v364
    %v404 = vpop.f32.mrb[0].mxu0
    %v405 = vadd.f32 0.0, %v404
    %v406 = vpop.f32.mrb[0].mxu0
    %v407 = vpop.f32.mrb[0].mxu0
    %v408 = vpop.f32.mrb[0].mxu0
    %409 = vdwg.mxu0
    %410 = vrot.lane.b32.xlu0 %v233, 64
    %v411 = vpop.permute.xlu0 %410
    %v413 = vsel %vm237, %v360, 0
    %v416 = vsel %vm366, %v411, 0
    %418 = vmatprep.subr.bf16.mxu0 0
    %419 = vmatpush1.bf16.msra.mxu0 %v416
    %420 = vmatprep.subr.bf16.mxu0 0
    %421 = vmatpush1.bf16.msra.mxu0 0
    %422 = vmatprep.subr.bf16.mxu0 0
    %423 = vmatpush1.bf16.msra.mxu0 0
    %424 = vmatprep.subr.bf16.mxu0 0
    %425 = vmatpush1.bf16.msra.mxu0 0
    %426 = vmatprep.subr.bf16.mxu0 0
    %427 = vmatpush1.bf16.msra.mxu0 0
    %428 = vmatprep.subr.bf16.mxu0 0
    %429 = vmatpush1.bf16.msra.mxu0 0
    %430 = vmatprep.subr.bf16.mxu0 0
    %431 = vmatpush1.bf16.msra.mxu0 0
    %432 = vmatprep.subr.bf16.mxu0 0
    %433 = vmatpush1.bf16.msra.mxu0 0
    %434 = vmatprep.subr.bf16.mxu0 0
    %435 = vmatpush1.bf16.msra.mxu0 0
    %436 = vmatprep.subr.bf16.mxu0 0
    %437 = vmatpush1.bf16.msra.mxu0 0
    %438 = vmatprep.subr.bf16.mxu0 0
    %439 = vmatpush1.bf16.msra.mxu0 0
    %440 = vmatprep.subr.bf16.mxu0 0
    %441 = vmatpush1.bf16.msra.mxu0 0
    %442 = vmatprep.subr.bf16.mxu0 0
    %443 = vmatpush1.bf16.msra.mxu0 0
    %444 = vmatprep.subr.bf16.mxu0 0
    %445 = vmatpush1.bf16.msra.mxu0 0
    %446 = vmatprep.subr.bf16.mxu0 0
    %447 = vmatpush1.bf16.msra.mxu0 0
    %448 = vmatprep.subr.bf16.mxu0 0
    %449 = vmatpush1.bf16.msra.mxu0 0
    %450 = vmatprep.mubr.bf16.mxu0 0
    %451 = vmatmul.mubr.bf16.gmra.mrb[0].mxu0 %v413
    %v452 = vpop.f32.mrb[0].mxu0
    %v453 = vadd.f32 0.0, %v452
    %v454 = vpop.f32.mrb[0].mxu0
    %v455 = vpop.f32.mrb[0].mxu0
    %v456 = vpop.f32.mrb[0].mxu0
    %457 = vdwg.mxu0
    %v458 = vpack.c.bf16 %v453, %v405
    %459 = vrot.lane.b32.xlu0 %v232, 120
    %v460 = vpop.permute.xlu0 %459
    %461 = vrot.lane.b32.xlu0 %v232, 88
    %v462 = vpop.permute.xlu0 %461
    %v464 = vsel %vm237, %v460, 0
    %v467 = vsel %vm237, %v462, 0
    %469 = vmatprep.subr.bf16.mxu0 0
    %470 = vmatpush1.bf16.xpose.msra.mxu0 %v467
    %471 = vmatprep.subr.bf16.mxu0 0
    %472 = vmatpush1.bf16.xpose.msra.mxu0 0
    %473 = vmatprep.subr.bf16.mxu0 0
    %474 = vmatpush1.bf16.xpose.msra.mxu0 0
    %475 = vmatprep.subr.bf16.mxu0 0
    %476 = vmatpush1.bf16.xpose.msra.mxu0 0
    %477 = vmatprep.subr.bf16.mxu0 0
    %478 = vmatpush1.bf16.xpose.msra.mxu0 0
    %479 = vmatprep.subr.bf16.mxu0 0
    %480 = vmatpush1.bf16.xpose.msra.mxu0 0
    %481 = vmatprep.subr.bf16.mxu0 0
    %482 = vmatpush1.bf16.xpose.msra.mxu0 0
    %483 = vmatprep.subr.bf16.mxu0 0
    %484 = vmatpush1.bf16.xpose.msra.mxu0 0
    %485 = vmatprep.subr.bf16.mxu0 0
    %486 = vmatpush1.bf16.xpose.msra.mxu0 0
    %487 = vmatprep.subr.bf16.mxu0 0
    %488 = vmatpush1.bf16.xpose.msra.mxu0 0
    %489 = vmatprep.subr.bf16.mxu0 0
    %490 = vmatpush1.bf16.xpose.msra.mxu0 0
    %491 = vmatprep.subr.bf16.mxu0 0
    %492 = vmatpush1.bf16.xpose.msra.mxu0 0
    %493 = vmatprep.subr.bf16.mxu0 0
    %494 = vmatpush1.bf16.xpose.msra.mxu0 0
    %495 = vmatprep.subr.bf16.mxu0 0
    %496 = vmatpush1.bf16.xpose.msra.mxu0 0
    %497 = vmatprep.subr.bf16.mxu0 0
    %498 = vmatpush1.bf16.xpose.msra.mxu0 0
    %499 = vmatprep.subr.bf16.mxu0 0
    %500 = vmatpush1.bf16.xpose.msra.mxu0 0
    %501 = vmatprep.mubr.bf16.mxu0 0
    %502 = vmatmul.mubr.bf16.gmra.mrb[0].mxu0 %v464
    %v503 = vpop.f32.mrb[0].mxu0
    %v504 = vadd.f32 0.0, %v503
    %v505 = vpop.f32.mrb[0].mxu0
    %v506 = vpop.f32.mrb[0].mxu0
    %v507 = vpop.f32.mrb[0].mxu0
    %508 = vdwg.mxu0
    %509 = vrot.lane.b32.xlu0 %v233, 120
    %v510 = vpop.permute.xlu0 %509
    %511 = vrot.lane.b32.xlu0 %v233, 88
    %v512 = vpop.permute.xlu0 %511
    %v514 = vsel %vm237, %v510, 0
    %v517 = vsel %vm237, %v512, 0
    %519 = vmatprep.subr.bf16.mxu0 0
    %520 = vmatpush1.bf16.xpose.msra.mxu0 %v517
    %521 = vmatprep.subr.bf16.mxu0 0
    %522 = vmatpush1.bf16.xpose.msra.mxu0 0
    %523 = vmatprep.subr.bf16.mxu0 0
    %524 = vmatpush1.bf16.xpose.msra.mxu0 0
    %525 = vmatprep.subr.bf16.mxu0 0
    %526 = vmatpush1.bf16.xpose.msra.mxu0 0
    %527 = vmatprep.subr.bf16.mxu0 0
    %528 = vmatpush1.bf16.xpose.msra.mxu0 0
    %529 = vmatprep.subr.bf16.mxu0 0
    %530 = vmatpush1.bf16.xpose.msra.mxu0 0
    %531 = vmatprep.subr.bf16.mxu0 0
    %532 = vmatpush1.bf16.xpose.msra.mxu0 0
    %533 = vmatprep.subr.bf16.mxu0 0
    %534 = vmatpush1.bf16.xpose.msra.mxu0 0
    %535 = vmatprep.subr.bf16.mxu0 0
    %536 = vmatpush1.bf16.xpose.msra.mxu0 0
    %537 = vmatprep.subr.bf16.mxu0 0
    %538 = vmatpush1.bf16.xpose.msra.mxu0 0
    %539 = vmatprep.subr.bf16.mxu0 0
    %540 = vmatpush1.bf16.xpose.msra.mxu0 0
    %541 = vmatprep.subr.bf16.mxu0 0
    %542 = vmatpush1.bf16.xpose.msra.mxu0 0
    %543 = vmatprep.subr.bf16.mxu0 0
    %544 = vmatpush1.bf16.xpose.msra.mxu0 0
    %545 = vmatprep.subr.bf16.mxu0 0
    %546 = vmatpush1.bf16.xpose.msra.mxu0 0
    %547 = vmatprep.subr.bf16.mxu0 0
    %548 = vmatpush1.bf16.xpose.msra.mxu0 0
    %549 = vmatprep.subr.bf16.mxu0 0
    %550 = vmatpush1.bf16.xpose.msra.mxu0 0
    %551 = vmatprep.mubr.bf16.mxu0 0
    %552 = vmatmul.mubr.bf16.gmra.mrb[0].mxu0 %v514
    %v553 = vpop.f32.mrb[0].mxu0
    %v554 = vadd.f32 0.0, %v553
    %v555 = vpop.f32.mrb[0].mxu0
    %v556 = vpop.f32.mrb[0].mxu0
    %v557 = vpop.f32.mrb[0].mxu0
    %558 = vdwg.mxu0
    %v559 = vmul.f32 %v504, 0.35355338
    %v560 = vmul.f32 %v554, 0.35355338
    %v561 = vsel %vm117, %v559, -1e+09
    %v562 = vsel %vm117, %v560, -1e+09
    %v563 = vsel %vm237, %v561, -inf
    %564 = vmax.xlane.f32.xlu0 %v563
    %v565 = vpop.xlane.xlu0 %564
    %v566 = vsel %vm237, %v562, -inf
    %567 = vmax.xlane.f32.xlu0 %v566
    %v568 = vpop.xlane.xlu0 %567
    %v569 = vsub.f32 %v561, %v565
    %v570 = vsub.f32 %v562, %v568
    %v571 = vmul.f32 %v569, 1.442695
    %v572 = vpow.pop %v571
    %v573 = vmul.f32 %v570, 1.442695
    %v574 = vpow.pop %v573
    %v575 = vsel %vm237, %v572, 0.0
    %576 = vadd.xlane.f32.xlu0 %v575
    %v577 = vpop.xlane.xlu0 %576
    %v578 = vsel %vm237, %v574, 0.0
    %579 = vadd.xlane.f32.xlu0 %v578
    %v580 = vpop.xlane.xlu0 %579
    %v581 = vrcp.pop %v577
    %v582 = vrcp.pop %v580
    %v583 = vmul.f32 %v572, %v581
    %v584 = vmul.f32 %v574, %v582
    %v585 = vpack.c.bf16 %v583, %v583
    %v586 = vpack.c.bf16 %v584, %v584
    %587 = vrot.lane.b32.xlu0 %v232, 56
    %v588 = vpop.permute.xlu0 %587
    %v590 = vsel %vm237, %v585, 0
    %v593 = vsel %vm366, %v588, 0
    %595 = vmatprep.subr.bf16.mxu0 0
    %596 = vmatpush1.bf16.msra.mxu0 %v593
    %597 = vmatprep.subr.bf16.mxu0 0
    %598 = vmatpush1.bf16.msra.mxu0 0
    %599 = vmatprep.subr.bf16.mxu0 0
    %600 = vmatpush1.bf16.msra.mxu0 0
    %601 = vmatprep.subr.bf16.mxu0 0
    %602 = vmatpush1.bf16.msra.mxu0 0
    %603 = vmatprep.subr.bf16.mxu0 0
    %604 = vmatpush1.bf16.msra.mxu0 0
    %605 = vmatprep.subr.bf16.mxu0 0
    %606 = vmatpush1.bf16.msra.mxu0 0
    %607 = vmatprep.subr.bf16.mxu0 0
    %608 = vmatpush1.bf16.msra.mxu0 0
    %609 = vmatprep.subr.bf16.mxu0 0
    %610 = vmatpush1.bf16.msra.mxu0 0
    %611 = vmatprep.subr.bf16.mxu0 0
    %612 = vmatpush1.bf16.msra.mxu0 0
    %613 = vmatprep.subr.bf16.mxu0 0
    %614 = vmatpush1.bf16.msra.mxu0 0
    %615 = vmatprep.subr.bf16.mxu0 0
    %616 = vmatpush1.bf16.msra.mxu0 0
    %617 = vmatprep.subr.bf16.mxu0 0
    %618 = vmatpush1.bf16.msra.mxu0 0
    %619 = vmatprep.subr.bf16.mxu0 0
    %620 = vmatpush1.bf16.msra.mxu0 0
    %621 = vmatprep.subr.bf16.mxu0 0
    %622 = vmatpush1.bf16.msra.mxu0 0
    %623 = vmatprep.subr.bf16.mxu0 0
    %624 = vmatpush1.bf16.msra.mxu0 0
    %625 = vmatprep.subr.bf16.mxu0 0
    %626 = vmatpush1.bf16.msra.mxu0 0
    %627 = vmatprep.mubr.bf16.mxu0 0
    %628 = vmatmul.mubr.bf16.gmra.mrb[0].mxu0 %v590
    %v629 = vpop.f32.mrb[0].mxu0
    %v630 = vadd.f32 0.0, %v629
    %v631 = vpop.f32.mrb[0].mxu0
    %v632 = vpop.f32.mrb[0].mxu0
    %v633 = vpop.f32.mrb[0].mxu0
    %634 = vdwg.mxu0
    %635 = vrot.lane.b32.xlu0 %v233, 56
    %v636 = vpop.permute.xlu0 %635
    %v638 = vsel %vm237, %v586, 0
    %v641 = vsel %vm366, %v636, 0
    %643 = vmatprep.subr.bf16.mxu0 0
    %644 = vmatpush1.bf16.msra.mxu0 %v641
    %645 = vmatprep.subr.bf16.mxu0 0
    %646 = vmatpush1.bf16.msra.mxu0 0
    %647 = vmatprep.subr.bf16.mxu0 0
    %648 = vmatpush1.bf16.msra.mxu0 0
    %649 = vmatprep.subr.bf16.mxu0 0
    %650 = vmatpush1.bf16.msra.mxu0 0
    %651 = vmatprep.subr.bf16.mxu0 0
    %652 = vmatpush1.bf16.msra.mxu0 0
    %653 = vmatprep.subr.bf16.mxu0 0
    %654 = vmatpush1.bf16.msra.mxu0 0
    %655 = vmatprep.subr.bf16.mxu0 0
    %656 = vmatpush1.bf16.msra.mxu0 0
    %657 = vmatprep.subr.bf16.mxu0 0
    %658 = vmatpush1.bf16.msra.mxu0 0
    %659 = vmatprep.subr.bf16.mxu0 0
    %660 = vmatpush1.bf16.msra.mxu0 0
    %661 = vmatprep.subr.bf16.mxu0 0
    %662 = vmatpush1.bf16.msra.mxu0 0
    %663 = vmatprep.subr.bf16.mxu0 0
    %664 = vmatpush1.bf16.msra.mxu0 0
    %665 = vmatprep.subr.bf16.mxu0 0
    %666 = vmatpush1.bf16.msra.mxu0 0
    %667 = vmatprep.subr.bf16.mxu0 0
    %668 = vmatpush1.bf16.msra.mxu0 0
    %669 = vmatprep.subr.bf16.mxu0 0
    %670 = vmatpush1.bf16.msra.mxu0 0
    %671 = vmatprep.subr.bf16.mxu0 0
    %672 = vmatpush1.bf16.msra.mxu0 0
    %673 = vmatprep.subr.bf16.mxu0 0
    %674 = vmatpush1.bf16.msra.mxu0 0
    %675 = vmatprep.mubr.bf16.mxu0 0
    %676 = vmatmul.mubr.bf16.gmra.mrb[0].mxu0 %v638
    %v677 = vpop.f32.mrb[0].mxu0
    %v678 = vadd.f32 0.0, %v677
    %v679 = vpop.f32.mrb[0].mxu0
    %v680 = vpop.f32.mrb[0].mxu0
    %v681 = vpop.f32.mrb[0].mxu0
    %682 = vdwg.mxu0
    %v683 = vpack.c.bf16 %v678, %v630
    %v685 = vsel %vm237, %v683, 0
    %v688 = vsel %vm366, %v229, 0
    %690 = vmatprep.subr.bf16.mxu0 0
    %691 = vmatpush1.bf16.msra.mxu0 %v688
    %692 = vmatprep.subr.bf16.mxu0 0
    %693 = vmatpush1.bf16.msra.mxu0 0
    %694 = vmatprep.subr.bf16.mxu0 0
    %695 = vmatpush1.bf16.msra.mxu0 0
    %696 = vmatprep.subr.bf16.mxu0 0
    %697 = vmatpush1.bf16.msra.mxu0 0
    %698 = vmatprep.subr.bf16.mxu0 0
    %699 = vmatpush1.bf16.msra.mxu0 0
    %700 = vmatprep.subr.bf16.mxu0 0
    %701 = vmatpush1.bf16.msra.mxu0 0
    %702 = vmatprep.subr.bf16.mxu0 0
    %703 = vmatpush1.bf16.msra.mxu0 0
    %704 = vmatprep.subr.bf16.mxu0 0
    %705 = vmatpush1.bf16.msra.mxu0 0
    %706 = vmatprep.subr.bf16.mxu0 0
    %707 = vmatpush1.bf16.msra.mxu0 0
    %708 = vmatprep.subr.bf16.mxu0 0
    %709 = vmatpush1.bf16.msra.mxu0 0
    %710 = vmatprep.subr.bf16.mxu0 0
    %711 = vmatpush1.bf16.msra.mxu0 0
    %712 = vmatprep.subr.bf16.mxu0 0
    %713 = vmatpush1.bf16.msra.mxu0 0
    %714 = vmatprep.subr.bf16.mxu0 0
    %715 = vmatpush1.bf16.msra.mxu0 0
    %716 = vmatprep.subr.bf16.mxu0 0
    %717 = vmatpush1.bf16.msra.mxu0 0
    %718 = vmatprep.subr.bf16.mxu0 0
    %719 = vmatpush1.bf16.msra.mxu0 0
    %720 = vmatprep.subr.bf16.mxu0 0
    %721 = vmatpush1.bf16.msra.mxu0 0
    %722 = vmatprep.mubr.bf16.mxu0 0
    %723 = vmatmul.mubr.bf16.gmra.mrb[0].mxu0 %v685
    %v724 = vpop.f32.mrb[0].mxu0
    %v725 = vadd.f32 0.0, %v724
    %v726 = vpop.f32.mrb[0].mxu0
    %v727 = vpop.f32.mrb[0].mxu0
    %v728 = vadd.f32 0.0, %v727
    %v729 = vpop.f32.mrb[0].mxu0
    %730 = vdwg.mxu0
    %v732 = vsel %vm237, %v458, 0
    %v735 = vsel %vm366, %v228, 0
    %737 = vmatprep.subr.bf16.mxu0 0
    %738 = vmatpush1.bf16.msra.mxu0 %v735
    %739 = vmatprep.subr.bf16.mxu0 0
    %740 = vmatpush1.bf16.msra.mxu0 0
    %741 = vmatprep.subr.bf16.mxu0 0
    %742 = vmatpush1.bf16.msra.mxu0 0
    %743 = vmatprep.subr.bf16.mxu0 0
    %744 = vmatpush1.bf16.msra.mxu0 0
    %745 = vmatprep.subr.bf16.mxu0 0
    %746 = vmatpush1.bf16.msra.mxu0 0
    %747 = vmatprep.subr.bf16.mxu0 0
    %748 = vmatpush1.bf16.msra.mxu0 0
    %749 = vmatprep.subr.bf16.mxu0 0
    %750 = vmatpush1.bf16.msra.mxu0 0
    %751 = vmatprep.subr.bf16.mxu0 0
    %752 = vmatpush1.bf16.msra.mxu0 0
    %753 = vmatprep.subr.bf16.mxu0 0
    %754 = vmatpush1.bf16.msra.mxu0 0
    %755 = vmatprep.subr.bf16.mxu0 0
    %756 = vmatpush1.bf16.msra.mxu0 0
    %757 = vmatprep.subr.bf16.mxu0 0
    %758 = vmatpush1.bf16.msra.mxu0 0
    %759 = vmatprep.subr.bf16.mxu0 0
    %760 = vmatpush1.bf16.msra.mxu0 0
    %761 = vmatprep.subr.bf16.mxu0 0
    %762 = vmatpush1.bf16.msra.mxu0 0
    %763 = vmatprep.subr.bf16.mxu0 0
    %764 = vmatpush1.bf16.msra.mxu0 0
    %765 = vmatprep.subr.bf16.mxu0 0
    %766 = vmatpush1.bf16.msra.mxu0 0
    %767 = vmatprep.subr.bf16.mxu0 0
    %768 = vmatpush1.bf16.msra.mxu0 0
    %769 = vmatprep.mubr.bf16.mxu0 0
    %770 = vmatmul.mubr.bf16.gmra.mrb[0].mxu0 %v732
    %v771 = vpop.f32.mrb[0].mxu0
    %v772 = vadd.f32 %v725, %v771
    %v773 = vpop.f32.mrb[0].mxu0
    %v774 = vpop.f32.mrb[0].mxu0
    %v775 = vadd.f32 %v728, %v774
    %v776 = vpop.f32.mrb[0].mxu0
    %777 = vdwg.mxu0
    %778 = vrot.lane.b32.xlu0 %v232, 112
    %v779 = vpop.permute.xlu0 %778
    %780 = vrot.lane.b32.xlu0 %v232, 80
    %v781 = vpop.permute.xlu0 %780
    %v783 = vsel %vm237, %v779, 0
    %v786 = vsel %vm237, %v781, 0
    %788 = vmatprep.subr.bf16.mxu0 0
    %789 = vmatpush1.bf16.xpose.msra.mxu0 %v786
    %790 = vmatprep.subr.bf16.mxu0 0
    %791 = vmatpush1.bf16.xpose.msra.mxu0 0
    %792 = vmatprep.subr.bf16.mxu0 0
    %793 = vmatpush1.bf16.xpose.msra.mxu0 0
    %794 = vmatprep.subr.bf16.mxu0 0
    %795 = vmatpush1.bf16.xpose.msra.mxu0 0
    %796 = vmatprep.subr.bf16.mxu0 0
    %797 = vmatpush1.bf16.xpose.msra.mxu0 0
    %798 = vmatprep.subr.bf16.mxu0 0
    %799 = vmatpush1.bf16.xpose.msra.mxu0 0
    %800 = vmatprep.subr.bf16.mxu0 0
    %801 = vmatpush1.bf16.xpose.msra.mxu0 0
    %802 = vmatprep.subr.bf16.mxu0 0
    %803 = vmatpush1.bf16.xpose.msra.mxu0 0
    %804 = vmatprep.subr.bf16.mxu0 0
    %805 = vmatpush1.bf16.xpose.msra.mxu0 0
    %806 = vmatprep.subr.bf16.mxu0 0
    %807 = vmatpush1.bf16.xpose.msra.mxu0 0
    %808 = vmatprep.subr.bf16.mxu0 0
    %809 = vmatpush1.bf16.xpose.msra.mxu0 0
    %810 = vmatprep.subr.bf16.mxu0 0
    %811 = vmatpush1.bf16.xpose.msra.mxu0 0
    %812 = vmatprep.subr.bf16.mxu0 0
    %813 = vmatpush1.bf16.xpose.msra.mxu0 0
    %814 = vmatprep.subr.bf16.mxu0 0
    %815 = vmatpush1.bf16.xpose.msra.mxu0 0
    %816 = vmatprep.subr.bf16.mxu0 0
    %817 = vmatpush1.bf16.xpose.msra.mxu0 0
    %818 = vmatprep.subr.bf16.mxu0 0
    %819 = vmatpush1.bf16.xpose.msra.mxu0 0
    %820 = vmatprep.mubr.bf16.mxu0 0
    %821 = vmatmul.mubr.bf16.gmra.mrb[0].mxu0 %v783
    %v822 = vpop.f32.mrb[0].mxu0
    %v823 = vadd.f32 0.0, %v822
    %v824 = vpop.f32.mrb[0].mxu0
    %v825 = vpop.f32.mrb[0].mxu0
    %v826 = vpop.f32.mrb[0].mxu0
    %827 = vdwg.mxu0
    %828 = vrot.lane.b32.xlu0 %v233, 112
    %v829 = vpop.permute.xlu0 %828
    %830 = vrot.lane.b32.xlu0 %v233, 80
    %v831 = vpop.permute.xlu0 %830
    %v833 = vsel %vm237, %v829, 0
    %v836 = vsel %vm237, %v831, 0
    %838 = vmatprep.subr.bf16.mxu0 0
    %839 = vmatpush1.bf16.xpose.msra.mxu0 %v836
    %840 = vmatprep.subr.bf16.mxu0 0
    %841 = vmatpush1.bf16.xpose.msra.mxu0 0
    %842 = vmatprep.subr.bf16.mxu0 0
    %843 = vmatpush1.bf16.xpose.msra.mxu0 0
    %844 = vmatprep.subr.bf16.mxu0 0
    %845 = vmatpush1.bf16.xpose.msra.mxu0 0
    %846 = vmatprep.subr.bf16.mxu0 0
    %847 = vmatpush1.bf16.xpose.msra.mxu0 0
    %848 = vmatprep.subr.bf16.mxu0 0
    %849 = vmatpush1.bf16.xpose.msra.mxu0 0
    %850 = vmatprep.subr.bf16.mxu0 0
    %851 = vmatpush1.bf16.xpose.msra.mxu0 0
    %852 = vmatprep.subr.bf16.mxu0 0
    %853 = vmatpush1.bf16.xpose.msra.mxu0 0
    %854 = vmatprep.subr.bf16.mxu0 0
    %855 = vmatpush1.bf16.xpose.msra.mxu0 0
    %856 = vmatprep.subr.bf16.mxu0 0
    %857 = vmatpush1.bf16.xpose.msra.mxu0 0
    %858 = vmatprep.subr.bf16.mxu0 0
    %859 = vmatpush1.bf16.xpose.msra.mxu0 0
    %860 = vmatprep.subr.bf16.mxu0 0
    %861 = vmatpush1.bf16.xpose.msra.mxu0 0
    %862 = vmatprep.subr.bf16.mxu0 0
    %863 = vmatpush1.bf16.xpose.msra.mxu0 0
    %864 = vmatprep.subr.bf16.mxu0 0
    %865 = vmatpush1.bf16.xpose.msra.mxu0 0
    %866 = vmatprep.subr.bf16.mxu0 0
    %867 = vmatpush1.bf16.xpose.msra.mxu0 0
    %868 = vmatprep.subr.bf16.mxu0 0
    %869 = vmatpush1.bf16.xpose.msra.mxu0 0
    %870 = vmatprep.mubr.bf16.mxu0 0
    %871 = vmatmul.mubr.bf16.gmra.mrb[0].mxu0 %v833
    %v872 = vpop.f32.mrb[0].mxu0
    %v873 = vadd.f32 0.0, %v872
    %v874 = vpop.f32.mrb[0].mxu0
    %v875 = vpop.f32.mrb[0].mxu0
    %v876 = vpop.f32.mrb[0].mxu0
    %877 = vdwg.mxu0
    %v878 = vmul.f32 %v823, 0.35355338
    %v879 = vmul.f32 %v873, 0.35355338
    %v880 = vsel %vm117, %v878, -1e+09
    %v881 = vsel %vm117, %v879, -1e+09
    %v882 = vsel %vm237, %v880, -inf
    %883 = vmax.xlane.f32.xlu0 %v882
    %v884 = vpop.xlane.xlu0 %883
    %v885 = vsel %vm237, %v881, -inf
    %886 = vmax.xlane.f32.xlu0 %v885
    %v887 = vpop.xlane.xlu0 %886
    %v888 = vsub.f32 %v880, %v884
    %v889 = vsub.f32 %v881, %v887
    %v890 = vmul.f32 %v888, 1.442695
    %v891 = vpow.pop %v890
    %v892 = vmul.f32 %v889, 1.442695
    %v893 = vpow.pop %v892
    %v894 = vsel %vm237, %v891, 0.0
    %895 = vadd.xlane.f32.xlu0 %v894
    %v896 = vpop.xlane.xlu0 %895
    %v897 = vsel %vm237, %v893, 0.0
    %898 = vadd.xlane.f32.xlu0 %v897
    %v899 = vpop.xlane.xlu0 %898
    %v900 = vrcp.pop %v896
    %v901 = vrcp.pop %v899
    %v902 = vmul.f32 %v891, %v900
    %v903 = vmul.f32 %v893, %v901
    %v904 = vpack.c.bf16 %v902, %v902
    %v905 = vpack.c.bf16 %v903, %v903
    %906 = vrot.lane.b32.xlu0 %v232, 48
    %v907 = vpop.permute.xlu0 %906
    %v909 = vsel %vm237, %v904, 0
    %v912 = vsel %vm366, %v907, 0
    %914 = vmatprep.subr.bf16.mxu0 0
    %915 = vmatpush1.bf16.msra.mxu0 %v912
    %916 = vmatprep.subr.bf16.mxu0 0
    %917 = vmatpush1.bf16.msra.mxu0 0
    %918 = vmatprep.subr.bf16.mxu0 0
    %919 = vmatpush1.bf16.msra.mxu0 0
    %920 = vmatprep.subr.bf16.mxu0 0
    %921 = vmatpush1.bf16.msra.mxu0 0
    %922 = vmatprep.subr.bf16.mxu0 0
    %923 = vmatpush1.bf16.msra.mxu0 0
    %924 = vmatprep.subr.bf16.mxu0 0
    %925 = vmatpush1.bf16.msra.mxu0 0
    %926 = vmatprep.subr.bf16.mxu0 0
    %927 = vmatpush1.bf16.msra.mxu0 0
    %928 = vmatprep.subr.bf16.mxu0 0
    %929 = vmatpush1.bf16.msra.mxu0 0
    %930 = vmatprep.subr.bf16.mxu0 0
    %931 = vmatpush1.bf16.msra.mxu0 0
    %932 = vmatprep.subr.bf16.mxu0 0
    %933 = vmatpush1.bf16.msra.mxu0 0
    %934 = vmatprep.subr.bf16.mxu0 0
    %935 = vmatpush1.bf16.msra.mxu0 0
    %936 = vmatprep.subr.bf16.mxu0 0
    %937 = vmatpush1.bf16.msra.mxu0 0
    %938 = vmatprep.subr.bf16.mxu0 0
    %939 = vmatpush1.bf16.msra.mxu0 0
    %940 = vmatprep.subr.bf16.mxu0 0
    %941 = vmatpush1.bf16.msra.mxu0 0
    %942 = vmatprep.subr.bf16.mxu0 0
    %943 = vmatpush1.bf16.msra.mxu0 0
    %944 = vmatprep.subr.bf16.mxu0 0
    %945 = vmatpush1.bf16.msra.mxu0 0
    %946 = vmatprep.mubr.bf16.mxu0 0
    %947 = vmatmul.mubr.bf16.gmra.mrb[0].mxu0 %v909
    %v948 = vpop.f32.mrb[0].mxu0
    %v949 = vadd.f32 0.0, %v948
    %v950 = vpop.f32.mrb[0].mxu0
    %v951 = vpop.f32.mrb[0].mxu0
    %v952 = vpop.f32.mrb[0].mxu0
    %953 = vdwg.mxu0
    %954 = vrot.lane.b32.xlu0 %v233, 48
    %v955 = vpop.permute.xlu0 %954
    %v957 = vsel %vm237, %v905, 0
    %v960 = vsel %vm366, %v955, 0
    %962 = vmatprep.subr.bf16.mxu0 0
    %963 = vmatpush1.bf16.msra.mxu0 %v960
    %964 = vmatprep.subr.bf16.mxu0 0
    %965 = vmatpush1.bf16.msra.mxu0 0
    %966 = vmatprep.subr.bf16.mxu0 0
    %967 = vmatpush1.bf16.msra.mxu0 0
    %968 = vmatprep.subr.bf16.mxu0 0
    %969 = vmatpush1.bf16.msra.mxu0 0
    %970 = vmatprep.subr.bf16.mxu0 0
    %971 = vmatpush1.bf16.msra.mxu0 0
    %972 = vmatprep.subr.bf16.mxu0 0
    %973 = vmatpush1.bf16.msra.mxu0 0
    %974 = vmatprep.subr.bf16.mxu0 0
    %975 = vmatpush1.bf16.msra.mxu0 0
    %976 = vmatprep.subr.bf16.mxu0 0
    %977 = vmatpush1.bf16.msra.mxu0 0
    %978 = vmatprep.subr.bf16.mxu0 0
    %979 = vmatpush1.bf16.msra.mxu0 0
    %980 = vmatprep.subr.bf16.mxu0 0
    %981 = vmatpush1.bf16.msra.mxu0 0
    %982 = vmatprep.subr.bf16.mxu0 0
    %983 = vmatpush1.bf16.msra.mxu0 0
    %984 = vmatprep.subr.bf16.mxu0 0
    %985 = vmatpush1.bf16.msra.mxu0 0
    %986 = vmatprep.subr.bf16.mxu0 0
    %987 = vmatpush1.bf16.msra.mxu0 0
    %988 = vmatprep.subr.bf16.mxu0 0
    %989 = vmatpush1.bf16.msra.mxu0 0
    %990 = vmatprep.subr.bf16.mxu0 0
    %991 = vmatpush1.bf16.msra.mxu0 0
    %992 = vmatprep.subr.bf16.mxu0 0
    %993 = vmatpush1.bf16.msra.mxu0 0
    %994 = vmatprep.mubr.bf16.mxu0 0
    %995 = vmatmul.mubr.bf16.gmra.mrb[0].mxu0 %v957
    %v996 = vpop.f32.mrb[0].mxu0
    %v997 = vadd.f32 0.0, %v996
    %v998 = vpop.f32.mrb[0].mxu0
    %v999 = vpop.f32.mrb[0].mxu0
    %v1000 = vpop.f32.mrb[0].mxu0
    %1001 = vdwg.mxu0
    %v1002 = vpack.c.bf16 %v997, %v949
    %v1004 = vsel %vm237, %v1002, 0
    %v1007 = vsel %vm366, %v230, 0
    %1009 = vmatprep.subr.bf16.mxu0 0
    %1010 = vmatpush1.bf16.msra.mxu0 %v1007
    %1011 = vmatprep.subr.bf16.mxu0 0
    %1012 = vmatpush1.bf16.msra.mxu0 0
    %1013 = vmatprep.subr.bf16.mxu0 0
    %1014 = vmatpush1.bf16.msra.mxu0 0
    %1015 = vmatprep.subr.bf16.mxu0 0
    %1016 = vmatpush1.bf16.msra.mxu0 0
    %1017 = vmatprep.subr.bf16.mxu0 0
    %1018 = vmatpush1.bf16.msra.mxu0 0
    %1019 = vmatprep.subr.bf16.mxu0 0
    %1020 = vmatpush1.bf16.msra.mxu0 0
    %1021 = vmatprep.subr.bf16.mxu0 0
    %1022 = vmatpush1.bf16.msra.mxu0 0
    %1023 = vmatprep.subr.bf16.mxu0 0
    %1024 = vmatpush1.bf16.msra.mxu0 0
    %1025 = vmatprep.subr.bf16.mxu0 0
    %1026 = vmatpush1.bf16.msra.mxu0 0
    %1027 = vmatprep.subr.bf16.mxu0 0
    %1028 = vmatpush1.bf16.msra.mxu0 0
    %1029 = vmatprep.subr.bf16.mxu0 0
    %1030 = vmatpush1.bf16.msra.mxu0 0
    %1031 = vmatprep.subr.bf16.mxu0 0
    %1032 = vmatpush1.bf16.msra.mxu0 0
    %1033 = vmatprep.subr.bf16.mxu0 0
    %1034 = vmatpush1.bf16.msra.mxu0 0
    %1035 = vmatprep.subr.bf16.mxu0 0
    %1036 = vmatpush1.bf16.msra.mxu0 0
    %1037 = vmatprep.subr.bf16.mxu0 0
    %1038 = vmatpush1.bf16.msra.mxu0 0
    %1039 = vmatprep.subr.bf16.mxu0 0
    %1040 = vmatpush1.bf16.msra.mxu0 0
    %1041 = vmatprep.mubr.bf16.mxu0 0
    %1042 = vmatmul.mubr.bf16.gmra.mrb[0].mxu0 %v1004
    %v1043 = vpop.f32.mrb[0].mxu0
    %v1044 = vadd.f32 0.0, %v1043
    %v1045 = vpop.f32.mrb[0].mxu0
    %v1046 = vpop.f32.mrb[0].mxu0
    %v1047 = vadd.f32 0.0, %v1046
    %v1048 = vpop.f32.mrb[0].mxu0
    %1049 = vdwg.mxu0
    %v1050 = vadd.f32 %v772, %v1044
    %v1051 = vadd.f32 %v775, %v1047
    %1052 = vrot.lane.b32.xlu0 %v232, 104
    %v1053 = vpop.permute.xlu0 %1052
    %1054 = vrot.lane.b32.xlu0 %v232, 72
    %v1055 = vpop.permute.xlu0 %1054
    %v1057 = vsel %vm237, %v1053, 0
    %v1060 = vsel %vm237, %v1055, 0
    %1062 = vmatprep.subr.bf16.mxu0 0
    %1063 = vmatpush1.bf16.xpose.msra.mxu0 %v1060
    %1064 = vmatprep.subr.bf16.mxu0 0
    %1065 = vmatpush1.bf16.xpose.msra.mxu0 0
    %1066 = vmatprep.subr.bf16.mxu0 0
    %1067 = vmatpush1.bf16.xpose.msra.mxu0 0
    %1068 = vmatprep.subr.bf16.mxu0 0
    %1069 = vmatpush1.bf16.xpose.msra.mxu0 0
    %1070 = vmatprep.subr.bf16.mxu0 0
    %1071 = vmatpush1.bf16.xpose.msra.mxu0 0
    %1072 = vmatprep.subr.bf16.mxu0 0
    %1073 = vmatpush1.bf16.xpose.msra.mxu0 0
    %1074 = vmatprep.subr.bf16.mxu0 0
    %1075 = vmatpush1.bf16.xpose.msra.mxu0 0
    %1076 = vmatprep.subr.bf16.mxu0 0
    %1077 = vmatpush1.bf16.xpose.msra.mxu0 0
    %1078 = vmatprep.subr.bf16.mxu0 0
    %1079 = vmatpush1.bf16.xpose.msra.mxu0 0
    %1080 = vmatprep.subr.bf16.mxu0 0
    %1081 = vmatpush1.bf16.xpose.msra.mxu0 0
    %1082 = vmatprep.subr.bf16.mxu0 0
    %1083 = vmatpush1.bf16.xpose.msra.mxu0 0
    %1084 = vmatprep.subr.bf16.mxu0 0
    %1085 = vmatpush1.bf16.xpose.msra.mxu0 0
    %1086 = vmatprep.subr.bf16.mxu0 0
    %1087 = vmatpush1.bf16.xpose.msra.mxu0 0
    %1088 = vmatprep.subr.bf16.mxu0 0
    %1089 = vmatpush1.bf16.xpose.msra.mxu0 0
    %1090 = vmatprep.subr.bf16.mxu0 0
    %1091 = vmatpush1.bf16.xpose.msra.mxu0 0
    %1092 = vmatprep.subr.bf16.mxu0 0
    %1093 = vmatpush1.bf16.xpose.msra.mxu0 0
    %1094 = vmatprep.mubr.bf16.mxu0 0
    %1095 = vmatmul.mubr.bf16.gmra.mrb[0].mxu0 %v1057
    %v1096 = vpop.f32.mrb[0].mxu0
    %v1097 = vadd.f32 0.0, %v1096
    %v1098 = vpop.f32.mrb[0].mxu0
    %v1099 = vpop.f32.mrb[0].mxu0
    %v1100 = vpop.f32.mrb[0].mxu0
    %1101 = vdwg.mxu0
    %1102 = vrot.lane.b32.xlu0 %v233, 104
    %v1103 = vpop.permute.xlu0 %1102
    %1104 = vrot.lane.b32.xlu0 %v233, 72
    %v1105 = vpop.permute.xlu0 %1104
    %v1107 = vsel %vm237, %v1103, 0
    %v1110 = vsel %vm237, %v1105, 0
    %1112 = vmatprep.subr.bf16.mxu0 0
    %1113 = vmatpush1.bf16.xpose.msra.mxu0 %v1110
    %1114 = vmatprep.subr.bf16.mxu0 0
    %1115 = vmatpush1.bf16.xpose.msra.mxu0 0
    %1116 = vmatprep.subr.bf16.mxu0 0
    %1117 = vmatpush1.bf16.xpose.msra.mxu0 0
    %1118 = vmatprep.subr.bf16.mxu0 0
    %1119 = vmatpush1.bf16.xpose.msra.mxu0 0
    %1120 = vmatprep.subr.bf16.mxu0 0
    %1121 = vmatpush1.bf16.xpose.msra.mxu0 0
    %1122 = vmatprep.subr.bf16.mxu0 0
    %1123 = vmatpush1.bf16.xpose.msra.mxu0 0
    %1124 = vmatprep.subr.bf16.mxu0 0
    %1125 = vmatpush1.bf16.xpose.msra.mxu0 0
    %1126 = vmatprep.subr.bf16.mxu0 0
    %1127 = vmatpush1.bf16.xpose.msra.mxu0 0
    %1128 = vmatprep.subr.bf16.mxu0 0
    %1129 = vmatpush1.bf16.xpose.msra.mxu0 0
    %1130 = vmatprep.subr.bf16.mxu0 0
    %1131 = vmatpush1.bf16.xpose.msra.mxu0 0
    %1132 = vmatprep.subr.bf16.mxu0 0
    %1133 = vmatpush1.bf16.xpose.msra.mxu0 0
    %1134 = vmatprep.subr.bf16.mxu0 0
    %1135 = vmatpush1.bf16.xpose.msra.mxu0 0
    %1136 = vmatprep.subr.bf16.mxu0 0
    %1137 = vmatpush1.bf16.xpose.msra.mxu0 0
    %1138 = vmatprep.subr.bf16.mxu0 0
    %1139 = vmatpush1.bf16.xpose.msra.mxu0 0
    %1140 = vmatprep.subr.bf16.mxu0 0
    %1141 = vmatpush1.bf16.xpose.msra.mxu0 0
    %1142 = vmatprep.subr.bf16.mxu0 0
    %1143 = vmatpush1.bf16.xpose.msra.mxu0 0
    %1144 = vmatprep.mubr.bf16.mxu0 0
    %1145 = vmatmul.mubr.bf16.gmra.mrb[0].mxu0 %v1107
    %v1146 = vpop.f32.mrb[0].mxu0
    %v1147 = vadd.f32 0.0, %v1146
    %v1148 = vpop.f32.mrb[0].mxu0
    %v1149 = vpop.f32.mrb[0].mxu0
    %v1150 = vpop.f32.mrb[0].mxu0
    %1151 = vdwg.mxu0
    %v1152 = vmul.f32 %v1097, 0.35355338
    %v1153 = vmul.f32 %v1147, 0.35355338
    %v1154 = vsel %vm117, %v1152, -1e+09
    %v1155 = vsel %vm117, %v1153, -1e+09
    %v1156 = vsel %vm237, %v1154, -inf
    %1157 = vmax.xlane.f32.xlu0 %v1156
    %v1158 = vpop.xlane.xlu0 %1157
    %v1159 = vsel %vm237, %v1155, -inf
    %1160 = vmax.xlane.f32.xlu0 %v1159
    %v1161 = vpop.xlane.xlu0 %1160
    %v1162 = vsub.f32 %v1154, %v1158
    %v1163 = vsub.f32 %v1155, %v1161
    %v1164 = vmul.f32 %v1162, 1.442695
    %v1165 = vpow.pop %v1164
    %v1166 = vmul.f32 %v1163, 1.442695
    %v1167 = vpow.pop %v1166
    %v1168 = vsel %vm237, %v1165, 0.0
    %1169 = vadd.xlane.f32.xlu0 %v1168
    %v1170 = vpop.xlane.xlu0 %1169
    %v1171 = vsel %vm237, %v1167, 0.0
    %1172 = vadd.xlane.f32.xlu0 %v1171
    %v1173 = vpop.xlane.xlu0 %1172
    %v1174 = vrcp.pop %v1170
    %v1175 = vrcp.pop %v1173
    %v1176 = vmul.f32 %v1165, %v1174
    %v1177 = vmul.f32 %v1167, %v1175
    %v1178 = vpack.c.bf16 %v1176, %v1176
    %v1179 = vpack.c.bf16 %v1177, %v1177
    %1180 = vrot.lane.b32.xlu0 %v232, 40
    %v1181 = vpop.permute.xlu0 %1180
    %v1183 = vsel %vm237, %v1178, 0
    %v1186 = vsel %vm366, %v1181, 0
    %1188 = vmatprep.subr.bf16.mxu0 0
    %1189 = vmatpush1.bf16.msra.mxu0 %v1186
    %1190 = vmatprep.subr.bf16.mxu0 0
    %1191 = vmatpush1.bf16.msra.mxu0 0
    %1192 = vmatprep.subr.bf16.mxu0 0
    %1193 = vmatpush1.bf16.msra.mxu0 0
    %1194 = vmatprep.subr.bf16.mxu0 0
    %1195 = vmatpush1.bf16.msra.mxu0 0
    %1196 = vmatprep.subr.bf16.mxu0 0
    %1197 = vmatpush1.bf16.msra.mxu0 0
    %1198 = vmatprep.subr.bf16.mxu0 0
    %1199 = vmatpush1.bf16.msra.mxu0 0
    %1200 = vmatprep.subr.bf16.mxu0 0
    %1201 = vmatpush1.bf16.msra.mxu0 0
    %1202 = vmatprep.subr.bf16.mxu0 0
    %1203 = vmatpush1.bf16.msra.mxu0 0
    %1204 = vmatprep.subr.bf16.mxu0 0
    %1205 = vmatpush1.bf16.msra.mxu0 0
    %1206 = vmatprep.subr.bf16.mxu0 0
    %1207 = vmatpush1.bf16.msra.mxu0 0
    %1208 = vmatprep.subr.bf16.mxu0 0
    %1209 = vmatpush1.bf16.msra.mxu0 0
    %1210 = vmatprep.subr.bf16.mxu0 0
    %1211 = vmatpush1.bf16.msra.mxu0 0
    %1212 = vmatprep.subr.bf16.mxu0 0
    %1213 = vmatpush1.bf16.msra.mxu0 0
    %1214 = vmatprep.subr.bf16.mxu0 0
    %1215 = vmatpush1.bf16.msra.mxu0 0
    %1216 = vmatprep.subr.bf16.mxu0 0
    %1217 = vmatpush1.bf16.msra.mxu0 0
    %1218 = vmatprep.subr.bf16.mxu0 0
    %1219 = vmatpush1.bf16.msra.mxu0 0
    %1220 = vmatprep.mubr.bf16.mxu0 0
    %1221 = vmatmul.mubr.bf16.gmra.mrb[0].mxu0 %v1183
    %v1222 = vpop.f32.mrb[0].mxu0
    %v1223 = vadd.f32 0.0, %v1222
    %v1224 = vpop.f32.mrb[0].mxu0
    %v1225 = vpop.f32.mrb[0].mxu0
    %v1226 = vpop.f32.mrb[0].mxu0
    %1227 = vdwg.mxu0
    %1228 = vrot.lane.b32.xlu0 %v233, 40
    %v1229 = vpop.permute.xlu0 %1228
    %v1231 = vsel %vm237, %v1179, 0
    %v1234 = vsel %vm366, %v1229, 0
    %1236 = vmatprep.subr.bf16.mxu0 0
    %1237 = vmatpush1.bf16.msra.mxu0 %v1234
    %1238 = vmatprep.subr.bf16.mxu0 0
    %1239 = vmatpush1.bf16.msra.mxu0 0
    %1240 = vmatprep.subr.bf16.mxu0 0
    %1241 = vmatpush1.bf16.msra.mxu0 0
    %1242 = vmatprep.subr.bf16.mxu0 0
    %1243 = vmatpush1.bf16.msra.mxu0 0
    %1244 = vmatprep.subr.bf16.mxu0 0
    %1245 = vmatpush1.bf16.msra.mxu0 0
    %1246 = vmatprep.subr.bf16.mxu0 0
    %1247 = vmatpush1.bf16.msra.mxu0 0
    %1248 = vmatprep.subr.bf16.mxu0 0
    %1249 = vmatpush1.bf16.msra.mxu0 0
    %1250 = vmatprep.subr.bf16.mxu0 0
    %1251 = vmatpush1.bf16.msra.mxu0 0
    %1252 = vmatprep.subr.bf16.mxu0 0
    %1253 = vmatpush1.bf16.msra.mxu0 0
    %1254 = vmatprep.subr.bf16.mxu0 0
    %1255 = vmatpush1.bf16.msra.mxu0 0
    %1256 = vmatprep.subr.bf16.mxu0 0
    %1257 = vmatpush1.bf16.msra.mxu0 0
    %1258 = vmatprep.subr.bf16.mxu0 0
    %1259 = vmatpush1.bf16.msra.mxu0 0
    %1260 = vmatprep.subr.bf16.mxu0 0
    %1261 = vmatpush1.bf16.msra.mxu0 0
    %1262 = vmatprep.subr.bf16.mxu0 0
    %1263 = vmatpush1.bf16.msra.mxu0 0
    %1264 = vmatprep.subr.bf16.mxu0 0
    %1265 = vmatpush1.bf16.msra.mxu0 0
    %1266 = vmatprep.subr.bf16.mxu0 0
    %1267 = vmatpush1.bf16.msra.mxu0 0
    %1268 = vmatprep.mubr.bf16.mxu0 0
    %1269 = vmatmul.mubr.bf16.gmra.mrb[0].mxu0 %v1231
    %v1270 = vpop.f32.mrb[0].mxu0
    %v1271 = vadd.f32 0.0, %v1270
    %v1272 = vpop.f32.mrb[0].mxu0
    %v1273 = vpop.f32.mrb[0].mxu0
    %v1274 = vpop.f32.mrb[0].mxu0
    %1275 = vdwg.mxu0
    %v1276 = vpack.c.bf16 %v1271, %v1223
    %v1278 = vsel %vm237, %v1276, 0
    %v1281 = vsel %vm366, %v231, 0
    %1283 = vmatprep.subr.bf16.mxu0 0
    %1284 = vmatpush1.bf16.msra.mxu0 %v1281
    %1285 = vmatprep.subr.bf16.mxu0 0
    %1286 = vmatpush1.bf16.msra.mxu0 0
    %1287 = vmatprep.subr.bf16.mxu0 0
    %1288 = vmatpush1.bf16.msra.mxu0 0
    %1289 = vmatprep.subr.bf16.mxu0 0
    %1290 = vmatpush1.bf16.msra.mxu0 0
    %1291 = vmatprep.subr.bf16.mxu0 0
    %1292 = vmatpush1.bf16.msra.mxu0 0
    %1293 = vmatprep.subr.bf16.mxu0 0
    %1294 = vmatpush1.bf16.msra.mxu0 0
    %1295 = vmatprep.subr.bf16.mxu0 0
    %1296 = vmatpush1.bf16.msra.mxu0 0
    %1297 = vmatprep.subr.bf16.mxu0 0
    %1298 = vmatpush1.bf16.msra.mxu0 0
    %1299 = vmatprep.subr.bf16.mxu0 0
    %1300 = vmatpush1.bf16.msra.mxu0 0
    %1301 = vmatprep.subr.bf16.mxu0 0
    %1302 = vmatpush1.bf16.msra.mxu0 0
    %1303 = vmatprep.subr.bf16.mxu0 0
    %1304 = vmatpush1.bf16.msra.mxu0 0
    %1305 = vmatprep.subr.bf16.mxu0 0
    %1306 = vmatpush1.bf16.msra.mxu0 0
    %1307 = vmatprep.subr.bf16.mxu0 0
    %1308 = vmatpush1.bf16.msra.mxu0 0
    %1309 = vmatprep.subr.bf16.mxu0 0
    %1310 = vmatpush1.bf16.msra.mxu0 0
    %1311 = vmatprep.subr.bf16.mxu0 0
    %1312 = vmatpush1.bf16.msra.mxu0 0
    %1313 = vmatprep.subr.bf16.mxu0 0
    %1314 = vmatpush1.bf16.msra.mxu0 0
    %1315 = vmatprep.mubr.bf16.mxu0 0
    %1316 = vmatmul.mubr.bf16.gmra.mrb[0].mxu0 %v1278
    %v1317 = vpop.f32.mrb[0].mxu0
    %v1318 = vadd.f32 0.0, %v1317
    %v1319 = vpop.f32.mrb[0].mxu0
    %v1320 = vpop.f32.mrb[0].mxu0
    %v1321 = vadd.f32 0.0, %v1320
    %v1322 = vpop.f32.mrb[0].mxu0
    %1323 = vdwg.mxu0
    %v1324 = vadd.f32 %v1050, %v1318
    %v1325 = vadd.f32 %v1051, %v1321
    %v1326 = vadd.f32 %v113, %v1324
    %v1327 = vadd.f32 %v114, %v1325
    %v1328 = vlaneseq
    %v1329 = vshrl.u32 %v1328, 7
    %v1330 = vsub.s32 5, %v1329
    %v1331 = vrot.slane %v118, %v1330
    %v1332 = vadd.f32 %v1326, %v1331
    %v1333 = vadd.f32 %v1327, %v1331
    %v1334 = vsel %vm119, %v1332, 0.0
    %1335 = vadd.xlane.f32.xlu0 %v1334
    %v1336 = vpop.xlane.xlu0 %1335
    %v1337 = vsel %vm119, %v1333, 0.0
    %1338 = vadd.xlane.f32.xlu0 %v1337
    %v1339 = vpop.xlane.xlu0 %1338
    %v1340 = vmul.f32 %v1336, %v126
    %v1341 = vmul.f32 %v1339, %v126
    %v1342 = vmul.f32 %v1332, %v1332
    %v1343 = vmul.f32 %v1333, %v1333
    %v1344 = vsel %vm119, %v1342, 0.0
    %1345 = vadd.xlane.f32.xlu0 %v1344
    %v1346 = vpop.xlane.xlu0 %1345
    %v1347 = vsel %vm119, %v1343, 0.0
    %1348 = vadd.xlane.f32.xlu0 %v1347
    %v1349 = vpop.xlane.xlu0 %1348
    %v1350 = vmul.f32 %v1346, %v126
    %v1351 = vmul.f32 %v1349, %v126
    %v1352 = vmul.f32 %v1340, %v1340
    %v1353 = vmul.f32 %v1341, %v1341
    %v1354 = vsub.f32 %v1350, %v1352
    %v1355 = vsub.f32 %v1351, %v1353
    %v1356 = vsub.f32 %v1332, %v1340
    %v1357 = vsub.f32 %v1333, %v1341
    %v1358 = vadd.f32 %v1354, 1e-05
    %v1359 = vadd.f32 %v1355, 1e-05
    %v1360 = vrsqrt.pop %v1358
    %v1361 = vrsqrt.pop %v1359
    %v1362 = vmul.f32 %v1356, %v1360
    %v1363 = vmul.f32 %v1357, %v1361
    %v1364 = vlaneseq
    %v1365 = vshrl.u32 %v1364, 7
    %v1366 = vsub.s32 2, %v1365
    %v1367 = vrot.slane %v118, %v1366
    %v1368 = vmul.f32 %v1362, %v1367
    %v1369 = vmul.f32 %v1363, %v1367
    %v1370 = vlaneseq
    %v1371 = vshrl.u32 %v1370, 7
    %v1372 = vsub.s32 3, %v1371
    %v1373 = vrot.slane %v118, %v1372
    %v1374 = vadd.f32 %v1368, %v1373
    %v1375 = vadd.f32 %v1369, %v1373
    %v1376 = vpack.c.bf16 %v1375, %v1374
    %v1377 = vld [vmem:[%s7] sm:$0xf]
    %v1378 = vld [vmem:[%s7 + $0x4] sm:$0xf]
    %v1379 = vld [vmem:[%s7 + $0x8] sm:$0xf]
    %v1380 = vld [vmem:[%s7 + $0xc] sm:$0xf]
    %v1381 = vlaneseq
    %v1382 = vshrl.u32 %v1381, 7
    %v1383 = vsub.s32 6, %v1382
    %v1384 = vrot.slane %v118, %v1383
    %v1389 = vunpack.c.l.b16 %v1377
    %v1390 = vunpack.c.l.b16 %v1378
    %v1391 = vunpack.c.l.b16 %v1379
    %v1392 = vunpack.c.l.b16 %v1380
    %v1393 = vpack.c.b16 %v1390, %v1389
    %v1394 = vpack.c.b16 %v1392, %v1391
    %v1398 = vsel %vm119, %v1376, 0
    %1400 = vmatprep.subr.bf16.mxu0 0
    %1401 = vmatpush1.bf16.msra.mxu0 %v1393
    %1402 = vmatprep.subr.bf16.mxu0 0
    %1403 = vmatpush1.bf16.msra.mxu0 %v1394
    %1404 = vmatprep.subr.bf16.mxu0 0
    %1405 = vmatpush1.bf16.msra.mxu0 0
    %1406 = vmatprep.subr.bf16.mxu0 0
    %1407 = vmatpush1.bf16.msra.mxu0 0
    %1408 = vmatprep.subr.bf16.mxu0 0
    %1409 = vmatpush1.bf16.msra.mxu0 0
    %1410 = vmatprep.subr.bf16.mxu0 0
    %1411 = vmatpush1.bf16.msra.mxu0 0
    %1412 = vmatprep.subr.bf16.mxu0 0
    %1413 = vmatpush1.bf16.msra.mxu0 0
    %1414 = vmatprep.subr.bf16.mxu0 0
    %1415 = vmatpush1.bf16.msra.mxu0 0
    %1416 = vmatprep.subr.bf16.mxu0 0
    %1417 = vmatpush1.bf16.msra.mxu0 0
    %1418 = vmatprep.subr.bf16.mxu0 0
    %1419 = vmatpush1.bf16.msra.mxu0 0
    %1420 = vmatprep.subr.bf16.mxu0 0
    %1421 = vmatpush1.bf16.msra.mxu0 0
    %1422 = vmatprep.subr.bf16.mxu0 0
    %1423 = vmatpush1.bf16.msra.mxu0 0
    %1424 = vmatprep.subr.bf16.mxu0 0
    %1425 = vmatpush1.bf16.msra.mxu0 0
    %1426 = vmatprep.subr.bf16.mxu0 0
    %1427 = vmatpush1.bf16.msra.mxu0 0
    %1428 = vmatprep.subr.bf16.mxu0 0
    %1429 = vmatpush1.bf16.msra.mxu0 0
    %1430 = vmatprep.subr.bf16.mxu0 0
    %1431 = vmatpush1.bf16.msra.mxu0 0
    %1432 = vmatprep.mubr.bf16.mxu0 0
    %1433 = vmatmul.mubr.bf16.gmra.mrb[0].mxu0 %v1398
    %v1434 = vpop.f32.mrb[0].mxu0
    %v1435 = vadd.f32 %v1384, %v1434
    %v1436 = vpop.f32.mrb[0].mxu0
    %v1437 = vpop.f32.mrb[0].mxu0
    %v1438 = vadd.f32 %v1384, %v1437
    %v1439 = vpop.f32.mrb[0].mxu0
    %1440 = vdwg.mxu0
    %v1441 = vmul.f32 %v1435, %v1435
    %v1442 = vmul.f32 %v1438, %v1438
    %v1443 = vmul.f32 %v1435, %v1441
    %v1444 = vmul.f32 %v1438, %v1442
    %v1445 = vmul.f32 %v1443, 0.044715
    %v1446 = vmul.f32 %v1444, 0.044715
    %v1447 = vadd.f32 %v1435, %v1445
    %v1448 = vadd.f32 %v1438, %v1446
    %v1449 = vmul.f32 %v1447, 0.7978846
    %v1450 = vmul.f32 %v1448, 0.7978846
    %v1451 = vtanh.pop %v1449
    %v1452 = vtanh.pop %v1450
    %v1453 = vadd.f32 %v1451, 1.0
    %v1454 = vadd.f32 %v1452, 1.0
    %v1455 = vmul.f32 %v1453, 0.5
    %v1456 = vmul.f32 %v1454, 0.5
    %v1457 = vmul.f32 %v1435, %v1455
    %v1458 = vmul.f32 %v1438, %v1456
    %v1459 = vpack.c.bf16 %v1458, %v1457
    %v1460 = vld [vmem:[%s8] sm:$0xf]
    %v1461 = vld [vmem:[%s8 + $0x4] sm:$0xf]
    %v1462 = vld [vmem:[%s8 + $0x8] sm:$0xf]
    %v1463 = vld [vmem:[%s8 + $0xc] sm:$0xf]
    %v1464 = vld [vmem:[%s8 + $0x10] sm:$0xf]
    %v1465 = vld [vmem:[%s8 + $0x14] sm:$0xf]
    %v1466 = vld [vmem:[%s8 + $0x18] sm:$0xf]
    %v1467 = vld [vmem:[%s8 + $0x1c] sm:$0xf]
    %v1468 = vld [vmem:[%s8 + $0x20] sm:$0xf]
    %v1469 = vld [vmem:[%s8 + $0x24] sm:$0xf]
    %v1470 = vld [vmem:[%s8 + $0x28] sm:$0xf]
    %v1471 = vld [vmem:[%s8 + $0x2c] sm:$0xf]
    %v1472 = vld [vmem:[%s8 + $0x30] sm:$0xf]
    %v1473 = vld [vmem:[%s8 + $0x34] sm:$0xf]
    %v1474 = vld [vmem:[%s8 + $0x38] sm:$0xf]
    %v1475 = vld [vmem:[%s8 + $0x3c] sm:$0xf]
    %v1492 = vunpack.c.l.b16 %v1460
    %v1493 = vunpack.c.l.b16 %v1461
    %v1494 = vunpack.c.l.b16 %v1462
    %v1495 = vunpack.c.l.b16 %v1463
    %v1496 = vunpack.c.l.b16 %v1464
    %v1497 = vunpack.c.l.b16 %v1465
    %v1498 = vunpack.c.l.b16 %v1466
    %v1499 = vunpack.c.l.b16 %v1467
    %v1500 = vunpack.c.l.b16 %v1468
    %v1501 = vunpack.c.l.b16 %v1469
    %v1502 = vunpack.c.l.b16 %v1470
    %v1503 = vunpack.c.l.b16 %v1471
    %v1504 = vunpack.c.l.b16 %v1472
    %v1505 = vunpack.c.l.b16 %v1473
    %v1506 = vunpack.c.l.b16 %v1474
    %v1507 = vunpack.c.l.b16 %v1475
    %v1508 = vpack.c.b16 %v1493, %v1492
    %v1509 = vpack.c.b16 %v1495, %v1494
    %v1510 = vpack.c.b16 %v1497, %v1496
    %v1511 = vpack.c.b16 %v1499, %v1498
    %v1512 = vpack.c.b16 %v1501, %v1500
    %v1513 = vpack.c.b16 %v1503, %v1502
    %v1514 = vpack.c.b16 %v1505, %v1504
    %v1515 = vpack.c.b16 %v1507, %v1506
    %1524 = vmatprep.subr.bf16.mxu0 0
    %1525 = vmatpush1.bf16.msra.mxu0 %v1508
    %1526 = vmatprep.subr.bf16.mxu0 0
    %1527 = vmatpush1.bf16.msra.mxu0 %v1509
    %1528 = vmatprep.subr.bf16.mxu0 0
    %1529 = vmatpush1.bf16.msra.mxu0 %v1510
    %1530 = vmatprep.subr.bf16.mxu0 0
    %1531 = vmatpush1.bf16.msra.mxu0 %v1511
    %1532 = vmatprep.subr.bf16.mxu0 0
    %1533 = vmatpush1.bf16.msra.mxu0 %v1512
    %1534 = vmatprep.subr.bf16.mxu0 0
    %1535 = vmatpush1.bf16.msra.mxu0 %v1513
    %1536 = vmatprep.subr.bf16.mxu0 0
    %1537 = vmatpush1.bf16.msra.mxu0 %v1514
    %1538 = vmatprep.subr.bf16.mxu0 0
    %1539 = vmatpush1.bf16.msra.mxu0 %v1515
    %1540 = vmatprep.subr.bf16.mxu0 0
    %1541 = vmatpush1.bf16.msra.mxu0 0
    %1542 = vmatprep.subr.bf16.mxu0 0
    %1543 = vmatpush1.bf16.msra.mxu0 0
    %1544 = vmatprep.subr.bf16.mxu0 0
    %1545 = vmatpush1.bf16.msra.mxu0 0
    %1546 = vmatprep.subr.bf16.mxu0 0
    %1547 = vmatpush1.bf16.msra.mxu0 0
    %1548 = vmatprep.subr.bf16.mxu0 0
    %1549 = vmatpush1.bf16.msra.mxu0 0
    %1550 = vmatprep.subr.bf16.mxu0 0
    %1551 = vmatpush1.bf16.msra.mxu0 0
    %1552 = vmatprep.subr.bf16.mxu0 0
    %1553 = vmatpush1.bf16.msra.mxu0 0
    %1554 = vmatprep.subr.bf16.mxu0 0
    %1555 = vmatpush1.bf16.msra.mxu0 0
    %1556 = vmatprep.mubr.bf16.mxu0 0
    %1557 = vmatmul.mubr.bf16.gmra.mrb[0].mxu0 %v1459
    %v1558 = vpop.f32.mrb[0].mxu0
    %v1559 = vadd.f32 0.0, %v1558
    %v1560 = vpop.f32.mrb[0].mxu0
    %v1561 = vpop.f32.mrb[0].mxu0
    %v1562 = vadd.f32 0.0, %v1561
    %v1563 = vpop.f32.mrb[0].mxu0
    %1564 = vdwg.mxu0
    %v1565 = vadd.f32 %v1332, %v1559
    %v1566 = vadd.f32 %v1333, %v1562
    %v1567 = vlaneseq
    %v1568 = vshrl.u32 %v1567, 7
    %v1569 = vsub.s32 7, %v1568
    %v1570 = vrot.slane %v118, %v1569
    %v1571 = vadd.f32 %v1565, %v1570
    %v1572 = vadd.f32 %v1566, %v1570
    %s1573 = scalar_lea.vmem %s3, 8
    %v1574 = vld [vmem:[%s1573] sm:$0xff]
    %v1575 = vsel %vm119, %v1571, 0.0
    %1576 = vadd.xlane.f32.xlu0 %v1575
    %v1577 = vpop.xlane.xlu0 %1576
    %v1578 = vsel %vm119, %v1572, 0.0
    %1579 = vadd.xlane.f32.xlu0 %v1578
    %v1580 = vpop.xlane.xlu0 %1579
    %v1581 = vmul.f32 %v1577, %v126
    %v1582 = vmul.f32 %v1580, %v126
    %v1583 = vmul.f32 %v1571, %v1571
    %v1584 = vmul.f32 %v1572, %v1572
    %v1585 = vsel %vm119, %v1583, 0.0
    %1586 = vadd.xlane.f32.xlu0 %v1585
    %v1587 = vpop.xlane.xlu0 %1586
    %v1588 = vsel %vm119, %v1584, 0.0
    %1589 = vadd.xlane.f32.xlu0 %v1588
    %v1590 = vpop.xlane.xlu0 %1589
    %v1591 = vmul.f32 %v1587, %v126
    %v1592 = vmul.f32 %v1590, %v126
    %v1593 = vmul.f32 %v1581, %v1581
    %v1594 = vmul.f32 %v1582, %v1582
    %v1595 = vsub.f32 %v1591, %v1593
    %v1596 = vsub.f32 %v1592, %v1594
    %v1597 = vsub.f32 %v1571, %v1581
    %v1598 = vsub.f32 %v1572, %v1582
    %v1599 = vadd.f32 %v1595, 1e-05
    %v1600 = vadd.f32 %v1596, 1e-05
    %v1601 = vrsqrt.pop %v1599
    %v1602 = vrsqrt.pop %v1600
    %v1603 = vmul.f32 %v1597, %v1601
    %v1604 = vmul.f32 %v1598, %v1602
    %v1605 = vlaneseq
    %v1606 = vshrl.u32 %v1605, 7
    %v1607 = vsub.s32 0, %v1606
    %v1608 = vrot.slane %v1574, %v1607
    %v1609 = vmul.f32 %v1603, %v1608
    %v1610 = vmul.f32 %v1604, %v1608
    %v1611 = vlaneseq
    %v1612 = vshrl.u32 %v1611, 7
    %v1613 = vsub.s32 1, %v1612
    %v1614 = vrot.slane %v1574, %v1613
    %v1615 = vadd.f32 %v1609, %v1614
    %v1616 = vadd.f32 %v1610, %v1614
    %v1617 = vpack.c.bf16 %v1616, %v1615
    %s1618 = scalar_lea.vmem %s5, 16
    %v1619 = vld [vmem:[%s1618] sm:$0xf]
    %v1620 = vld [vmem:[%s1618 + $0x4] sm:$0xf]
    %v1621 = vld [vmem:[%s1618 + $0x8] sm:$0xf]
    %v1622 = vld [vmem:[%s1618 + $0xc] sm:$0xf]
    %v1623 = vlaneseq
    %v1624 = vshrl.u32 %v1623, 7
    %v1625 = vsub.s32 4, %v1624
    %v1626 = vrot.slane %v1574, %v1625
    %v1631 = vunpack.c.l.b16 %v1619
    %v1632 = vunpack.c.l.b16 %v1620
    %v1633 = vunpack.c.l.b16 %v1621
    %v1634 = vunpack.c.l.b16 %v1622
    %v1635 = vpack.c.b16 %v1632, %v1631
    %v1636 = vpack.c.b16 %v1634, %v1633
    %v1640 = vsel %vm119, %v1617, 0
    %1642 = vmatprep.subr.bf16.mxu0 0
    %1643 = vmatpush1.bf16.msra.mxu0 %v1635
    %1644 = vmatprep.subr.bf16.mxu0 0
    %1645 = vmatpush1.bf16.msra.mxu0 %v1636
    %1646 = vmatprep.subr.bf16.mxu0 0
    %1647 = vmatpush1.bf16.msra.mxu0 0
    %1648 = vmatprep.subr.bf16.mxu0 0
    %1649 = vmatpush1.bf16.msra.mxu0 0
    %1650 = vmatprep.subr.bf16.mxu0 0
    %1651 = vmatpush1.bf16.msra.mxu0 0
    %1652 = vmatprep.subr.bf16.mxu0 0
    %1653 = vmatpush1.bf16.msra.mxu0 0
    %1654 = vmatprep.subr.bf16.mxu0 0
    %1655 = vmatpush1.bf16.msra.mxu0 0
    %1656 = vmatprep.subr.bf16.mxu0 0
    %1657 = vmatpush1.bf16.msra.mxu0 0
    %1658 = vmatprep.subr.bf16.mxu0 0
    %1659 = vmatpush1.bf16.msra.mxu0 0
    %1660 = vmatprep.subr.bf16.mxu0 0
    %1661 = vmatpush1.bf16.msra.mxu0 0
    %1662 = vmatprep.subr.bf16.mxu0 0
    %1663 = vmatpush1.bf16.msra.mxu0 0
    %1664 = vmatprep.subr.bf16.mxu0 0
    %1665 = vmatpush1.bf16.msra.mxu0 0
    %1666 = vmatprep.subr.bf16.mxu0 0
    %1667 = vmatpush1.bf16.msra.mxu0 0
    %1668 = vmatprep.subr.bf16.mxu0 0
    %1669 = vmatpush1.bf16.msra.mxu0 0
    %1670 = vmatprep.subr.bf16.mxu0 0
    %1671 = vmatpush1.bf16.msra.mxu0 0
    %1672 = vmatprep.subr.bf16.mxu0 0
    %1673 = vmatpush1.bf16.msra.mxu0 0
    %1674 = vmatprep.mubr.bf16.mxu0 0
    %1675 = vmatmul.mubr.bf16.gmra.mrb[0].mxu0 %v1640
    %v1676 = vpop.f32.mrb[0].mxu0
    %v1677 = vadd.f32 %v1626, %v1676
    %v1678 = vpop.f32.mrb[0].mxu0
    %v1679 = vpop.f32.mrb[0].mxu0
    %v1680 = vadd.f32 %v1626, %v1679
    %v1681 = vpop.f32.mrb[0].mxu0
    %1682 = vdwg.mxu0
    %s1683 = scalar_lea.vmem %s6, 16
    %v1684 = vld [vmem:[%s1683] sm:$0xf]
    %v1685 = vld [vmem:[%s1683 + $0x4] sm:$0xf]
    %v1686 = vld [vmem:[%s1683 + $0x8] sm:$0xf]
    %v1687 = vld [vmem:[%s1683 + $0xc] sm:$0xf]
    %v1688 = vpack.c.bf16 %v1677, %v1677
    %v1689 = vpack.c.bf16 %v1680, %v1680
    %1691 = vrot.lane.b32.xlu0 %v1688, 96
    %v1692 = vpop.permute.xlu0 %1691
    %v1694 = vsel %vm237, %v1688, 0
    %v1697 = vsel %vm237, %v1692, 0
    %1699 = vmatprep.subr.bf16.mxu0 0
    %1700 = vmatpush1.bf16.xpose.msra.mxu0 %v1697
    %1701 = vmatprep.subr.bf16.mxu0 0
    %1702 = vmatpush1.bf16.xpose.msra.mxu0 0
    %1703 = vmatprep.subr.bf16.mxu0 0
    %1704 = vmatpush1.bf16.xpose.msra.mxu0 0
    %1705 = vmatprep.subr.bf16.mxu0 0
    %1706 = vmatpush1.bf16.xpose.msra.mxu0 0
    %1707 = vmatprep.subr.bf16.mxu0 0
    %1708 = vmatpush1.bf16.xpose.msra.mxu0 0
    %1709 = vmatprep.subr.bf16.mxu0 0
    %1710 = vmatpush1.bf16.xpose.msra.mxu0 0
    %1711 = vmatprep.subr.bf16.mxu0 0
    %1712 = vmatpush1.bf16.xpose.msra.mxu0 0
    %1713 = vmatprep.subr.bf16.mxu0 0
    %1714 = vmatpush1.bf16.xpose.msra.mxu0 0
    %1715 = vmatprep.subr.bf16.mxu0 0
    %1716 = vmatpush1.bf16.xpose.msra.mxu0 0
    %1717 = vmatprep.subr.bf16.mxu0 0
    %1718 = vmatpush1.bf16.xpose.msra.mxu0 0
    %1719 = vmatprep.subr.bf16.mxu0 0
    %1720 = vmatpush1.bf16.xpose.msra.mxu0 0
    %1721 = vmatprep.subr.bf16.mxu0 0
    %1722 = vmatpush1.bf16.xpose.msra.mxu0 0
    %1723 = vmatprep.subr.bf16.mxu0 0
    %1724 = vmatpush1.bf16.xpose.msra.mxu0 0
    %1725 = vmatprep.subr.bf16.mxu0 0
    %1726 = vmatpush1.bf16.xpose.msra.mxu0 0
    %1727 = vmatprep.subr.bf16.mxu0 0
    %1728 = vmatpush1.bf16.xpose.msra.mxu0 0
    %1729 = vmatprep.subr.bf16.mxu0 0
    %1730 = vmatpush1.bf16.xpose.msra.mxu0 0
    %1731 = vmatprep.mubr.bf16.mxu0 0
    %1732 = vmatmul.mubr.bf16.gmra.mrb[0].mxu0 %v1694
    %v1733 = vpop.f32.mrb[0].mxu0
    %v1734 = vadd.f32 0.0, %v1733
    %v1735 = vpop.f32.mrb[0].mxu0
    %v1736 = vpop.f32.mrb[0].mxu0
    %v1737 = vpop.f32.mrb[0].mxu0
    %1738 = vdwg.mxu0
    %1740 = vrot.lane.b32.xlu0 %v1689, 96
    %v1741 = vpop.permute.xlu0 %1740
    %v1743 = vsel %vm237, %v1689, 0
    %v1746 = vsel %vm237, %v1741, 0
    %1748 = vmatprep.subr.bf16.mxu0 0
    %1749 = vmatpush1.bf16.xpose.msra.mxu0 %v1746
    %1750 = vmatprep.subr.bf16.mxu0 0
    %1751 = vmatpush1.bf16.xpose.msra.mxu0 0
    %1752 = vmatprep.subr.bf16.mxu0 0
    %1753 = vmatpush1.bf16.xpose.msra.mxu0 0
    %1754 = vmatprep.subr.bf16.mxu0 0
    %1755 = vmatpush1.bf16.xpose.msra.mxu0 0
    %1756 = vmatprep.subr.bf16.mxu0 0
    %1757 = vmatpush1.bf16.xpose.msra.mxu0 0
    %1758 = vmatprep.subr.bf16.mxu0 0
    %1759 = vmatpush1.bf16.xpose.msra.mxu0 0
    %1760 = vmatprep.subr.bf16.mxu0 0
    %1761 = vmatpush1.bf16.xpose.msra.mxu0 0
    %1762 = vmatprep.subr.bf16.mxu0 0
    %1763 = vmatpush1.bf16.xpose.msra.mxu0 0
    %1764 = vmatprep.subr.bf16.mxu0 0
    %1765 = vmatpush1.bf16.xpose.msra.mxu0 0
    %1766 = vmatprep.subr.bf16.mxu0 0
    %1767 = vmatpush1.bf16.xpose.msra.mxu0 0
    %1768 = vmatprep.subr.bf16.mxu0 0
    %1769 = vmatpush1.bf16.xpose.msra.mxu0 0
    %1770 = vmatprep.subr.bf16.mxu0 0
    %1771 = vmatpush1.bf16.xpose.msra.mxu0 0
    %1772 = vmatprep.subr.bf16.mxu0 0
    %1773 = vmatpush1.bf16.xpose.msra.mxu0 0
    %1774 = vmatprep.subr.bf16.mxu0 0
    %1775 = vmatpush1.bf16.xpose.msra.mxu0 0
    %1776 = vmatprep.subr.bf16.mxu0 0
    %1777 = vmatpush1.bf16.xpose.msra.mxu0 0
    %1778 = vmatprep.subr.bf16.mxu0 0
    %1779 = vmatpush1.bf16.xpose.msra.mxu0 0
    %1780 = vmatprep.mubr.bf16.mxu0 0
    %1781 = vmatmul.mubr.bf16.gmra.mrb[0].mxu0 %v1743
    %v1782 = vpop.f32.mrb[0].mxu0
    %v1783 = vadd.f32 0.0, %v1782
    %v1784 = vpop.f32.mrb[0].mxu0
    %v1785 = vpop.f32.mrb[0].mxu0
    %v1786 = vpop.f32.mrb[0].mxu0
    %1787 = vdwg.mxu0
    %v1788 = vmul.f32 %v1734, 0.35355338
    %v1789 = vmul.f32 %v1783, 0.35355338
    %v1790 = vsel %vm117, %v1788, -1e+09
    %v1791 = vsel %vm117, %v1789, -1e+09
    %v1792 = vsel %vm237, %v1790, -inf
    %1793 = vmax.xlane.f32.xlu0 %v1792
    %v1794 = vpop.xlane.xlu0 %1793
    %v1795 = vsel %vm237, %v1791, -inf
    %1796 = vmax.xlane.f32.xlu0 %v1795
    %v1797 = vpop.xlane.xlu0 %1796
    %v1798 = vsub.f32 %v1790, %v1794
    %v1799 = vsub.f32 %v1791, %v1797
    %v1800 = vmul.f32 %v1798, 1.442695
    %v1801 = vpow.pop %v1800
    %v1802 = vmul.f32 %v1799, 1.442695
    %v1803 = vpow.pop %v1802
    %v1804 = vsel %vm237, %v1801, 0.0
    %1805 = vadd.xlane.f32.xlu0 %v1804
    %v1806 = vpop.xlane.xlu0 %1805
    %v1807 = vsel %vm237, %v1803, 0.0
    %1808 = vadd.xlane.f32.xlu0 %v1807
    %v1809 = vpop.xlane.xlu0 %1808
    %v1810 = vrcp.pop %v1806
    %v1811 = vrcp.pop %v1809
    %v1812 = vmul.f32 %v1801, %v1810
    %v1813 = vmul.f32 %v1803, %v1811
    %v1814 = vpack.c.bf16 %v1812, %v1812
    %v1815 = vpack.c.bf16 %v1813, %v1813
    %1816 = vrot.lane.b32.xlu0 %v1688, 64
    %v1817 = vpop.permute.xlu0 %1816
    %v1819 = vsel %vm237, %v1814, 0
    %v1822 = vsel %vm366, %v1817, 0
    %1824 = vmatprep.subr.bf16.mxu0 0
    %1825 = vmatpush1.bf16.msra.mxu0 %v1822
    %1826 = vmatprep.subr.bf16.mxu0 0
    %1827 = vmatpush1.bf16.msra.mxu0 0
    %1828 = vmatprep.subr.bf16.mxu0 0
    %1829 = vmatpush1.bf16.msra.mxu0 0
    %1830 = vmatprep.subr.bf16.mxu0 0
    %1831 = vmatpush1.bf16.msra.mxu0 0
    %1832 = vmatprep.subr.bf16.mxu0 0
    %1833 = vmatpush1.bf16.msra.mxu0 0
    %1834 = vmatprep.subr.bf16.mxu0 0
    %1835 = vmatpush1.bf16.msra.mxu0 0
    %1836 = vmatprep.subr.bf16.mxu0 0
    %1837 = vmatpush1.bf16.msra.mxu0 0
    %1838 = vmatprep.subr.bf16.mxu0 0
    %1839 = vmatpush1.bf16.msra.mxu0 0
    %1840 = vmatprep.subr.bf16.mxu0 0
    %1841 = vmatpush1.bf16.msra.mxu0 0
    %1842 = vmatprep.subr.bf16.mxu0 0
    %1843 = vmatpush1.bf16.msra.mxu0 0
    %1844 = vmatprep.subr.bf16.mxu0 0
    %1845 = vmatpush1.bf16.msra.mxu0 0
    %1846 = vmatprep.subr.bf16.mxu0 0
    %1847 = vmatpush1.bf16.msra.mxu0 0
    %1848 = vmatprep.subr.bf16.mxu0 0
    %1849 = vmatpush1.bf16.msra.mxu0 0
    %1850 = vmatprep.subr.bf16.mxu0 0
    %1851 = vmatpush1.bf16.msra.mxu0 0
    %1852 = vmatprep.subr.bf16.mxu0 0
    %1853 = vmatpush1.bf16.msra.mxu0 0
    %1854 = vmatprep.subr.bf16.mxu0 0
    %1855 = vmatpush1.bf16.msra.mxu0 0
    %1856 = vmatprep.mubr.bf16.mxu0 0
    %1857 = vmatmul.mubr.bf16.gmra.mrb[0].mxu0 %v1819
    %v1858 = vpop.f32.mrb[0].mxu0
    %v1859 = vadd.f32 0.0, %v1858
    %v1860 = vpop.f32.mrb[0].mxu0
    %v1861 = vpop.f32.mrb[0].mxu0
    %v1862 = vpop.f32.mrb[0].mxu0
    %1863 = vdwg.mxu0
    %1864 = vrot.lane.b32.xlu0 %v1689, 64
    %v1865 = vpop.permute.xlu0 %1864
    %v1867 = vsel %vm237, %v1815, 0
    %v1870 = vsel %vm366, %v1865, 0
    %1872 = vmatprep.subr.bf16.mxu0 0
    %1873 = vmatpush1.bf16.msra.mxu0 %v1870
    %1874 = vmatprep.subr.bf16.mxu0 0
    %1875 = vmatpush1.bf16.msra.mxu0 0
    %1876 = vmatprep.subr.bf16.mxu0 0
    %1877 = vmatpush1.bf16.msra.mxu0 0
    %1878 = vmatprep.subr.bf16.mxu0 0
    %1879 = vmatpush1.bf16.msra.mxu0 0
    %1880 = vmatprep.subr.bf16.mxu0 0
    %1881 = vmatpush1.bf16.msra.mxu0 0
    %1882 = vmatprep.subr.bf16.mxu0 0
    %1883 = vmatpush1.bf16.msra.mxu0 0
    %1884 = vmatprep.subr.bf16.mxu0 0
    %1885 = vmatpush1.bf16.msra.mxu0 0
    %1886 = vmatprep.subr.bf16.mxu0 0
    %1887 = vmatpush1.bf16.msra.mxu0 0
    %1888 = vmatprep.subr.bf16.mxu0 0
    %1889 = vmatpush1.bf16.msra.mxu0 0
    %1890 = vmatprep.subr.bf16.mxu0 0
    %1891 = vmatpush1.bf16.msra.mxu0 0
    %1892 = vmatprep.subr.bf16.mxu0 0
    %1893 = vmatpush1.bf16.msra.mxu0 0
    %1894 = vmatprep.subr.bf16.mxu0 0
    %1895 = vmatpush1.bf16.msra.mxu0 0
    %1896 = vmatprep.subr.bf16.mxu0 0
    %1897 = vmatpush1.bf16.msra.mxu0 0
    %1898 = vmatprep.subr.bf16.mxu0 0
    %1899 = vmatpush1.bf16.msra.mxu0 0
    %1900 = vmatprep.subr.bf16.mxu0 0
    %1901 = vmatpush1.bf16.msra.mxu0 0
    %1902 = vmatprep.subr.bf16.mxu0 0
    %1903 = vmatpush1.bf16.msra.mxu0 0
    %1904 = vmatprep.mubr.bf16.mxu0 0
    %1905 = vmatmul.mubr.bf16.gmra.mrb[0].mxu0 %v1867
    %v1906 = vpop.f32.mrb[0].mxu0
    %v1907 = vadd.f32 0.0, %v1906
    %v1908 = vpop.f32.mrb[0].mxu0
    %v1909 = vpop.f32.mrb[0].mxu0
    %v1910 = vpop.f32.mrb[0].mxu0
    %1911 = vdwg.mxu0
    %v1912 = vpack.c.bf16 %v1907, %v1859
    %1913 = vrot.lane.b32.xlu0 %v1688, 120
    %v1914 = vpop.permute.xlu0 %1913
    %1915 = vrot.lane.b32.xlu0 %v1688, 88
    %v1916 = vpop.permute.xlu0 %1915
    %v1918 = vsel %vm237, %v1914, 0
    %v1921 = vsel %vm237, %v1916, 0
    %1923 = vmatprep.subr.bf16.mxu0 0
    %1924 = vmatpush1.bf16.xpose.msra.mxu0 %v1921
    %1925 = vmatprep.subr.bf16.mxu0 0
    %1926 = vmatpush1.bf16.xpose.msra.mxu0 0
    %1927 = vmatprep.subr.bf16.mxu0 0
    %1928 = vmatpush1.bf16.xpose.msra.mxu0 0
    %1929 = vmatprep.subr.bf16.mxu0 0
    %1930 = vmatpush1.bf16.xpose.msra.mxu0 0
    %1931 = vmatprep.subr.bf16.mxu0 0
    %1932 = vmatpush1.bf16.xpose.msra.mxu0 0
    %1933 = vmatprep.subr.bf16.mxu0 0
    %1934 = vmatpush1.bf16.xpose.msra.mxu0 0
    %1935 = vmatprep.subr.bf16.mxu0 0
    %1936 = vmatpush1.bf16.xpose.msra.mxu0 0
    %1937 = vmatprep.subr.bf16.mxu0 0
    %1938 = vmatpush1.bf16.xpose.msra.mxu0 0
    %1939 = vmatprep.subr.bf16.mxu0 0
    %1940 = vmatpush1.bf16.xpose.msra.mxu0 0
    %1941 = vmatprep.subr.bf16.mxu0 0
    %1942 = vmatpush1.bf16.xpose.msra.mxu0 0
    %1943 = vmatprep.subr.bf16.mxu0 0
    %1944 = vmatpush1.bf16.xpose.msra.mxu0 0
    %1945 = vmatprep.subr.bf16.mxu0 0
    %1946 = vmatpush1.bf16.xpose.msra.mxu0 0
    %1947 = vmatprep.subr.bf16.mxu0 0
    %1948 = vmatpush1.bf16.xpose.msra.mxu0 0
    %1949 = vmatprep.subr.bf16.mxu0 0
    %1950 = vmatpush1.bf16.xpose.msra.mxu0 0
    %1951 = vmatprep.subr.bf16.mxu0 0
    %1952 = vmatpush1.bf16.xpose.msra.mxu0 0
    %1953 = vmatprep.subr.bf16.mxu0 0
    %1954 = vmatpush1.bf16.xpose.msra.mxu0 0
    %1955 = vmatprep.mubr.bf16.mxu0 0
    %1956 = vmatmul.mubr.bf16.gmra.mrb[0].mxu0 %v1918
    %v1957 = vpop.f32.mrb[0].mxu0
    %v1958 = vadd.f32 0.0, %v1957
    %v1959 = vpop.f32.mrb[0].mxu0
    %v1960 = vpop.f32.mrb[0].mxu0
    %v1961 = vpop.f32.mrb[0].mxu0
    %1962 = vdwg.mxu0
    %1963 = vrot.lane.b32.xlu0 %v1689, 120
    %v1964 = vpop.permute.xlu0 %1963
    %1965 = vrot.lane.b32.xlu0 %v1689, 88
    %v1966 = vpop.permute.xlu0 %1965
    %v1968 = vsel %vm237, %v1964, 0
    %v1971 = vsel %vm237, %v1966, 0
    %1973 = vmatprep.subr.bf16.mxu0 0
    %1974 = vmatpush1.bf16.xpose.msra.mxu0 %v1971
    %1975 = vmatprep.subr.bf16.mxu0 0
    %1976 = vmatpush1.bf16.xpose.msra.mxu0 0
    %1977 = vmatprep.subr.bf16.mxu0 0
    %1978 = vmatpush1.bf16.xpose.msra.mxu0 0
    %1979 = vmatprep.subr.bf16.mxu0 0
    %1980 = vmatpush1.bf16.xpose.msra.mxu0 0
    %1981 = vmatprep.subr.bf16.mxu0 0
    %1982 = vmatpush1.bf16.xpose.msra.mxu0 0
    %1983 = vmatprep.subr.bf16.mxu0 0
    %1984 = vmatpush1.bf16.xpose.msra.mxu0 0
    %1985 = vmatprep.subr.bf16.mxu0 0
    %1986 = vmatpush1.bf16.xpose.msra.mxu0 0
    %1987 = vmatprep.subr.bf16.mxu0 0
    %1988 = vmatpush1.bf16.xpose.msra.mxu0 0
    %1989 = vmatprep.subr.bf16.mxu0 0
    %1990 = vmatpush1.bf16.xpose.msra.mxu0 0
    %1991 = vmatprep.subr.bf16.mxu0 0
    %1992 = vmatpush1.bf16.xpose.msra.mxu0 0
    %1993 = vmatprep.subr.bf16.mxu0 0
    %1994 = vmatpush1.bf16.xpose.msra.mxu0 0
    %1995 = vmatprep.subr.bf16.mxu0 0
    %1996 = vmatpush1.bf16.xpose.msra.mxu0 0
    %1997 = vmatprep.subr.bf16.mxu0 0
    %1998 = vmatpush1.bf16.xpose.msra.mxu0 0
    %1999 = vmatprep.subr.bf16.mxu0 0
    %2000 = vmatpush1.bf16.xpose.msra.mxu0 0
    %2001 = vmatprep.subr.bf16.mxu0 0
    %2002 = vmatpush1.bf16.xpose.msra.mxu0 0
    %2003 = vmatprep.subr.bf16.mxu0 0
    %2004 = vmatpush1.bf16.xpose.msra.mxu0 0
    %2005 = vmatprep.mubr.bf16.mxu0 0
    %2006 = vmatmul.mubr.bf16.gmra.mrb[0].mxu0 %v1968
    %v2007 = vpop.f32.mrb[0].mxu0
    %v2008 = vadd.f32 0.0, %v2007
    %v2009 = vpop.f32.mrb[0].mxu0
    %v2010 = vpop.f32.mrb[0].mxu0
    %v2011 = vpop.f32.mrb[0].mxu0
    %2012 = vdwg.mxu0
    %v2013 = vmul.f32 %v1958, 0.35355338
    %v2014 = vmul.f32 %v2008, 0.35355338
    %v2015 = vsel %vm117, %v2013, -1e+09
    %v2016 = vsel %vm117, %v2014, -1e+09
    %v2017 = vsel %vm237, %v2015, -inf
    %2018 = vmax.xlane.f32.xlu0 %v2017
    %v2019 = vpop.xlane.xlu0 %2018
    %v2020 = vsel %vm237, %v2016, -inf
    %2021 = vmax.xlane.f32.xlu0 %v2020
    %v2022 = vpop.xlane.xlu0 %2021
    %v2023 = vsub.f32 %v2015, %v2019
    %v2024 = vsub.f32 %v2016, %v2022
    %v2025 = vmul.f32 %v2023, 1.442695
    %v2026 = vpow.pop %v2025
    %v2027 = vmul.f32 %v2024, 1.442695
    %v2028 = vpow.pop %v2027
    %v2029 = vsel %vm237, %v2026, 0.0
    %2030 = vadd.xlane.f32.xlu0 %v2029
    %v2031 = vpop.xlane.xlu0 %2030
    %v2032 = vsel %vm237, %v2028, 0.0
    %2033 = vadd.xlane.f32.xlu0 %v2032
    %v2034 = vpop.xlane.xlu0 %2033
    %v2035 = vrcp.pop %v2031
    %v2036 = vrcp.pop %v2034
    %v2037 = vmul.f32 %v2026, %v2035
    %v2038 = vmul.f32 %v2028, %v2036
    %v2039 = vpack.c.bf16 %v2037, %v2037
    %v2040 = vpack.c.bf16 %v2038, %v2038
    %2041 = vrot.lane.b32.xlu0 %v1688, 56
    %v2042 = vpop.permute.xlu0 %2041
    %v2044 = vsel %vm237, %v2039, 0
    %v2047 = vsel %vm366, %v2042, 0
    %2049 = vmatprep.subr.bf16.mxu0 0
    %2050 = vmatpush1.bf16.msra.mxu0 %v2047
    %2051 = vmatprep.subr.bf16.mxu0 0
    %2052 = vmatpush1.bf16.msra.mxu0 0
    %2053 = vmatprep.subr.bf16.mxu0 0
    %2054 = vmatpush1.bf16.msra.mxu0 0
    %2055 = vmatprep.subr.bf16.mxu0 0
    %2056 = vmatpush1.bf16.msra.mxu0 0
    %2057 = vmatprep.subr.bf16.mxu0 0
    %2058 = vmatpush1.bf16.msra.mxu0 0
    %2059 = vmatprep.subr.bf16.mxu0 0
    %2060 = vmatpush1.bf16.msra.mxu0 0
    %2061 = vmatprep.subr.bf16.mxu0 0
    %2062 = vmatpush1.bf16.msra.mxu0 0
    %2063 = vmatprep.subr.bf16.mxu0 0
    %2064 = vmatpush1.bf16.msra.mxu0 0
    %2065 = vmatprep.subr.bf16.mxu0 0
    %2066 = vmatpush1.bf16.msra.mxu0 0
    %2067 = vmatprep.subr.bf16.mxu0 0
    %2068 = vmatpush1.bf16.msra.mxu0 0
    %2069 = vmatprep.subr.bf16.mxu0 0
    %2070 = vmatpush1.bf16.msra.mxu0 0
    %2071 = vmatprep.subr.bf16.mxu0 0
    %2072 = vmatpush1.bf16.msra.mxu0 0
    %2073 = vmatprep.subr.bf16.mxu0 0
    %2074 = vmatpush1.bf16.msra.mxu0 0
    %2075 = vmatprep.subr.bf16.mxu0 0
    %2076 = vmatpush1.bf16.msra.mxu0 0
    %2077 = vmatprep.subr.bf16.mxu0 0
    %2078 = vmatpush1.bf16.msra.mxu0 0
    %2079 = vmatprep.subr.bf16.mxu0 0
    %2080 = vmatpush1.bf16.msra.mxu0 0
    %2081 = vmatprep.mubr.bf16.mxu0 0
    %2082 = vmatmul.mubr.bf16.gmra.mrb[0].mxu0 %v2044
    %v2083 = vpop.f32.mrb[0].mxu0
    %v2084 = vadd.f32 0.0, %v2083
    %v2085 = vpop.f32.mrb[0].mxu0
    %v2086 = vpop.f32.mrb[0].mxu0
    %v2087 = vpop.f32.mrb[0].mxu0
    %2088 = vdwg.mxu0
    %2089 = vrot.lane.b32.xlu0 %v1689, 56
    %v2090 = vpop.permute.xlu0 %2089
    %v2092 = vsel %vm237, %v2040, 0
    %v2095 = vsel %vm366, %v2090, 0
    %2097 = vmatprep.subr.bf16.mxu0 0
    %2098 = vmatpush1.bf16.msra.mxu0 %v2095
    %2099 = vmatprep.subr.bf16.mxu0 0
    %2100 = vmatpush1.bf16.msra.mxu0 0
    %2101 = vmatprep.subr.bf16.mxu0 0
    %2102 = vmatpush1.bf16.msra.mxu0 0
    %2103 = vmatprep.subr.bf16.mxu0 0
    %2104 = vmatpush1.bf16.msra.mxu0 0
    %2105 = vmatprep.subr.bf16.mxu0 0
    %2106 = vmatpush1.bf16.msra.mxu0 0
    %2107 = vmatprep.subr.bf16.mxu0 0
    %2108 = vmatpush1.bf16.msra.mxu0 0
    %2109 = vmatprep.subr.bf16.mxu0 0
    %2110 = vmatpush1.bf16.msra.mxu0 0
    %2111 = vmatprep.subr.bf16.mxu0 0
    %2112 = vmatpush1.bf16.msra.mxu0 0
    %2113 = vmatprep.subr.bf16.mxu0 0
    %2114 = vmatpush1.bf16.msra.mxu0 0
    %2115 = vmatprep.subr.bf16.mxu0 0
    %2116 = vmatpush1.bf16.msra.mxu0 0
    %2117 = vmatprep.subr.bf16.mxu0 0
    %2118 = vmatpush1.bf16.msra.mxu0 0
    %2119 = vmatprep.subr.bf16.mxu0 0
    %2120 = vmatpush1.bf16.msra.mxu0 0
    %2121 = vmatprep.subr.bf16.mxu0 0
    %2122 = vmatpush1.bf16.msra.mxu0 0
    %2123 = vmatprep.subr.bf16.mxu0 0
    %2124 = vmatpush1.bf16.msra.mxu0 0
    %2125 = vmatprep.subr.bf16.mxu0 0
    %2126 = vmatpush1.bf16.msra.mxu0 0
    %2127 = vmatprep.subr.bf16.mxu0 0
    %2128 = vmatpush1.bf16.msra.mxu0 0
    %2129 = vmatprep.mubr.bf16.mxu0 0
    %2130 = vmatmul.mubr.bf16.gmra.mrb[0].mxu0 %v2092
    %v2131 = vpop.f32.mrb[0].mxu0
    %v2132 = vadd.f32 0.0, %v2131
    %v2133 = vpop.f32.mrb[0].mxu0
    %v2134 = vpop.f32.mrb[0].mxu0
    %v2135 = vpop.f32.mrb[0].mxu0
    %2136 = vdwg.mxu0
    %v2137 = vpack.c.bf16 %v2132, %v2084
    %v2139 = vsel %vm237, %v2137, 0
    %v2142 = vsel %vm366, %v1685, 0
    %2144 = vmatprep.subr.bf16.mxu0 0
    %2145 = vmatpush1.bf16.msra.mxu0 %v2142
    %2146 = vmatprep.subr.bf16.mxu0 0
    %2147 = vmatpush1.bf16.msra.mxu0 0
    %2148 = vmatprep.subr.bf16.mxu0 0
    %2149 = vmatpush1.bf16.msra.mxu0 0
    %2150 = vmatprep.subr.bf16.mxu0 0
    %2151 = vmatpush1.bf16.msra.mxu0 0
    %2152 = vmatprep.subr.bf16.mxu0 0
    %2153 = vmatpush1.bf16.msra.mxu0 0
    %2154 = vmatprep.subr.bf16.mxu0 0
    %2155 = vmatpush1.bf16.msra.mxu0 0
    %2156 = vmatprep.subr.bf16.mxu0 0
    %2157 = vmatpush1.bf16.msra.mxu0 0
    %2158 = vmatprep.subr.bf16.mxu0 0
    %2159 = vmatpush1.bf16.msra.mxu0 0
    %2160 = vmatprep.subr.bf16.mxu0 0
    %2161 = vmatpush1.bf16.msra.mxu0 0
    %2162 = vmatprep.subr.bf16.mxu0 0
    %2163 = vmatpush1.bf16.msra.mxu0 0
    %2164 = vmatprep.subr.bf16.mxu0 0
    %2165 = vmatpush1.bf16.msra.mxu0 0
    %2166 = vmatprep.subr.bf16.mxu0 0
    %2167 = vmatpush1.bf16.msra.mxu0 0
    %2168 = vmatprep.subr.bf16.mxu0 0
    %2169 = vmatpush1.bf16.msra.mxu0 0
    %2170 = vmatprep.subr.bf16.mxu0 0
    %2171 = vmatpush1.bf16.msra.mxu0 0
    %2172 = vmatprep.subr.bf16.mxu0 0
    %2173 = vmatpush1.bf16.msra.mxu0 0
    %2174 = vmatprep.subr.bf16.mxu0 0
    %2175 = vmatpush1.bf16.msra.mxu0 0
    %2176 = vmatprep.mubr.bf16.mxu0 0
    %2177 = vmatmul.mubr.bf16.gmra.mrb[0].mxu0 %v2139
    %v2178 = vpop.f32.mrb[0].mxu0
    %v2179 = vadd.f32 0.0, %v2178
    %v2180 = vpop.f32.mrb[0].mxu0
    %v2181 = vpop.f32.mrb[0].mxu0
    %v2182 = vadd.f32 0.0, %v2181
    %v2183 = vpop.f32.mrb[0].mxu0
    %2184 = vdwg.mxu0
    %v2186 = vsel %vm237, %v1912, 0
    %v2189 = vsel %vm366, %v1684, 0
    %2191 = vmatprep.subr.bf16.mxu0 0
    %2192 = vmatpush1.bf16.msra.mxu0 %v2189
    %2193 = vmatprep.subr.bf16.mxu0 0
    %2194 = vmatpush1.bf16.msra.mxu0 0
    %2195 = vmatprep.subr.bf16.mxu0 0
    %2196 = vmatpush1.bf16.msra.mxu0 0
    %2197 = vmatprep.subr.bf16.mxu0 0
    %2198 = vmatpush1.bf16.msra.mxu0 0
    %2199 = vmatprep.subr.bf16.mxu0 0
    %2200 = vmatpush1.bf16.msra.mxu0 0
    %2201 = vmatprep.subr.bf16.mxu0 0
    %2202 = vmatpush1.bf16.msra.mxu0 0
    %2203 = vmatprep.subr.bf16.mxu0 0
    %2204 = vmatpush1.bf16.msra.mxu0 0
    %2205 = vmatprep.subr.bf16.mxu0 0
    %2206 = vmatpush1.bf16.msra.mxu0 0
    %2207 = vmatprep.subr.bf16.mxu0 0
    %2208 = vmatpush1.bf16.msra.mxu0 0
    %2209 = vmatprep.subr.bf16.mxu0 0
    %2210 = vmatpush1.bf16.msra.mxu0 0
    %2211 = vmatprep.subr.bf16.mxu0 0
    %2212 = vmatpush1.bf16.msra.mxu0 0
    %2213 = vmatprep.subr.bf16.mxu0 0
    %2214 = vmatpush1.bf16.msra.mxu0 0
    %2215 = vmatprep.subr.bf16.mxu0 0
    %2216 = vmatpush1.bf16.msra.mxu0 0
    %2217 = vmatprep.subr.bf16.mxu0 0
    %2218 = vmatpush1.bf16.msra.mxu0 0
    %2219 = vmatprep.subr.bf16.mxu0 0
    %2220 = vmatpush1.bf16.msra.mxu0 0
    %2221 = vmatprep.subr.bf16.mxu0 0
    %2222 = vmatpush1.bf16.msra.mxu0 0
    %2223 = vmatprep.mubr.bf16.mxu0 0
    %2224 = vmatmul.mubr.bf16.gmra.mrb[0].mxu0 %v2186
    %v2225 = vpop.f32.mrb[0].mxu0
    %v2226 = vadd.f32 %v2179, %v2225
    %v2227 = vpop.f32.mrb[0].mxu0
    %v2228 = vpop.f32.mrb[0].mxu0
    %v2229 = vadd.f32 %v2182, %v2228
    %v2230 = vpop.f32.mrb[0].mxu0
    %2231 = vdwg.mxu0
    %2232 = vrot.lane.b32.xlu0 %v1688, 112
    %v2233 = vpop.permute.xlu0 %2232
    %2234 = vrot.lane.b32.xlu0 %v1688, 80
    %v2235 = vpop.permute.xlu0 %2234
    %v2237 = vsel %vm237, %v2233, 0
    %v2240 = vsel %vm237, %v2235, 0
    %2242 = vmatprep.subr.bf16.mxu0 0
    %2243 = vmatpush1.bf16.xpose.msra.mxu0 %v2240
    %2244 = vmatprep.subr.bf16.mxu0 0
    %2245 = vmatpush1.bf16.xpose.msra.mxu0 0
    %2246 = vmatprep.subr.bf16.mxu0 0
    %2247 = vmatpush1.bf16.xpose.msra.mxu0 0
    %2248 = vmatprep.subr.bf16.mxu0 0
    %2249 = vmatpush1.bf16.xpose.msra.mxu0 0
    %2250 = vmatprep.subr.bf16.mxu0 0
    %2251 = vmatpush1.bf16.xpose.msra.mxu0 0
    %2252 = vmatprep.subr.bf16.mxu0 0
    %2253 = vmatpush1.bf16.xpose.msra.mxu0 0
    %2254 = vmatprep.subr.bf16.mxu0 0
    %2255 = vmatpush1.bf16.xpose.msra.mxu0 0
    %2256 = vmatprep.subr.bf16.mxu0 0
    %2257 = vmatpush1.bf16.xpose.msra.mxu0 0
    %2258 = vmatprep.subr.bf16.mxu0 0
    %2259 = vmatpush1.bf16.xpose.msra.mxu0 0
    %2260 = vmatprep.subr.bf16.mxu0 0
    %2261 = vmatpush1.bf16.xpose.msra.mxu0 0
    %2262 = vmatprep.subr.bf16.mxu0 0
    %2263 = vmatpush1.bf16.xpose.msra.mxu0 0
    %2264 = vmatprep.subr.bf16.mxu0 0
    %2265 = vmatpush1.bf16.xpose.msra.mxu0 0
    %2266 = vmatprep.subr.bf16.mxu0 0
    %2267 = vmatpush1.bf16.xpose.msra.mxu0 0
    %2268 = vmatprep.subr.bf16.mxu0 0
    %2269 = vmatpush1.bf16.xpose.msra.mxu0 0
    %2270 = vmatprep.subr.bf16.mxu0 0
    %2271 = vmatpush1.bf16.xpose.msra.mxu0 0
    %2272 = vmatprep.subr.bf16.mxu0 0
    %2273 = vmatpush1.bf16.xpose.msra.mxu0 0
    %2274 = vmatprep.mubr.bf16.mxu0 0
    %2275 = vmatmul.mubr.bf16.gmra.mrb[0].mxu0 %v2237
    %v2276 = vpop.f32.mrb[0].mxu0
    %v2277 = vadd.f32 0.0, %v2276
    %v2278 = vpop.f32.mrb[0].mxu0
    %v2279 = vpop.f32.mrb[0].mxu0
    %v2280 = vpop.f32.mrb[0].mxu0
    %2281 = vdwg.mxu0
    %2282 = vrot.lane.b32.xlu0 %v1689, 112
    %v2283 = vpop.permute.xlu0 %2282
    %2284 = vrot.lane.b32.xlu0 %v1689, 80
    %v2285 = vpop.permute.xlu0 %2284
    %v2287 = vsel %vm237, %v2283, 0
    %v2290 = vsel %vm237, %v2285, 0
    %2292 = vmatprep.subr.bf16.mxu0 0
    %2293 = vmatpush1.bf16.xpose.msra.mxu0 %v2290
    %2294 = vmatprep.subr.bf16.mxu0 0
    %2295 = vmatpush1.bf16.xpose.msra.mxu0 0
    %2296 = vmatprep.subr.bf16.mxu0 0
    %2297 = vmatpush1.bf16.xpose.msra.mxu0 0
    %2298 = vmatprep.subr.bf16.mxu0 0
    %2299 = vmatpush1.bf16.xpose.msra.mxu0 0
    %2300 = vmatprep.subr.bf16.mxu0 0
    %2301 = vmatpush1.bf16.xpose.msra.mxu0 0
    %2302 = vmatprep.subr.bf16.mxu0 0
    %2303 = vmatpush1.bf16.xpose.msra.mxu0 0
    %2304 = vmatprep.subr.bf16.mxu0 0
    %2305 = vmatpush1.bf16.xpose.msra.mxu0 0
    %2306 = vmatprep.subr.bf16.mxu0 0
    %2307 = vmatpush1.bf16.xpose.msra.mxu0 0
    %2308 = vmatprep.subr.bf16.mxu0 0
    %2309 = vmatpush1.bf16.xpose.msra.mxu0 0
    %2310 = vmatprep.subr.bf16.mxu0 0
    %2311 = vmatpush1.bf16.xpose.msra.mxu0 0
    %2312 = vmatprep.subr.bf16.mxu0 0
    %2313 = vmatpush1.bf16.xpose.msra.mxu0 0
    %2314 = vmatprep.subr.bf16.mxu0 0
    %2315 = vmatpush1.bf16.xpose.msra.mxu0 0
    %2316 = vmatprep.subr.bf16.mxu0 0
    %2317 = vmatpush1.bf16.xpose.msra.mxu0 0
    %2318 = vmatprep.subr.bf16.mxu0 0
    %2319 = vmatpush1.bf16.xpose.msra.mxu0 0
    %2320 = vmatprep.subr.bf16.mxu0 0
    %2321 = vmatpush1.bf16.xpose.msra.mxu0 0
    %2322 = vmatprep.subr.bf16.mxu0 0
    %2323 = vmatpush1.bf16.xpose.msra.mxu0 0
    %2324 = vmatprep.mubr.bf16.mxu0 0
    %2325 = vmatmul.mubr.bf16.gmra.mrb[0].mxu0 %v2287
    %v2326 = vpop.f32.mrb[0].mxu0
    %v2327 = vadd.f32 0.0, %v2326
    %v2328 = vpop.f32.mrb[0].mxu0
    %v2329 = vpop.f32.mrb[0].mxu0
    %v2330 = vpop.f32.mrb[0].mxu0
    %2331 = vdwg.mxu0
    %v2332 = vmul.f32 %v2277, 0.35355338
    %v2333 = vmul.f32 %v2327, 0.35355338
    %v2334 = vsel %vm117, %v2332, -1e+09
    %v2335 = vsel %vm117, %v2333, -1e+09
    %v2336 = vsel %vm237, %v2334, -inf
    %2337 = vmax.xlane.f32.xlu0 %v2336
    %v2338 = vpop.xlane.xlu0 %2337
    %v2339 = vsel %vm237, %v2335, -inf
    %2340 = vmax.xlane.f32.xlu0 %v2339
    %v2341 = vpop.xlane.xlu0 %2340
    %v2342 = vsub.f32 %v2334, %v2338
    %v2343 = vsub.f32 %v2335, %v2341
    %v2344 = vmul.f32 %v2342, 1.442695
    %v2345 = vpow.pop %v2344
    %v2346 = vmul.f32 %v2343, 1.442695
    %v2347 = vpow.pop %v2346
    %v2348 = vsel %vm237, %v2345, 0.0
    %2349 = vadd.xlane.f32.xlu0 %v2348
    %v2350 = vpop.xlane.xlu0 %2349
    %v2351 = vsel %vm237, %v2347, 0.0
    %2352 = vadd.xlane.f32.xlu0 %v2351
    %v2353 = vpop.xlane.xlu0 %2352
    %v2354 = vrcp.pop %v2350
    %v2355 = vrcp.pop %v2353
    %v2356 = vmul.f32 %v2345, %v2354
    %v2357 = vmul.f32 %v2347, %v2355
    %v2358 = vpack.c.bf16 %v2356, %v2356
    %v2359 = vpack.c.bf16 %v2357, %v2357
    %2360 = vrot.lane.b32.xlu0 %v1688, 48
    %v2361 = vpop.permute.xlu0 %2360
    %v2363 = vsel %vm237, %v2358, 0
    %v2366 = vsel %vm366, %v2361, 0
    %2368 = vmatprep.subr.bf16.mxu0 0
    %2369 = vmatpush1.bf16.msra.mxu0 %v2366
    %2370 = vmatprep.subr.bf16.mxu0 0
    %2371 = vmatpush1.bf16.msra.mxu0 0
    %2372 = vmatprep.subr.bf16.mxu0 0
    %2373 = vmatpush1.bf16.msra.mxu0 0
    %2374 = vmatprep.subr.bf16.mxu0 0
    %2375 = vmatpush1.bf16.msra.mxu0 0
    %2376 = vmatprep.subr.bf16.mxu0 0
    %2377 = vmatpush1.bf16.msra.mxu0 0
    %2378 = vmatprep.subr.bf16.mxu0 0
    %2379 = vmatpush1.bf16.msra.mxu0 0
    %2380 = vmatprep.subr.bf16.mxu0 0
    %2381 = vmatpush1.bf16.msra.mxu0 0
    %2382 = vmatprep.subr.bf16.mxu0 0
    %2383 = vmatpush1.bf16.msra.mxu0 0
    %2384 = vmatprep.subr.bf16.mxu0 0
    %2385 = vmatpush1.bf16.msra.mxu0 0
    %2386 = vmatprep.subr.bf16.mxu0 0
    %2387 = vmatpush1.bf16.msra.mxu0 0
    %2388 = vmatprep.subr.bf16.mxu0 0
    %2389 = vmatpush1.bf16.msra.mxu0 0
    %2390 = vmatprep.subr.bf16.mxu0 0
    %2391 = vmatpush1.bf16.msra.mxu0 0
    %2392 = vmatprep.subr.bf16.mxu0 0
    %2393 = vmatpush1.bf16.msra.mxu0 0
    %2394 = vmatprep.subr.bf16.mxu0 0
    %2395 = vmatpush1.bf16.msra.mxu0 0
    %2396 = vmatprep.subr.bf16.mxu0 0
    %2397 = vmatpush1.bf16.msra.mxu0 0
    %2398 = vmatprep.subr.bf16.mxu0 0
    %2399 = vmatpush1.bf16.msra.mxu0 0
    %2400 = vmatprep.mubr.bf16.mxu0 0
    %2401 = vmatmul.mubr.bf16.gmra.mrb[0].mxu0 %v2363
    %v2402 = vpop.f32.mrb[0].mxu0
    %v2403 = vadd.f32 0.0, %v2402
    %v2404 = vpop.f32.mrb[0].mxu0
    %v2405 = vpop.f32.mrb[0].mxu0
    %v2406 = vpop.f32.mrb[0].mxu0
    %2407 = vdwg.mxu0
    %2408 = vrot.lane.b32.xlu0 %v1689, 48
    %v2409 = vpop.permute.xlu0 %2408
    %v2411 = vsel %vm237, %v2359, 0
    %v2414 = vsel %vm366, %v2409, 0
    %2416 = vmatprep.subr.bf16.mxu0 0
    %2417 = vmatpush1.bf16.msra.mxu0 %v2414
    %2418 = vmatprep.subr.bf16.mxu0 0
    %2419 = vmatpush1.bf16.msra.mxu0 0
    %2420 = vmatprep.subr.bf16.mxu0 0
    %2421 = vmatpush1.bf16.msra.mxu0 0
    %2422 = vmatprep.subr.bf16.mxu0 0
    %2423 = vmatpush1.bf16.msra.mxu0 0
    %2424 = vmatprep.subr.bf16.mxu0 0
    %2425 = vmatpush1.bf16.msra.mxu0 0
    %2426 = vmatprep.subr.bf16.mxu0 0
    %2427 = vmatpush1.bf16.msra.mxu0 0
    %2428 = vmatprep.subr.bf16.mxu0 0
    %2429 = vmatpush1.bf16.msra.mxu0 0
    %2430 = vmatprep.subr.bf16.mxu0 0
    %2431 = vmatpush1.bf16.msra.mxu0 0
    %2432 = vmatprep.subr.bf16.mxu0 0
    %2433 = vmatpush1.bf16.msra.mxu0 0
    %2434 = vmatprep.subr.bf16.mxu0 0
    %2435 = vmatpush1.bf16.msra.mxu0 0
    %2436 = vmatprep.subr.bf16.mxu0 0
    %2437 = vmatpush1.bf16.msra.mxu0 0
    %2438 = vmatprep.subr.bf16.mxu0 0
    %2439 = vmatpush1.bf16.msra.mxu0 0
    %2440 = vmatprep.subr.bf16.mxu0 0
    %2441 = vmatpush1.bf16.msra.mxu0 0
    %2442 = vmatprep.subr.bf16.mxu0 0
    %2443 = vmatpush1.bf16.msra.mxu0 0
    %2444 = vmatprep.subr.bf16.mxu0 0
    %2445 = vmatpush1.bf16.msra.mxu0 0
    %2446 = vmatprep.subr.bf16.mxu0 0
    %2447 = vmatpush1.bf16.msra.mxu0 0
    %2448 = vmatprep.mubr.bf16.mxu0 0
    %2449 = vmatmul.mubr.bf16.gmra.mrb[0].mxu0 %v2411
    %v2450 = vpop.f32.mrb[0].mxu0
    %v2451 = vadd.f32 0.0, %v2450
    %v2452 = vpop.f32.mrb[0].mxu0
    %v2453 = vpop.f32.mrb[0].mxu0
    %v2454 = vpop.f32.mrb[0].mxu0
    %2455 = vdwg.mxu0
    %v2456 = vpack.c.bf16 %v2451, %v2403
    %v2458 = vsel %vm237, %v2456, 0
    %v2461 = vsel %vm366, %v1686, 0
    %2463 = vmatprep.subr.bf16.mxu0 0
    %2464 = vmatpush1.bf16.msra.mxu0 %v2461
    %2465 = vmatprep.subr.bf16.mxu0 0
    %2466 = vmatpush1.bf16.msra.mxu0 0
    %2467 = vmatprep.subr.bf16.mxu0 0
    %2468 = vmatpush1.bf16.msra.mxu0 0
    %2469 = vmatprep.subr.bf16.mxu0 0
    %2470 = vmatpush1.bf16.msra.mxu0 0
    %2471 = vmatprep.subr.bf16.mxu0 0
    %2472 = vmatpush1.bf16.msra.mxu0 0
    %2473 = vmatprep.subr.bf16.mxu0 0
    %2474 = vmatpush1.bf16.msra.mxu0 0
    %2475 = vmatprep.subr.bf16.mxu0 0
    %2476 = vmatpush1.bf16.msra.mxu0 0
    %2477 = vmatprep.subr.bf16.mxu0 0
    %2478 = vmatpush1.bf16.msra.mxu0 0
    %2479 = vmatprep.subr.bf16.mxu0 0
    %2480 = vmatpush1.bf16.msra.mxu0 0
    %2481 = vmatprep.subr.bf16.mxu0 0
    %2482 = vmatpush1.bf16.msra.mxu0 0
    %2483 = vmatprep.subr.bf16.mxu0 0
    %2484 = vmatpush1.bf16.msra.mxu0 0
    %2485 = vmatprep.subr.bf16.mxu0 0
    %2486 = vmatpush1.bf16.msra.mxu0 0
    %2487 = vmatprep.subr.bf16.mxu0 0
    %2488 = vmatpush1.bf16.msra.mxu0 0
    %2489 = vmatprep.subr.bf16.mxu0 0
    %2490 = vmatpush1.bf16.msra.mxu0 0
    %2491 = vmatprep.subr.bf16.mxu0 0
    %2492 = vmatpush1.bf16.msra.mxu0 0
    %2493 = vmatprep.subr.bf16.mxu0 0
    %2494 = vmatpush1.bf16.msra.mxu0 0
    %2495 = vmatprep.mubr.bf16.mxu0 0
    %2496 = vmatmul.mubr.bf16.gmra.mrb[0].mxu0 %v2458
    %v2497 = vpop.f32.mrb[0].mxu0
    %v2498 = vadd.f32 0.0, %v2497
    %v2499 = vpop.f32.mrb[0].mxu0
    %v2500 = vpop.f32.mrb[0].mxu0
    %v2501 = vadd.f32 0.0, %v2500
    %v2502 = vpop.f32.mrb[0].mxu0
    %2503 = vdwg.mxu0
    %v2504 = vadd.f32 %v2226, %v2498
    %v2505 = vadd.f32 %v2229, %v2501
    %2506 = vrot.lane.b32.xlu0 %v1688, 104
    %v2507 = vpop.permute.xlu0 %2506
    %2508 = vrot.lane.b32.xlu0 %v1688, 72
    %v2509 = vpop.permute.xlu0 %2508
    %v2511 = vsel %vm237, %v2507, 0
    %v2514 = vsel %vm237, %v2509, 0
    %2516 = vmatprep.subr.bf16.mxu0 0
    %2517 = vmatpush1.bf16.xpose.msra.mxu0 %v2514
    %2518 = vmatprep.subr.bf16.mxu0 0
    %2519 = vmatpush1.bf16.xpose.msra.mxu0 0
    %2520 = vmatprep.subr.bf16.mxu0 0
    %2521 = vmatpush1.bf16.xpose.msra.mxu0 0
    %2522 = vmatprep.subr.bf16.mxu0 0
    %2523 = vmatpush1.bf16.xpose.msra.mxu0 0
    %2524 = vmatprep.subr.bf16.mxu0 0
    %2525 = vmatpush1.bf16.xpose.msra.mxu0 0
    %2526 = vmatprep.subr.bf16.mxu0 0
    %2527 = vmatpush1.bf16.xpose.msra.mxu0 0
    %2528 = vmatprep.subr.bf16.mxu0 0
    %2529 = vmatpush1.bf16.xpose.msra.mxu0 0
    %2530 = vmatprep.subr.bf16.mxu0 0
    %2531 = vmatpush1.bf16.xpose.msra.mxu0 0
    %2532 = vmatprep.subr.bf16.mxu0 0
    %2533 = vmatpush1.bf16.xpose.msra.mxu0 0
    %2534 = vmatprep.subr.bf16.mxu0 0
    %2535 = vmatpush1.bf16.xpose.msra.mxu0 0
    %2536 = vmatprep.subr.bf16.mxu0 0
    %2537 = vmatpush1.bf16.xpose.msra.mxu0 0
    %2538 = vmatprep.subr.bf16.mxu0 0
    %2539 = vmatpush1.bf16.xpose.msra.mxu0 0
    %2540 = vmatprep.subr.bf16.mxu0 0
    %2541 = vmatpush1.bf16.xpose.msra.mxu0 0
    %2542 = vmatprep.subr.bf16.mxu0 0
    %2543 = vmatpush1.bf16.xpose.msra.mxu0 0
    %2544 = vmatprep.subr.bf16.mxu0 0
    %2545 = vmatpush1.bf16.xpose.msra.mxu0 0
    %2546 = vmatprep.subr.bf16.mxu0 0
    %2547 = vmatpush1.bf16.xpose.msra.mxu0 0
    %2548 = vmatprep.mubr.bf16.mxu0 0
    %2549 = vmatmul.mubr.bf16.gmra.mrb[0].mxu0 %v2511
    %v2550 = vpop.f32.mrb[0].mxu0
    %v2551 = vadd.f32 0.0, %v2550
    %v2552 = vpop.f32.mrb[0].mxu0
    %v2553 = vpop.f32.mrb[0].mxu0
    %v2554 = vpop.f32.mrb[0].mxu0
    %2555 = vdwg.mxu0
    %2556 = vrot.lane.b32.xlu0 %v1689, 104
    %v2557 = vpop.permute.xlu0 %2556
    %2558 = vrot.lane.b32.xlu0 %v1689, 72
    %v2559 = vpop.permute.xlu0 %2558
    %v2561 = vsel %vm237, %v2557, 0
    %v2564 = vsel %vm237, %v2559, 0
    %2566 = vmatprep.subr.bf16.mxu0 0
    %2567 = vmatpush1.bf16.xpose.msra.mxu0 %v2564
    %2568 = vmatprep.subr.bf16.mxu0 0
    %2569 = vmatpush1.bf16.xpose.msra.mxu0 0
    %2570 = vmatprep.subr.bf16.mxu0 0
    %2571 = vmatpush1.bf16.xpose.msra.mxu0 0
    %2572 = vmatprep.subr.bf16.mxu0 0
    %2573 = vmatpush1.bf16.xpose.msra.mxu0 0
    %2574 = vmatprep.subr.bf16.mxu0 0
    %2575 = vmatpush1.bf16.xpose.msra.mxu0 0
    %2576 = vmatprep.subr.bf16.mxu0 0
    %2577 = vmatpush1.bf16.xpose.msra.mxu0 0
    %2578 = vmatprep.subr.bf16.mxu0 0
    %2579 = vmatpush1.bf16.xpose.msra.mxu0 0
    %2580 = vmatprep.subr.bf16.mxu0 0
    %2581 = vmatpush1.bf16.xpose.msra.mxu0 0
    %2582 = vmatprep.subr.bf16.mxu0 0
    %2583 = vmatpush1.bf16.xpose.msra.mxu0 0
    %2584 = vmatprep.subr.bf16.mxu0 0
    %2585 = vmatpush1.bf16.xpose.msra.mxu0 0
    %2586 = vmatprep.subr.bf16.mxu0 0
    %2587 = vmatpush1.bf16.xpose.msra.mxu0 0
    %2588 = vmatprep.subr.bf16.mxu0 0
    %2589 = vmatpush1.bf16.xpose.msra.mxu0 0
    %2590 = vmatprep.subr.bf16.mxu0 0
    %2591 = vmatpush1.bf16.xpose.msra.mxu0 0
    %2592 = vmatprep.subr.bf16.mxu0 0
    %2593 = vmatpush1.bf16.xpose.msra.mxu0 0
    %2594 = vmatprep.subr.bf16.mxu0 0
    %2595 = vmatpush1.bf16.xpose.msra.mxu0 0
    %2596 = vmatprep.subr.bf16.mxu0 0
    %2597 = vmatpush1.bf16.xpose.msra.mxu0 0
    %2598 = vmatprep.mubr.bf16.mxu0 0
    %2599 = vmatmul.mubr.bf16.gmra.mrb[0].mxu0 %v2561
    %v2600 = vpop.f32.mrb[0].mxu0
    %v2601 = vadd.f32 0.0, %v2600
    %v2602 = vpop.f32.mrb[0].mxu0
    %v2603 = vpop.f32.mrb[0].mxu0
    %v2604 = vpop.f32.mrb[0].mxu0
    %2605 = vdwg.mxu0
    %v2606 = vmul.f32 %v2551, 0.35355338
    %v2607 = vmul.f32 %v2601, 0.35355338
    %v2608 = vsel %vm117, %v2606, -1e+09
    %v2609 = vsel %vm117, %v2607, -1e+09
    %v2610 = vsel %vm237, %v2608, -inf
    %2611 = vmax.xlane.f32.xlu0 %v2610
    %v2612 = vpop.xlane.xlu0 %2611
    %v2613 = vsel %vm237, %v2609, -inf
    %2614 = vmax.xlane.f32.xlu0 %v2613
    %v2615 = vpop.xlane.xlu0 %2614
    %v2616 = vsub.f32 %v2608, %v2612
    %v2617 = vsub.f32 %v2609, %v2615
    %v2618 = vmul.f32 %v2616, 1.442695
    %v2619 = vpow.pop %v2618
    %v2620 = vmul.f32 %v2617, 1.442695
    %v2621 = vpow.pop %v2620
    %v2622 = vsel %vm237, %v2619, 0.0
    %2623 = vadd.xlane.f32.xlu0 %v2622
    %v2624 = vpop.xlane.xlu0 %2623
    %v2625 = vsel %vm237, %v2621, 0.0
    %2626 = vadd.xlane.f32.xlu0 %v2625
    %v2627 = vpop.xlane.xlu0 %2626
    %v2628 = vrcp.pop %v2624
    %v2629 = vrcp.pop %v2627
    %v2630 = vmul.f32 %v2619, %v2628
    %v2631 = vmul.f32 %v2621, %v2629
    %v2632 = vpack.c.bf16 %v2630, %v2630
    %v2633 = vpack.c.bf16 %v2631, %v2631
    %2634 = vrot.lane.b32.xlu0 %v1688, 40
    %v2635 = vpop.permute.xlu0 %2634
    %v2637 = vsel %vm237, %v2632, 0
    %v2640 = vsel %vm366, %v2635, 0
    %2642 = vmatprep.subr.bf16.mxu0 0
    %2643 = vmatpush1.bf16.msra.mxu0 %v2640
    %2644 = vmatprep.subr.bf16.mxu0 0
    %2645 = vmatpush1.bf16.msra.mxu0 0
    %2646 = vmatprep.subr.bf16.mxu0 0
    %2647 = vmatpush1.bf16.msra.mxu0 0
    %2648 = vmatprep.subr.bf16.mxu0 0
    %2649 = vmatpush1.bf16.msra.mxu0 0
    %2650 = vmatprep.subr.bf16.mxu0 0
    %2651 = vmatpush1.bf16.msra.mxu0 0
    %2652 = vmatprep.subr.bf16.mxu0 0
    %2653 = vmatpush1.bf16.msra.mxu0 0
    %2654 = vmatprep.subr.bf16.mxu0 0
    %2655 = vmatpush1.bf16.msra.mxu0 0
    %2656 = vmatprep.subr.bf16.mxu0 0
    %2657 = vmatpush1.bf16.msra.mxu0 0
    %2658 = vmatprep.subr.bf16.mxu0 0
    %2659 = vmatpush1.bf16.msra.mxu0 0
    %2660 = vmatprep.subr.bf16.mxu0 0
    %2661 = vmatpush1.bf16.msra.mxu0 0
    %2662 = vmatprep.subr.bf16.mxu0 0
    %2663 = vmatpush1.bf16.msra.mxu0 0
    %2664 = vmatprep.subr.bf16.mxu0 0
    %2665 = vmatpush1.bf16.msra.mxu0 0
    %2666 = vmatprep.subr.bf16.mxu0 0
    %2667 = vmatpush1.bf16.msra.mxu0 0
    %2668 = vmatprep.subr.bf16.mxu0 0
    %2669 = vmatpush1.bf16.msra.mxu0 0
    %2670 = vmatprep.subr.bf16.mxu0 0
    %2671 = vmatpush1.bf16.msra.mxu0 0
    %2672 = vmatprep.subr.bf16.mxu0 0
    %2673 = vmatpush1.bf16.msra.mxu0 0
    %2674 = vmatprep.mubr.bf16.mxu0 0
    %2675 = vmatmul.mubr.bf16.gmra.mrb[0].mxu0 %v2637
    %v2676 = vpop.f32.mrb[0].mxu0
    %v2677 = vadd.f32 0.0, %v2676
    %v2678 = vpop.f32.mrb[0].mxu0
    %v2679 = vpop.f32.mrb[0].mxu0
    %v2680 = vpop.f32.mrb[0].mxu0
    %2681 = vdwg.mxu0
    %2682 = vrot.lane.b32.xlu0 %v1689, 40
    %v2683 = vpop.permute.xlu0 %2682
    %v2685 = vsel %vm237, %v2633, 0
    %v2688 = vsel %vm366, %v2683, 0
    %2690 = vmatprep.subr.bf16.mxu0 0
    %2691 = vmatpush1.bf16.msra.mxu0 %v2688
    %2692 = vmatprep.subr.bf16.mxu0 0
    %2693 = vmatpush1.bf16.msra.mxu0 0
    %2694 = vmatprep.subr.bf16.mxu0 0
    %2695 = vmatpush1.bf16.msra.mxu0 0
    %2696 = vmatprep.subr.bf16.mxu0 0
    %2697 = vmatpush1.bf16.msra.mxu0 0
    %2698 = vmatprep.subr.bf16.mxu0 0
    %2699 = vmatpush1.bf16.msra.mxu0 0
    %2700 = vmatprep.subr.bf16.mxu0 0
    %2701 = vmatpush1.bf16.msra.mxu0 0
    %2702 = vmatprep.subr.bf16.mxu0 0
    %2703 = vmatpush1.bf16.msra.mxu0 0
    %2704 = vmatprep.subr.bf16.mxu0 0
    %2705 = vmatpush1.bf16.msra.mxu0 0
    %2706 = vmatprep.subr.bf16.mxu0 0
    %2707 = vmatpush1.bf16.msra.mxu0 0
    %2708 = vmatprep.subr.bf16.mxu0 0
    %2709 = vmatpush1.bf16.msra.mxu0 0
    %2710 = vmatprep.subr.bf16.mxu0 0
    %2711 = vmatpush1.bf16.msra.mxu0 0
    %2712 = vmatprep.subr.bf16.mxu0 0
    %2713 = vmatpush1.bf16.msra.mxu0 0
    %2714 = vmatprep.subr.bf16.mxu0 0
    %2715 = vmatpush1.bf16.msra.mxu0 0
    %2716 = vmatprep.subr.bf16.mxu0 0
    %2717 = vmatpush1.bf16.msra.mxu0 0
    %2718 = vmatprep.subr.bf16.mxu0 0
    %2719 = vmatpush1.bf16.msra.mxu0 0
    %2720 = vmatprep.subr.bf16.mxu0 0
    %2721 = vmatpush1.bf16.msra.mxu0 0
    %2722 = vmatprep.mubr.bf16.mxu0 0
    %2723 = vmatmul.mubr.bf16.gmra.mrb[0].mxu0 %v2685
    %v2724 = vpop.f32.mrb[0].mxu0
    %v2725 = vadd.f32 0.0, %v2724
    %v2726 = vpop.f32.mrb[0].mxu0
    %v2727 = vpop.f32.mrb[0].mxu0
    %v2728 = vpop.f32.mrb[0].mxu0
    %2729 = vdwg.mxu0
    %v2730 = vpack.c.bf16 %v2725, %v2677
    %v2732 = vsel %vm237, %v2730, 0
    %v2735 = vsel %vm366, %v1687, 0
    %2737 = vmatprep.subr.bf16.mxu0 0
    %2738 = vmatpush1.bf16.msra.mxu0 %v2735
    %2739 = vmatprep.subr.bf16.mxu0 0
    %2740 = vmatpush1.bf16.msra.mxu0 0
    %2741 = vmatprep.subr.bf16.mxu0 0
    %2742 = vmatpush1.bf16.msra.mxu0 0
    %2743 = vmatprep.subr.bf16.mxu0 0
    %2744 = vmatpush1.bf16.msra.mxu0 0
    %2745 = vmatprep.subr.bf16.mxu0 0
    %2746 = vmatpush1.bf16.msra.mxu0 0
    %2747 = vmatprep.subr.bf16.mxu0 0
    %2748 = vmatpush1.bf16.msra.mxu0 0
    %2749 = vmatprep.subr.bf16.mxu0 0
    %2750 = vmatpush1.bf16.msra.mxu0 0
    %2751 = vmatprep.subr.bf16.mxu0 0
    %2752 = vmatpush1.bf16.msra.mxu0 0
    %2753 = vmatprep.subr.bf16.mxu0 0
    %2754 = vmatpush1.bf16.msra.mxu0 0
    %2755 = vmatprep.subr.bf16.mxu0 0
    %2756 = vmatpush1.bf16.msra.mxu0 0
    %2757 = vmatprep.subr.bf16.mxu0 0
    %2758 = vmatpush1.bf16.msra.mxu0 0
    %2759 = vmatprep.subr.bf16.mxu0 0
    %2760 = vmatpush1.bf16.msra.mxu0 0
    %2761 = vmatprep.subr.bf16.mxu0 0
    %2762 = vmatpush1.bf16.msra.mxu0 0
    %2763 = vmatprep.subr.bf16.mxu0 0
    %2764 = vmatpush1.bf16.msra.mxu0 0
    %2765 = vmatprep.subr.bf16.mxu0 0
    %2766 = vmatpush1.bf16.msra.mxu0 0
    %2767 = vmatprep.subr.bf16.mxu0 0
    %2768 = vmatpush1.bf16.msra.mxu0 0
    %2769 = vmatprep.mubr.bf16.mxu0 0
    %2770 = vmatmul.mubr.bf16.gmra.mrb[0].mxu0 %v2732
    %v2771 = vpop.f32.mrb[0].mxu0
    %v2772 = vadd.f32 0.0, %v2771
    %v2773 = vpop.f32.mrb[0].mxu0
    %v2774 = vpop.f32.mrb[0].mxu0
    %v2775 = vadd.f32 0.0, %v2774
    %v2776 = vpop.f32.mrb[0].mxu0
    %2777 = vdwg.mxu0
    %v2778 = vadd.f32 %v2504, %v2772
    %v2779 = vadd.f32 %v2505, %v2775
    %v2780 = vadd.f32 %v1571, %v2778
    %v2781 = vadd.f32 %v1572, %v2779
    %v2782 = vlaneseq
    %v2783 = vshrl.u32 %v2782, 7
    %v2784 = vsub.s32 5, %v2783
    %v2785 = vrot.slane %v1574, %v2784
    %v2786 = vadd.f32 %v2780, %v2785
    %v2787 = vadd.f32 %v2781, %v2785
    %v2788 = vsel %vm119, %v2786, 0.0
    %2789 = vadd.xlane.f32.xlu0 %v2788
    %v2790 = vpop.xlane.xlu0 %2789
    %v2791 = vsel %vm119, %v2787, 0.0
    %2792 = vadd.xlane.f32.xlu0 %v2791
    %v2793 = vpop.xlane.xlu0 %2792
    %v2794 = vmul.f32 %v2790, %v126
    %v2795 = vmul.f32 %v2793, %v126
    %v2796 = vmul.f32 %v2786, %v2786
    %v2797 = vmul.f32 %v2787, %v2787
    %v2798 = vsel %vm119, %v2796, 0.0
    %2799 = vadd.xlane.f32.xlu0 %v2798
    %v2800 = vpop.xlane.xlu0 %2799
    %v2801 = vsel %vm119, %v2797, 0.0
    %2802 = vadd.xlane.f32.xlu0 %v2801
    %v2803 = vpop.xlane.xlu0 %2802
    %v2804 = vmul.f32 %v2800, %v126
    %v2805 = vmul.f32 %v2803, %v126
    %v2806 = vmul.f32 %v2794, %v2794
    %v2807 = vmul.f32 %v2795, %v2795
    %v2808 = vsub.f32 %v2804, %v2806
    %v2809 = vsub.f32 %v2805, %v2807
    %v2810 = vsub.f32 %v2786, %v2794
    %v2811 = vsub.f32 %v2787, %v2795
    %v2812 = vadd.f32 %v2808, 1e-05
    %v2813 = vadd.f32 %v2809, 1e-05
    %v2814 = vrsqrt.pop %v2812
    %v2815 = vrsqrt.pop %v2813
    %v2816 = vmul.f32 %v2810, %v2814
    %v2817 = vmul.f32 %v2811, %v2815
    %v2818 = vlaneseq
    %v2819 = vshrl.u32 %v2818, 7
    %v2820 = vsub.s32 2, %v2819
    %v2821 = vrot.slane %v1574, %v2820
    %v2822 = vmul.f32 %v2816, %v2821
    %v2823 = vmul.f32 %v2817, %v2821
    %v2824 = vlaneseq
    %v2825 = vshrl.u32 %v2824, 7
    %v2826 = vsub.s32 3, %v2825
    %v2827 = vrot.slane %v1574, %v2826
    %v2828 = vadd.f32 %v2822, %v2827
    %v2829 = vadd.f32 %v2823, %v2827
    %v2830 = vpack.c.bf16 %v2829, %v2828
    %s2831 = scalar_lea.vmem %s7, 16
    %v2832 = vld [vmem:[%s2831] sm:$0xf]
    %v2833 = vld [vmem:[%s2831 + $0x4] sm:$0xf]
    %v2834 = vld [vmem:[%s2831 + $0x8] sm:$0xf]
    %v2835 = vld [vmem:[%s2831 + $0xc] sm:$0xf]
    %v2836 = vlaneseq
    %v2837 = vshrl.u32 %v2836, 7
    %v2838 = vsub.s32 6, %v2837
    %v2839 = vrot.slane %v1574, %v2838
    %v2844 = vunpack.c.l.b16 %v2832
    %v2845 = vunpack.c.l.b16 %v2833
    %v2846 = vunpack.c.l.b16 %v2834
    %v2847 = vunpack.c.l.b16 %v2835
    %v2848 = vpack.c.b16 %v2845, %v2844
    %v2849 = vpack.c.b16 %v2847, %v2846
    %v2853 = vsel %vm119, %v2830, 0
    %2855 = vmatprep.subr.bf16.mxu0 0
    %2856 = vmatpush1.bf16.msra.mxu0 %v2848
    %2857 = vmatprep.subr.bf16.mxu0 0
    %2858 = vmatpush1.bf16.msra.mxu0 %v2849
    %2859 = vmatprep.subr.bf16.mxu0 0
    %2860 = vmatpush1.bf16.msra.mxu0 0
    %2861 = vmatprep.subr.bf16.mxu0 0
    %2862 = vmatpush1.bf16.msra.mxu0 0
    %2863 = vmatprep.subr.bf16.mxu0 0
    %2864 = vmatpush1.bf16.msra.mxu0 0
    %2865 = vmatprep.subr.bf16.mxu0 0
    %2866 = vmatpush1.bf16.msra.mxu0 0
    %2867 = vmatprep.subr.bf16.mxu0 0
    %2868 = vmatpush1.bf16.msra.mxu0 0
    %2869 = vmatprep.subr.bf16.mxu0 0
    %2870 = vmatpush1.bf16.msra.mxu0 0
    %2871 = vmatprep.subr.bf16.mxu0 0
    %2872 = vmatpush1.bf16.msra.mxu0 0
    %2873 = vmatprep.subr.bf16.mxu0 0
    %2874 = vmatpush1.bf16.msra.mxu0 0
    %2875 = vmatprep.subr.bf16.mxu0 0
    %2876 = vmatpush1.bf16.msra.mxu0 0
    %2877 = vmatprep.subr.bf16.mxu0 0
    %2878 = vmatpush1.bf16.msra.mxu0 0
    %2879 = vmatprep.subr.bf16.mxu0 0
    %2880 = vmatpush1.bf16.msra.mxu0 0
    %2881 = vmatprep.subr.bf16.mxu0 0
    %2882 = vmatpush1.bf16.msra.mxu0 0
    %2883 = vmatprep.subr.bf16.mxu0 0
    %2884 = vmatpush1.bf16.msra.mxu0 0
    %2885 = vmatprep.subr.bf16.mxu0 0
    %2886 = vmatpush1.bf16.msra.mxu0 0
    %2887 = vmatprep.mubr.bf16.mxu0 0
    %2888 = vmatmul.mubr.bf16.gmra.mrb[0].mxu0 %v2853
    %v2889 = vpop.f32.mrb[0].mxu0
    %v2890 = vadd.f32 %v2839, %v2889
    %v2891 = vpop.f32.mrb[0].mxu0
    %v2892 = vpop.f32.mrb[0].mxu0
    %v2893 = vadd.f32 %v2839, %v2892
    %v2894 = vpop.f32.mrb[0].mxu0
    %2895 = vdwg.mxu0
    %v2896 = vmul.f32 %v2890, %v2890
    %v2897 = vmul.f32 %v2893, %v2893
    %v2898 = vmul.f32 %v2890, %v2896
    %v2899 = vmul.f32 %v2893, %v2897
    %v2900 = vmul.f32 %v2898, 0.044715
    %v2901 = vmul.f32 %v2899, 0.044715
    %v2902 = vadd.f32 %v2890, %v2900
    %v2903 = vadd.f32 %v2893, %v2901
    %v2904 = vmul.f32 %v2902, 0.7978846
    %v2905 = vmul.f32 %v2903, 0.7978846
    %v2906 = vtanh.pop %v2904
    %v2907 = vtanh.pop %v2905
    %v2908 = vadd.f32 %v2906, 1.0
    %v2909 = vadd.f32 %v2907, 1.0
    %v2910 = vmul.f32 %v2908, 0.5
    %v2911 = vmul.f32 %v2909, 0.5
    %v2912 = vmul.f32 %v2890, %v2910
    %v2913 = vmul.f32 %v2893, %v2911
    %v2914 = vpack.c.bf16 %v2913, %v2912
    %s2915 = scalar_lea.vmem %s8, 64
    %v2916 = vld [vmem:[%s2915] sm:$0xf]
    %v2917 = vld [vmem:[%s2915 + $0x4] sm:$0xf]
    %v2918 = vld [vmem:[%s2915 + $0x8] sm:$0xf]
    %v2919 = vld [vmem:[%s2915 + $0xc] sm:$0xf]
    %v2920 = vld [vmem:[%s2915 + $0x10] sm:$0xf]
    %v2921 = vld [vmem:[%s2915 + $0x14] sm:$0xf]
    %v2922 = vld [vmem:[%s2915 + $0x18] sm:$0xf]
    %v2923 = vld [vmem:[%s2915 + $0x1c] sm:$0xf]
    %v2924 = vld [vmem:[%s2915 + $0x20] sm:$0xf]
    %v2925 = vld [vmem:[%s2915 + $0x24] sm:$0xf]
    %v2926 = vld [vmem:[%s2915 + $0x28] sm:$0xf]
    %v2927 = vld [vmem:[%s2915 + $0x2c] sm:$0xf]
    %v2928 = vld [vmem:[%s2915 + $0x30] sm:$0xf]
    %v2929 = vld [vmem:[%s2915 + $0x34] sm:$0xf]
    %v2930 = vld [vmem:[%s2915 + $0x38] sm:$0xf]
    %v2931 = vld [vmem:[%s2915 + $0x3c] sm:$0xf]
    %v2948 = vunpack.c.l.b16 %v2916
    %v2949 = vunpack.c.l.b16 %v2917
    %v2950 = vunpack.c.l.b16 %v2918
    %v2951 = vunpack.c.l.b16 %v2919
    %v2952 = vunpack.c.l.b16 %v2920
    %v2953 = vunpack.c.l.b16 %v2921
    %v2954 = vunpack.c.l.b16 %v2922
    %v2955 = vunpack.c.l.b16 %v2923
    %v2956 = vunpack.c.l.b16 %v2924
    %v2957 = vunpack.c.l.b16 %v2925
    %v2958 = vunpack.c.l.b16 %v2926
    %v2959 = vunpack.c.l.b16 %v2927
    %v2960 = vunpack.c.l.b16 %v2928
    %v2961 = vunpack.c.l.b16 %v2929
    %v2962 = vunpack.c.l.b16 %v2930
    %v2963 = vunpack.c.l.b16 %v2931
    %v2964 = vpack.c.b16 %v2949, %v2948
    %v2965 = vpack.c.b16 %v2951, %v2950
    %v2966 = vpack.c.b16 %v2953, %v2952
    %v2967 = vpack.c.b16 %v2955, %v2954
    %v2968 = vpack.c.b16 %v2957, %v2956
    %v2969 = vpack.c.b16 %v2959, %v2958
    %v2970 = vpack.c.b16 %v2961, %v2960
    %v2971 = vpack.c.b16 %v2963, %v2962
    %2980 = vmatprep.subr.bf16.mxu0 0
    %2981 = vmatpush1.bf16.msra.mxu0 %v2964
    %2982 = vmatprep.subr.bf16.mxu0 0
    %2983 = vmatpush1.bf16.msra.mxu0 %v2965
    %2984 = vmatprep.subr.bf16.mxu0 0
    %2985 = vmatpush1.bf16.msra.mxu0 %v2966
    %2986 = vmatprep.subr.bf16.mxu0 0
    %2987 = vmatpush1.bf16.msra.mxu0 %v2967
    %2988 = vmatprep.subr.bf16.mxu0 0
    %2989 = vmatpush1.bf16.msra.mxu0 %v2968
    %2990 = vmatprep.subr.bf16.mxu0 0
    %2991 = vmatpush1.bf16.msra.mxu0 %v2969
    %2992 = vmatprep.subr.bf16.mxu0 0
    %2993 = vmatpush1.bf16.msra.mxu0 %v2970
    %2994 = vmatprep.subr.bf16.mxu0 0
    %2995 = vmatpush1.bf16.msra.mxu0 %v2971
    %2996 = vmatprep.subr.bf16.mxu0 0
    %2997 = vmatpush1.bf16.msra.mxu0 0
    %2998 = vmatprep.subr.bf16.mxu0 0
    %2999 = vmatpush1.bf16.msra.mxu0 0
    %3000 = vmatprep.subr.bf16.mxu0 0
    %3001 = vmatpush1.bf16.msra.mxu0 0
    %3002 = vmatprep.subr.bf16.mxu0 0
    %3003 = vmatpush1.bf16.msra.mxu0 0
    %3004 = vmatprep.subr.bf16.mxu0 0
    %3005 = vmatpush1.bf16.msra.mxu0 0
    %3006 = vmatprep.subr.bf16.mxu0 0
    %3007 = vmatpush1.bf16.msra.mxu0 0
    %3008 = vmatprep.subr.bf16.mxu0 0
    %3009 = vmatpush1.bf16.msra.mxu0 0
    %3010 = vmatprep.subr.bf16.mxu0 0
    %3011 = vmatpush1.bf16.msra.mxu0 0
    %3012 = vmatprep.mubr.bf16.mxu0 0
    %3013 = vmatmul.mubr.bf16.gmra.mrb[0].mxu0 %v2914
    %v3014 = vpop.f32.mrb[0].mxu0
    %v3015 = vadd.f32 0.0, %v3014
    %v3016 = vpop.f32.mrb[0].mxu0
    %v3017 = vpop.f32.mrb[0].mxu0
    %v3018 = vadd.f32 0.0, %v3017
    %v3019 = vpop.f32.mrb[0].mxu0
    %3020 = vdwg.mxu0
    %v3021 = vadd.f32 %v2786, %v3015
    %v3022 = vadd.f32 %v2787, %v3018
    %v3023 = vlaneseq
    %v3024 = vshrl.u32 %v3023, 7
    %v3025 = vsub.s32 7, %v3024
    %v3026 = vrot.slane %v1574, %v3025
    %v3027 = vadd.f32 %v3021, %v3026
    %v3028 = vadd.f32 %v3022, %v3026
    %v3029 = vld [vmem:[%s4] sm:$0xff]
    %v3030 = vsel %vm119, %v3027, 0.0
    %3031 = vadd.xlane.f32.xlu0 %v3030
    %v3032 = vpop.xlane.xlu0 %3031
    %v3033 = vsel %vm119, %v3028, 0.0
    %3034 = vadd.xlane.f32.xlu0 %v3033
    %v3035 = vpop.xlane.xlu0 %3034
    %v3036 = vmul.f32 %v3032, %v126
    %v3037 = vmul.f32 %v3035, %v126
    %v3038 = vmul.f32 %v3027, %v3027
    %v3039 = vmul.f32 %v3028, %v3028
    %v3040 = vsel %vm119, %v3038, 0.0
    %3041 = vadd.xlane.f32.xlu0 %v3040
    %v3042 = vpop.xlane.xlu0 %3041
    %v3043 = vsel %vm119, %v3039, 0.0
    %3044 = vadd.xlane.f32.xlu0 %v3043
    %v3045 = vpop.xlane.xlu0 %3044
    %v3046 = vmul.f32 %v3042, %v126
    %v3047 = vmul.f32 %v3045, %v126
    %v3048 = vmul.f32 %v3036, %v3036
    %v3049 = vmul.f32 %v3037, %v3037
    %v3050 = vsub.f32 %v3046, %v3048
    %v3051 = vsub.f32 %v3047, %v3049
    %v3052 = vsub.f32 %v3027, %v3036
    %v3053 = vsub.f32 %v3028, %v3037
    %v3054 = vadd.f32 %v3050, 1e-05
    %v3055 = vadd.f32 %v3051, 1e-05
    %v3056 = vrsqrt.pop %v3054
    %v3057 = vrsqrt.pop %v3055
    %v3058 = vmul.f32 %v3052, %v3056
    %v3059 = vmul.f32 %v3053, %v3057
    %v3060 = vlaneseq
    %v3061 = vshrl.u32 %v3060, 7
    %v3062 = vsub.s32 0, %v3061
    %v3063 = vrot.slane %v3029, %v3062
    %v3064 = vmul.f32 %v3058, %v3063
    %v3065 = vmul.f32 %v3059, %v3063
    %v3066 = vlaneseq
    %v3067 = vshrl.u32 %v3066, 7
    %v3068 = vsub.s32 1, %v3067
    %v3069 = vrot.slane %v3029, %v3068
    %v3070 = vadd.f32 %v3064, %v3069
    %v3071 = vadd.f32 %v3065, %v3069
    %v3072 = vpack.c.bf16 %v3071, %v3070
    %v3073 = vld [vmem:[%s9] sm:$0xf]
    %v3074 = vld [vmem:[%s9 + $0x4] sm:$0xf]
    %v3075 = vld [vmem:[%s9 + $0x8] sm:$0xf]
    %v3076 = vld [vmem:[%s9 + $0xc] sm:$0xf]
    %v3077 = vlaneseq
    %v3078 = vshrl.u32 %v3077, 7
    %v3079 = vsub.s32 2, %v3078
    %v3080 = vrot.slane %v3029, %v3079
    %v3085 = vunpack.c.l.b16 %v3073
    %v3086 = vunpack.c.l.b16 %v3074
    %v3087 = vunpack.c.l.b16 %v3075
    %v3088 = vunpack.c.l.b16 %v3076
    %v3089 = vpack.c.b16 %v3086, %v3085
    %v3090 = vpack.c.b16 %v3088, %v3087
    %v3094 = vsel %vm119, %v3072, 0
    %3096 = vmatprep.subr.bf16.mxu0 0
    %3097 = vmatpush1.bf16.msra.mxu0 %v3089
    %3098 = vmatprep.subr.bf16.mxu0 0
    %3099 = vmatpush1.bf16.msra.mxu0 %v3090
    %3100 = vmatprep.subr.bf16.mxu0 0
    %3101 = vmatpush1.bf16.msra.mxu0 0
    %3102 = vmatprep.subr.bf16.mxu0 0
    %3103 = vmatpush1.bf16.msra.mxu0 0
    %3104 = vmatprep.subr.bf16.mxu0 0
    %3105 = vmatpush1.bf16.msra.mxu0 0
    %3106 = vmatprep.subr.bf16.mxu0 0
    %3107 = vmatpush1.bf16.msra.mxu0 0
    %3108 = vmatprep.subr.bf16.mxu0 0
    %3109 = vmatpush1.bf16.msra.mxu0 0
    %3110 = vmatprep.subr.bf16.mxu0 0
    %3111 = vmatpush1.bf16.msra.mxu0 0
    %3112 = vmatprep.subr.bf16.mxu0 0
    %3113 = vmatpush1.bf16.msra.mxu0 0
    %3114 = vmatprep.subr.bf16.mxu0 0
    %3115 = vmatpush1.bf16.msra.mxu0 0
    %3116 = vmatprep.subr.bf16.mxu0 0
    %3117 = vmatpush1.bf16.msra.mxu0 0
    %3118 = vmatprep.subr.bf16.mxu0 0
    %3119 = vmatpush1.bf16.msra.mxu0 0
    %3120 = vmatprep.subr.bf16.mxu0 0
    %3121 = vmatpush1.bf16.msra.mxu0 0
    %3122 = vmatprep.subr.bf16.mxu0 0
    %3123 = vmatpush1.bf16.msra.mxu0 0
    %3124 = vmatprep.subr.bf16.mxu0 0
    %3125 = vmatpush1.bf16.msra.mxu0 0
    %3126 = vmatprep.subr.bf16.mxu0 0
    %3127 = vmatpush1.bf16.msra.mxu0 0
    %3128 = vmatprep.mubr.bf16.mxu0 0
    %3129 = vmatmul.mubr.bf16.gmra.mrb[0].mxu0 %v3094
    %v3130 = vpop.f32.mrb[0].mxu0
    %v3131 = vadd.f32 %v3080, %v3130
    %v3132 = vpop.f32.mrb[0].mxu0
    %v3133 = vpop.f32.mrb[0].mxu0
    %v3134 = vadd.f32 %v3080, %v3133
    %v3135 = vpop.f32.mrb[0].mxu0
    %3136 = vdwg.mxu0
    %3137 = vst [vmem:[#allocation2] sm:$0xff] %v3131
    %3138 = vst [vmem:[#allocation2 + $0x8] sm:$0xff] %v3134
    // Predicated region
    $region42: #{grokk_forward.1} parent=1 // pred_check
      _
    $region43: #{grokk_forward.1} parent=1 // pred_check_branch
      %3140 = sbr.rel (0) target = $region45
    $region44: #{grokk_forward.1} parent=1 // pred_region
      %s3142 = ssub.s32 256, 256
      %3143 = vsyncadd [#allocation3], %s3142
      %s3144 = sshll.u32 [#allocation2], 4
      %s3145 = int_to_ptr.vmem [resolvable:$true] %s3144
      %3150 = dma.vmem_to_hbm [thread:$0]  %s3145, 256, %s10, [#allocation3], 128, 128, 8
    $region45: #{grokk_forward.1} parent=1 // pred_fallthru
      _
    // Predicated region
    $region46: #{grokk_forward.1} parent=1 // pred_check
      _
    $region47: #{grokk_forward.1} parent=1 // pred_check_branch
      %3152 = sbr.rel (0) target = $region49
    $region48: #{grokk_forward.1} parent=1 // pred_region
      %3153 = dma.done [#allocation3], 256
    $region49: #{grokk_forward.1} parent=1 // pred_fallthru
      _
    %3154 = vsyncpa [#allocation3], 1

</llo_original>
